<compile_context>
chip_gen: v5e
topology: v5e:2x2
jax: 0.10.0
libtpu: 0.0.40
codegen_flags: <defaults>
</compile_context>

<pallas_src>
import functools

import numpy as np
import jax
import jax.numpy as jnp
from jax.experimental import pallas as pl
from jax.experimental.pallas import tpu as pltpu

EPS = 1e-5
VMEM_BUDGET = 48 * 1024 * 1024   # < v7x 64 MiB physical, > 32 MiB default scoped


# ----------------------------------------------------------------------------
# Bilinear 2x upsample matrices (align_corners=True), built on the host.
# ----------------------------------------------------------------------------
def _bilinear_matrix(n_in: int, n_out: int) -> np.ndarray:
    """A (n_out, n_in) with out = A @ in, align_corners=True."""
    A = np.zeros((n_out, n_in), dtype=np.float32)
    if n_out == 1 or n_in == 1:
        A[:, 0] = 1.0
        return A
    scale = (n_in - 1) / (n_out - 1)
    for o in range(n_out):
        src = o * scale
        i0 = min(int(np.floor(src)), n_in - 1)
        i1 = min(i0 + 1, n_in - 1)
        f = src - i0
        A[o, i0] += 1.0 - f
        A[o, i1] += f
    return A


# ----------------------------------------------------------------------------
# Kernel A: fused bilinear-2x upsample of x + channel concat with y  -> NHWC.
# ----------------------------------------------------------------------------
def _up_cat_kernel(x_ref, y_ref, m_ref, o_ref, *, cx):
    # x_ref: (1, Hin*Win, Cx)      f32 (flattened NHWC of the low-res input)
    # y_ref: (1, Hout, Wout, Cy)   f32 (skip connection, NHWC)
    # m_ref: (Hout*Wout, Hin*Win)  f32 (kron(Ah, Aw) interpolation matrix)
    # o_ref: (1, Hout, Wout, Cx+Cy)
    hout, wout = o_ref.shape[1], o_ref.shape[2]
    up = jnp.dot(m_ref[...], x_ref[0], preferred_element_type=jnp.float32)
    up = up.reshape(hout, wout, cx)                      # split leading dim only
    o_ref[0] = jnp.concatenate([up, y_ref[0]], axis=-1).astype(o_ref.dtype)


def upsample_concat(x_nchw, y_nchw):
    """x: (B, Cx, Hin, Win); y: (B, Cy, 2*Hin, 2*Win) -> (B, 2Hin, 2Win, Cx+Cy) NHWC."""
    B, Cx, Hin, Win = x_nchw.shape
    _, Cy, Hout, Wout = y_nchw.shape
    assert Hout == 2 * Hin and Wout == 2 * Win
    Ctot = Cx + Cy

    m = jnp.asarray(np.kron(_bilinear_matrix(Hin, Hout),
                            _bilinear_matrix(Win, Wout)))          # (Ho*Wo, Hi*Wi)
    # Boundary layout change only (module interface is NCHW); x is the smallest
    # tensor of the whole pipeline.
    x_r = jnp.transpose(x_nchw, (0, 2, 3, 1)).reshape(B, Hin * Win, Cx)
    y_nhwc = jnp.transpose(y_nchw, (0, 2, 3, 1))

    return pl.pallas_call(
        functools.partial(_up_cat_kernel, cx=Cx),
        grid=(B,),
        in_specs=[
            pl.BlockSpec((1, Hin * Win, Cx), lambda b: (b, 0, 0)),
            pl.BlockSpec((1, Hout, Wout, Cy), lambda b: (b, 0, 0, 0)),
            pl.BlockSpec((Hout * Wout, Hin * Win), lambda b: (0, 0)),
        ],
        out_specs=pl.BlockSpec((1, Hout, Wout, Ctot), lambda b: (b, 0, 0, 0)),
        out_shape=jax.ShapeDtypeStruct((B, Hout, Wout, Ctot), jnp.float32),
        compiler_params=pltpu.CompilerParams(
            dimension_semantics=("parallel",),
            vmem_limit_bytes=VMEM_BUDGET),
    )(x_r, y_nhwc, m)


# ----------------------------------------------------------------------------
# Kernel B: conv3x3 (pad=1) + bias, spatially tiled, bf16 MXU matmul.
# Optionally fuses the previous block's BN+ReLU into the input (scratch fill).
# Emits per-tile BN partial sums so BN can be finalized outside (two-pass BN).
# ----------------------------------------------------------------------------
def _conv_kernel(x_ref, w_ref, b_ref, sc_ref, sh_ref, o_ref, st_ref, xp_ref,
                 *, apply_input_act):
    # x_ref : (1, H, W, Cin)        full image for this batch element (revisited)
    # w_ref : (9*Cin, Cout)         bf16, rows ordered (kh, kw, cin)
    # b_ref : (1, Cout)             f32 conv bias
    # sc/sh : (1, Cin)              f32 fused input BN scale/shift (if enabled)
    # o_ref : (1, tH, W, Cout)      f32 pre-BN conv output tile
    # st_ref: (1, 1, 2, Cout)       f32 per-tile [sum, sum_sq]
    # xp_ref: (H+2, W+2, Cin)       f32 zero-padded image scratch (per core)
    h = pl.program_id(1)
    _, H, W, Cin = x_ref.shape
    _, tH, _, Cout = o_ref.shape

    @pl.when(h == 0)
    def _():
        x_in = x_ref[0]
        if apply_input_act:                       # fused BN + ReLU of prev block
            x_in = jnp.maximum(x_in * sc_ref[...] + sh_ref[...], 0.0)
        xp_ref[...] = jnp.zeros_like(xp_ref)      # in-kernel zero padding
        xp_ref[1:H + 1, 1:W + 1, :] = x_in

    row0 = pl.multiple_of(h * tH, tH)
    xt = xp_ref[pl.ds(row0, tH + 2), :, :]        # (tH+2, W+2, Cin) halo tile

    # im2col: single fat matmul with K = 9*Cin.
    cols = []
    for kh in range(3):
        for kw in range(3):
            cols.append(xt[kh:kh + tH, kw:kw + W, :].reshape(tH * W, Cin))
    patch = jnp.concatenate(cols, axis=-1).astype(jnp.bfloat16)     # (tH*W, 9*Cin)

    acc = jnp.dot(patch, w_ref[...], preferred_element_type=jnp.float32)
    acc = acc + b_ref[...].astype(jnp.float32)                      # (tH*W, Cout)

    o_ref[...] = acc.reshape(1, tH, W, Cout).astype(o_ref.dtype)

    s = jnp.sum(acc, axis=0, keepdims=True)                         # (1, Cout)
    ss = jnp.sum(acc * acc, axis=0, keepdims=True)
    st_ref[0, 0] = jnp.concatenate([s, ss], axis=0)                 # (2, Cout)


def conv3x3_block(x_nhwc, wmat_bf16, bias, in_scale, in_shift, *,
                  cout, apply_input_act):
    """Tiled conv3x3; returns (pre_bn (B,H,W,Cout) f32, stats (B,nH,2,Cout))."""
    B, H, W, Cin = x_nhwc.shape
    tH = 8 if H % 8 == 0 else H
    nH = H // tH

    kern = functools.partial(_conv_kernel, apply_input_act=apply_input_act)
    return pl.pallas_call(
        kern,
        grid=(B, nH),
        in_specs=[
            pl.BlockSpec((1, H, W, Cin), lambda b, h: (b, 0, 0, 0)),
            pl.BlockSpec((9 * Cin, cout), lambda b, h: (0, 0)),
            pl.BlockSpec((1, cout), lambda b, h: (0, 0)),
            pl.BlockSpec((1, Cin), lambda b, h: (0, 0)),
            pl.BlockSpec((1, Cin), lambda b, h: (0, 0)),
        ],
        out_specs=(
            pl.BlockSpec((1, tH, W, cout), lambda b, h: (b, h, 0, 0)),
            pl.BlockSpec((1, 1, 2, cout), lambda b, h: (b, h, 0, 0)),
        ),
        out_shape=(
            jax.ShapeDtypeStruct((B, H, W, cout), jnp.float32),
            jax.ShapeDtypeStruct((B, nH, 2, cout), jnp.float32),
        ),
        scratch_shapes=[pltpu.VMEM((H + 2, W + 2, Cin), jnp.float32)],
        compiler_params=pltpu.CompilerParams(
            dimension_semantics=("parallel", "arbitrary"),
            vmem_limit_bytes=VMEM_BUDGET),
    )(x_nhwc, wmat_bf16, bias.reshape(1, cout),
      in_scale.reshape(1, Cin), in_shift.reshape(1, Cin))


# ----------------------------------------------------------------------------
# Kernel C: BN finalize (scale/shift) + ReLU, elementwise, fully parallel.
# ----------------------------------------------------------------------------
def _bn_relu_kernel(x_ref, sc_ref, sh_ref, o_ref):
    o_ref[...] = jnp.maximum(x_ref[...] * sc_ref[...] + sh_ref[...],
                             0.0).astype(o_ref.dtype)


def bn_relu_apply(pre, scale, shift):
    B, H, W, C = pre.shape
    tH = 8 if H % 8 == 0 else H
    nH = H // tH
    return pl.pallas_call(
        _bn_relu_kernel,
        grid=(B, nH),
        in_specs=[
            pl.BlockSpec((1, tH, W, C), lambda b, h: (b, h, 0, 0)),
            pl.BlockSpec((1, C), lambda b, h: (0, 0)),
            pl.BlockSpec((1, C), lambda b, h: (0, 0)),
        ],
        out_specs=pl.BlockSpec((1, tH, W, C), lambda b, h: (b, h, 0, 0)),
        out_shape=jax.ShapeDtypeStruct((B, H, W, C), jnp.float32),
        compiler_params=pltpu.CompilerParams(
            dimension_semantics=("parallel", "parallel"),
            vmem_limit_bytes=VMEM_BUDGET),
    )(pre, scale.reshape(1, C), shift.reshape(1, C))


def _bn_scale_shift(stats, gamma, beta, n):
    """Finalize per-channel BN from partial (sum, sum_sq) tiles (tiny tensor)."""
    tot = jnp.sum(stats, axis=(0, 1))                 # (2, C)
    mean = tot[0] / n
    var = jnp.maximum(tot[1] / n - mean * mean, 0.0)  # biased (training-mode) var
    scale = gamma * jax.lax.rsqrt(var + EPS)
    shift = beta - mean * scale
    return scale, shift


# ----------------------------------------------------------------------------
# UpSample module: params + forward
# ----------------------------------------------------------------------------
def init_params(key, in_channels, out_channels):
    k1, k2, k3, k4 = jax.random.split(key, 4)
    return {
        # conv weights stored HWIO (3, 3, Cin, Cout)
        "w1": jax.random.normal(k1, (3, 3, in_channels, out_channels), jnp.float32) * 0.1,
        "b1": jax.random.normal(k2, (out_channels,), jnp.float32) * 0.1,
        "g1": jnp.ones((out_channels,), jnp.float32),
        "be1": jnp.zeros((out_channels,), jnp.float32),
        "w2": jax.random.normal(k3, (3, 3, out_channels, out_channels), jnp.float32) * 0.1,
        "b2": jax.random.normal(k4, (out_channels,), jnp.float32) * 0.1,
        "g2": jnp.ones((out_channels,), jnp.float32),
        "be2": jnp.zeros((out_channels,), jnp.float32),
    }


def upsample_forward(params, x, y):
    """x: (B, Cx, H/2, W/2) NCHW; y: (B, Cy, H, W) NCHW; Cx + Cy == in_channels."""
    B, _, _, _ = x.shape
    _, _, H, W = y.shape
    cat = upsample_concat(x, y)                        # (B, H, W, Cin)  NHWC f32
    Cin = cat.shape[-1]
    Cout = params["w1"].shape[-1]
    n = B * H * W

    # Conv block 1 (input transform disabled -> raw concat goes in).
    w1 = params["w1"].reshape(9 * Cin, Cout).astype(jnp.bfloat16)
    ones = jnp.ones((Cin,), jnp.float32)
    zeros = jnp.zeros((Cin,), jnp.float32)
    pre1, st1 = conv3x3_block(cat, w1, params["b1"], ones, zeros,
                              cout=Cout, apply_input_act=False)
    sc1, sh1 = _bn_scale_shift(st1, params["g1"], params["be1"], n)

    # Conv block 2: BN1 + ReLU fused into the conv2 input scratch fill.
    w2 = params["w2"].reshape(9 * Cout, Cout).astype(jnp.bfloat16)
    pre2, st2 = conv3x3_block(pre1, w2, params["b2"], sc1, sh1,
                              cout=Cout, apply_input_act=True)
    sc2, sh2 = _bn_scale_shift(st2, params["g2"], params["be2"], n)

    out_nhwc = bn_relu_apply(pre2, sc2, sh2)           # BN2 + ReLU finalize
    return jnp.transpose(out_nhwc, (0, 3, 1, 2))       # back to NCHW interface


# ----------------------------------------------------------------------------
# Pure-JAX reference (mirrors the bf16 MXU casting for apples-to-apples check).
# ----------------------------------------------------------------------------
def _ref_forward(params, x, y):
    B, C, Hin, Win = x.shape
    ah = jnp.asarray(_bilinear_matrix(Hin, 2 * Hin))
    aw = jnp.asarray(_bilinear_matrix(Win, 2 * Win))
    x_up = jnp.einsum("oh,bchw,pw->bcop", ah, x, aw)
    cat = jnp.concatenate([x_up, y], axis=1)
    h = jnp.transpose(cat, (0, 2, 3, 1))

    def block(h, w, b, g, be):
        o = jax.lax.conv_general_dilated(
            h.astype(jnp.bfloat16), w.astype(jnp.bfloat16),
            window_strides=(1, 1), padding="SAME",
            dimension_numbers=("NHWC", "HWIO", "NHWC"),
            preferred_element_type=jnp.float32) + b
        m = jnp.mean(o, axis=(0, 1, 2), keepdims=True)
        v = jnp.mean((o - m) ** 2, axis=(0, 1, 2), keepdims=True)
        return jnp.maximum((o - m) * jax.lax.rsqrt(v + EPS) * g + be, 0.0)

    h = block(h, params["w1"], params["b1"], params["g1"], params["be1"])
    h = block(h, params["w2"], params["b2"], params["g2"], params["be2"])
    return jnp.transpose(h, (0, 3, 1, 2))


if __name__ == "__main__":
    key = jax.random.PRNGKey(0)
    kx, ky, kp = jax.random.split(key, 3)

    in_channels, out_channels = 8, 4
    B, H, W = 2, 16, 16
    # x comes from the level below (half spatial, half of in_channels),
    # y is the same-resolution skip connection (other half of in_channels).
    x = jax.random.normal(kx, (B, in_channels // 2, H // 2, W // 2), jnp.float32)
    y = jax.random.normal(ky, (B, in_channels // 2, H, W), jnp.float32)

    params = init_params(kp, in_channels, out_channels)

    fwd = jax.jit(upsample_forward)
    out = jax.block_until_ready(fwd(params, x, y))
    assert out.shape == (B, out_channels, H, W), out.shape

    ref = jax.block_until_ready(_ref_forward(params, x, y))
    np.testing.assert_allclose(np.asarray(out), np.asarray(ref), rtol=2e-2, atol=2e-2)

    print("KERNEL_OK")
</pallas_src>

<mosaic_0001>
module attributes {stable_mosaic.version = 11 : i64} {
  func.func @_up_cat_kernel(%arg0: i32, %arg1: memref<1x64x4xf32, #tpu.memory_space<vmem>>, %arg2: memref<1x16x16x4xf32, #tpu.memory_space<vmem>>, %arg3: memref<256x64xf32, #tpu.memory_space<vmem>>, %arg4: memref<1x16x16x8xf32, #tpu.memory_space<vmem>>) attributes {dimension_semantics = [#tpu.dimension_semantics<parallel>], iteration_bounds = array<i64: 2>, scalar_prefetch = 0 : i64, scratch_operands = 0 : i64, tpu.core_type = #tpu.core_type<tc>, window_params = [{transform_indices = @transform_0, window_bounds = array<i64: 1, 64, 4>}, {transform_indices = @transform_1, window_bounds = array<i64: 1, 16, 16, 4>}, {pipeline_mode = #tpu.pipeline_mode<synchronous>, transform_indices = @transform_2, window_bounds = array<i64: 256, 64>}, {transform_indices = @transform_3, window_bounds = array<i64: 1, 16, 16, 8>}]} {
    %c0 = arith.constant 0 : index
    %c0_0 = arith.constant 0 : index
    %0 = vector.load %arg3[%c0, %c0_0] : memref<256x64xf32, #tpu.memory_space<vmem>>, vector<256x64xf32>
    %c0_1 = arith.constant 0 : index
    %c0_2 = arith.constant 0 : index
    %c0_3 = arith.constant 0 : index
    %1 = vector.load %arg1[%c0_1, %c0_2, %c0_3] : memref<1x64x4xf32, #tpu.memory_space<vmem>>, vector<1x64x4xf32>
    %2 = vector.shape_cast %1 : vector<1x64x4xf32> to vector<64x4xf32>
    %cst = arith.constant dense<0.000000e+00> : vector<256x4xf32>
    %3 = tpu.matmul %0, %2, %cst {dimension_numbers = #tpu.dot_dimension_numbers<[1], [0], [0], [1], [0, 0, 1, 1], [], []>} : vector<256x64xf32>, vector<64x4xf32>, vector<256x4xf32> -> vector<256x4xf32>
    %4 = vector.shape_cast %3 : vector<256x4xf32> to vector<16x16x4xf32>
    %c0_4 = arith.constant 0 : index
    %c0_5 = arith.constant 0 : index
    %c0_6 = arith.constant 0 : index
    %c0_7 = arith.constant 0 : index
    %5 = vector.load %arg2[%c0_4, %c0_5, %c0_6, %c0_7] : memref<1x16x16x4xf32, #tpu.memory_space<vmem>>, vector<1x16x16x4xf32>
    %6 = vector.shape_cast %5 : vector<1x16x16x4xf32> to vector<16x16x4xf32>
    %7 = tpu.concatenate %4, %6 in 2 : vector<16x16x4xf32>, vector<16x16x4xf32> -> vector<16x16x8xf32>
    %c0_8 = arith.constant 0 : index
    %c0_9 = arith.constant 0 : index
    %c0_10 = arith.constant 0 : index
    %c0_11 = arith.constant 0 : index
    %8 = vector.load %arg4[%c0_8, %c0_9, %c0_10, %c0_11] : memref<1x16x16x8xf32, #tpu.memory_space<vmem>>, vector<1x16x16x8xf32>
    %9 = vector.shape_cast %8 : vector<1x16x16x8xf32> to vector<16x16x8xf32>
    %10 = vector.shape_cast %7 : vector<16x16x8xf32> to vector<1x16x16x8xf32>
    tpu.vector_store %arg4[%c0_8, %c0_9, %c0_10, %c0_11], %10 {strides = array<i32>} : memref<1x16x16x8xf32, #tpu.memory_space<vmem>>, vector<1x16x16x8xf32>,
    return
  }
  func.func @transform_0(%arg0: i32) -> (i32, i32, i32) {
    %c0_i32 = arith.constant 0 : i32
    %c0_i32_0 = arith.constant 0 : i32
    %c0_i32_1 = arith.constant 0 : i32
    return %arg0, %c0_i32, %c0_i32_0 : i32, i32, i32
  }
  func.func @transform_1(%arg0: i32) -> (i32, i32, i32, i32) {
    %c0_i32 = arith.constant 0 : i32
    %c0_i32_0 = arith.constant 0 : i32
    %c0_i32_1 = arith.constant 0 : i32
    %c0_i32_2 = arith.constant 0 : i32
    return %arg0, %c0_i32, %c0_i32_0, %c0_i32_1 : i32, i32, i32, i32
  }
  func.func @transform_2(%arg0: i32) -> (i32, i32) {
    %c0_i32 = arith.constant 0 : i32
    %c0_i32_0 = arith.constant 0 : i32
    %c0_i32_1 = arith.constant 0 : i32
    return %c0_i32, %c0_i32_0 : i32, i32
  }
  func.func @transform_3(%arg0: i32) -> (i32, i32, i32, i32) {
    %c0_i32 = arith.constant 0 : i32
    %c0_i32_0 = arith.constant 0 : i32
    %c0_i32_1 = arith.constant 0 : i32
    %c0_i32_2 = arith.constant 0 : i32
    return %arg0, %c0_i32, %c0_i32_0, %c0_i32_1 : i32, i32, i32, i32
  }
}

module attributes {stable_mosaic.version = 11 : i64} {
  func.func @_conv_kernel(%arg0: i32, %arg1: i32, %arg2: memref<1x16x16x8xf32, #tpu.memory_space<vmem>>, %arg3: memref<72x4xbf16, #tpu.memory_space<vmem>>, %arg4: memref<1x4xf32, #tpu.memory_space<vmem>>, %arg5: memref<1x8xf32, #tpu.memory_space<vmem>>, %arg6: memref<1x8xf32, #tpu.memory_space<vmem>>, %arg7: memref<1x8x16x4xf32, #tpu.memory_space<vmem>>, %arg8: memref<1x1x2x4xf32, #tpu.memory_space<vmem>>, %arg9: memref<18x18x8xf32, #tpu.memory_space<vmem>>) attributes {dimension_semantics = [#tpu.dimension_semantics<parallel>, #tpu.dimension_semantics<arbitrary>], iteration_bounds = array<i64: 2, 2>, scalar_prefetch = 0 : i64, scratch_operands = 1 : i64, tpu.core_type = #tpu.core_type<tc>, window_params = [{transform_indices = @transform_0, window_bounds = array<i64: 1, 16, 16, 8>}, {pipeline_mode = #tpu.pipeline_mode<synchronous>, transform_indices = @transform_1, window_bounds = array<i64: 72, 4>}, {pipeline_mode = #tpu.pipeline_mode<synchronous>, transform_indices = @transform_2, window_bounds = array<i64: 1, 4>}, {pipeline_mode = #tpu.pipeline_mode<synchronous>, transform_indices = @transform_3, window_bounds = array<i64: 1, 8>}, {pipeline_mode = #tpu.pipeline_mode<synchronous>, transform_indices = @transform_4, window_bounds = array<i64: 1, 8>}, {transform_indices = @transform_5, window_bounds = array<i64: 1, 8, 16, 4>}, {transform_indices = @transform_6, window_bounds = array<i64: 1, 1, 2, 4>}]} {
    %c0_i32 = arith.constant 0 : i32
    %0 = arith.cmpi eq, %arg1, %c0_i32 : i32
    %1 = arith.extui %0 : i1 to i32
    %c0_i32_0 = arith.constant 0 : i32
    %2 = arith.cmpi ne, %1, %c0_i32_0 : i32
    scf.if %2 {
      %c0_16 = arith.constant 0 : index
      %c0_17 = arith.constant 0 : index
      %c0_18 = arith.constant 0 : index
      %c0_19 = arith.constant 0 : index
      %43 = vector.load %arg2[%c0_16, %c0_17, %c0_18, %c0_19] : memref<1x16x16x8xf32, #tpu.memory_space<vmem>>, vector<1x16x16x8xf32>
      %44 = vector.shape_cast %43 : vector<1x16x16x8xf32> to vector<16x16x8xf32>
      %cst_20 = arith.constant 0.000000e+00 : f32
      %45 = vector.broadcast %cst_20 : f32 to vector<18x18x8xf32>
      %c0_21 = arith.constant 0 : index
      %c0_22 = arith.constant 0 : index
      %c0_23 = arith.constant 0 : index
      %46 = vector.load %arg9[%c0_21, %c0_22, %c0_23] : memref<18x18x8xf32, #tpu.memory_space<vmem>>, vector<18x18x8xf32>
      tpu.vector_store %arg9[%c0_21, %c0_22, %c0_23], %45 {strides = array<i32>} : memref<18x18x8xf32, #tpu.memory_space<vmem>>, vector<18x18x8xf32>,
      %c1 = arith.constant 1 : index
      %c1_24 = arith.constant 1 : index
      %c0_25 = arith.constant 0 : index
      %47 = vector.load %arg9[%c1, %c1_24, %c0_25] : memref<18x18x8xf32, #tpu.memory_space<vmem>>, vector<16x16x8xf32>
      tpu.vector_store %arg9[%c1, %c1_24, %c0_25], %44 {strides = array<i32>} : memref<18x18x8xf32, #tpu.memory_space<vmem>>, vector<16x16x8xf32>,
    } else {
    }
    %c8_i32 = arith.constant 8 : i32
    %3 = arith.muli %arg1, %c8_i32 : i32
    %4 = tpu.assume_multiple %3, 8 : i32
    %5 = arith.index_cast %4 : i32 to index
    %c0 = arith.constant 0 : index
    %c0_1 = arith.constant 0 : index
    %6 = vector.load %arg9[%5, %c0, %c0_1] : memref<18x18x8xf32, #tpu.memory_space<vmem>>, vector<10x18x8xf32>
    %7 = vector.extract_strided_slice %6 {offsets = [0, 0, 0], sizes = [8, 16, 8], strides = [1, 1, 1]} : vector<10x18x8xf32> to vector<8x16x8xf32>
    %8 = vector.shape_cast %7 : vector<8x16x8xf32> to vector<128x8xf32>
    %9 = vector.extract_strided_slice %6 {offsets = [0, 1, 0], sizes = [8, 16, 8], strides = [1, 1, 1]} : vector<10x18x8xf32> to vector<8x16x8xf32>
    %10 = vector.shape_cast %9 : vector<8x16x8xf32> to vector<128x8xf32>
    %11 = vector.extract_strided_slice %6 {offsets = [0, 2, 0], sizes = [8, 16, 8], strides = [1, 1, 1]} : vector<10x18x8xf32> to vector<8x16x8xf32>
    %12 = vector.shape_cast %11 : vector<8x16x8xf32> to vector<128x8xf32>
    %13 = vector.extract_strided_slice %6 {offsets = [1, 0, 0], sizes = [8, 16, 8], strides = [1, 1, 1]} : vector<10x18x8xf32> to vector<8x16x8xf32>
    %14 = vector.shape_cast %13 : vector<8x16x8xf32> to vector<128x8xf32>
    %15 = vector.extract_strided_slice %6 {offsets = [1, 1, 0], sizes = [8, 16, 8], strides = [1, 1, 1]} : vector<10x18x8xf32> to vector<8x16x8xf32>
    %16 = vector.shape_cast %15 : vector<8x16x8xf32> to vector<128x8xf32>
    %17 = vector.extract_strided_slice %6 {offsets = [1, 2, 0], sizes = [8, 16, 8], strides = [1, 1, 1]} : vector<10x18x8xf32> to vector<8x16x8xf32>
    %18 = vector.shape_cast %17 : vector<8x16x8xf32> to vector<128x8xf32>
    %19 = vector.extract_strided_slice %6 {offsets = [2, 0, 0], sizes = [8, 16, 8], strides = [1, 1, 1]} : vector<10x18x8xf32> to vector<8x16x8xf32>
    %20 = vector.shape_cast %19 : vector<8x16x8xf32> to vector<128x8xf32>
    %21 = vector.extract_strided_slice %6 {offsets = [2, 1, 0], sizes = [8, 16, 8], strides = [1, 1, 1]} : vector<10x18x8xf32> to vector<8x16x8xf32>
    %22 = vector.shape_cast %21 : vector<8x16x8xf32> to vector<128x8xf32>
    %23 = vector.extract_strided_slice %6 {offsets = [2, 2, 0], sizes = [8, 16, 8], strides = [1, 1, 1]} : vector<10x18x8xf32> to vector<8x16x8xf32>
    %24 = vector.shape_cast %23 : vector<8x16x8xf32> to vector<128x8xf32>
    %25 = tpu.concatenate %8, %10, %12, %14, %16, %18, %20, %22, %24 in 1 : vector<128x8xf32>, vector<128x8xf32>, vector<128x8xf32>, vector<128x8xf32>, vector<128x8xf32>, vector<128x8xf32>, vector<128x8xf32>, vector<128x8xf32>, vector<128x8xf32> -> vector<128x72xf32>
    %26 = arith.truncf %25 : vector<128x72xf32> to vector<128x72xbf16>
    %c0_2 = arith.constant 0 : index
    %c0_3 = arith.constant 0 : index
    %27 = vector.load %arg3[%c0_2, %c0_3] : memref<72x4xbf16, #tpu.memory_space<vmem>>, vector<72x4xbf16>
    %cst = arith.constant dense<0.000000e+00> : vector<128x4xf32>
    %28 = tpu.matmul %26, %27, %cst {dimension_numbers = #tpu.dot_dimension_numbers<[1], [0], [0], [1], [0, 0, 1, 1], [], []>} : vector<128x72xbf16>, vector<72x4xbf16>, vector<128x4xf32> -> vector<128x4xf32>
    %c0_4 = arith.constant 0 : index
    %c0_5 = arith.constant 0 : index
    %29 = vector.load %arg4[%c0_4, %c0_5] : memref<1x4xf32, #tpu.memory_space<vmem>>, vector<1x4xf32>
    %30 = vector.broadcast %29 : vector<1x4xf32> to vector<128x4xf32>
    %31 = arith.addf %28, %30 : vector<128x4xf32>
    %32 = vector.shape_cast %31 : vector<128x4xf32> to vector<1x8x16x4xf32>
    %c0_6 = arith.constant 0 : index
    %c0_7 = arith.constant 0 : index
    %c0_8 = arith.constant 0 : index
    %c0_9 = arith.constant 0 : index
    %33 = vector.load %arg7[%c0_6, %c0_7, %c0_8, %c0_9] : memref<1x8x16x4xf32, #tpu.memory_space<vmem>>, vector<1x8x16x4xf32>
    tpu.vector_store %arg7[%c0_6, %c0_7, %c0_8, %c0_9], %32 {strides = array<i32>} : memref<1x8x16x4xf32, #tpu.memory_space<vmem>>, vector<1x8x16x4xf32>,
    %cst_10 = arith.constant dense<0.000000e+00> : vector<4xf32>
    %34 = vector.multi_reduction <add>, %31, %cst_10 [0] : vector<128x4xf32> to vector<4xf32>
    %35 = vector.shape_cast %34 : vector<4xf32> to vector<1x4xf32>
    %36 = arith.mulf %31, %31 : vector<128x4xf32>
    %cst_11 = arith.constant dense<0.000000e+00> : vector<4xf32>
    %37 = vector.multi_reduction <add>, %36, %cst_11 [0] : vector<128x4xf32> to vector<4xf32>
    %38 = vector.shape_cast %37 : vector<4xf32> to vector<1x4xf32>
    %39 = tpu.concatenate %35, %38 in 0 : vector<1x4xf32>, vector<1x4xf32> -> vector<2x4xf32>
    %c0_12 = arith.constant 0 : index
    %c0_13 = arith.constant 0 : index
    %c0_14 = arith.constant 0 : index
    %c0_15 = arith.constant 0 : index
    %40 = vector.load %arg8[%c0_12, %c0_13, %c0_14, %c0_15] : memref<1x1x2x4xf32, #tpu.memory_space<vmem>>, vector<1x1x2x4xf32>
    %41 = vector.shape_cast %40 : vector<1x1x2x4xf32> to vector<2x4xf32>
    %42 = vector.shape_cast %39 : vector<2x4xf32> to vector<1x1x2x4xf32>
    tpu.vector_store %arg8[%c0_12, %c0_13, %c0_14, %c0_15], %42 {strides = array<i32>} : memref<1x1x2x4xf32, #tpu.memory_space<vmem>>, vector<1x1x2x4xf32>,
    return
  }
  func.func @transform_0(%arg0: i32, %arg1: i32) -> (i32, i32, i32, i32) {
    %c0_i32 = arith.constant 0 : i32
    %c0_i32_0 = arith.constant 0 : i32
    %c0_i32_1 = arith.constant 0 : i32
    %c0_i32_2 = arith.constant 0 : i32
    return %arg0, %c0_i32, %c0_i32_0, %c0_i32_1 : i32, i32, i32, i32
  }
  func.func @transform_1(%arg0: i32, %arg1: i32) -> (i32, i32) {
    %c0_i32 = arith.constant 0 : i32
    %c0_i32_0 = arith.constant 0 : i32
    %c0_i32_1 = arith.constant 0 : i32
    return %c0_i32, %c0_i32_0 : i32, i32
  }
  func.func @transform_2(%arg0: i32, %arg1: i32) -> (i32, i32) {
    %c0_i32 = arith.constant 0 : i32
    %c0_i32_0 = arith.constant 0 : i32
    %c0_i32_1 = arith.constant 0 : i32
    return %c0_i32, %c0_i32_0 : i32, i32
  }
  func.func @transform_3(%arg0: i32, %arg1: i32) -> (i32, i32) {
    %c0_i32 = arith.constant 0 : i32
    %c0_i32_0 = arith.constant 0 : i32
    %c0_i32_1 = arith.constant 0 : i32
    return %c0_i32, %c0_i32_0 : i32, i32
  }
  func.func @transform_4(%arg0: i32, %arg1: i32) -> (i32, i32) {
    %c0_i32 = arith.constant 0 : i32
    %c0_i32_0 = arith.constant 0 : i32
    %c0_i32_1 = arith.constant 0 : i32
    return %c0_i32, %c0_i32_0 : i32, i32
  }
  func.func @transform_5(%arg0: i32, %arg1: i32) -> (i32, i32, i32, i32) {
    %c0_i32 = arith.constant 0 : i32
    %c0_i32_0 = arith.constant 0 : i32
    %c0_i32_1 = arith.constant 0 : i32
    return %arg0, %arg1, %c0_i32, %c0_i32_0 : i32, i32, i32, i32
  }
  func.func @transform_6(%arg0: i32, %arg1: i32) -> (i32, i32, i32, i32) {
    %c0_i32 = arith.constant 0 : i32
    %c0_i32_0 = arith.constant 0 : i32
    %c0_i32_1 = arith.constant 0 : i32
    return %arg0, %arg1, %c0_i32, %c0_i32_0 : i32, i32, i32, i32
  }
}

module attributes {stable_mosaic.version = 11 : i64} {
  func.func @_conv_kernel(%arg0: i32, %arg1: i32, %arg2: memref<1x16x16x4xf32, #tpu.memory_space<vmem>>, %arg3: memref<36x4xbf16, #tpu.memory_space<vmem>>, %arg4: memref<1x4xf32, #tpu.memory_space<vmem>>, %arg5: memref<1x4xf32, #tpu.memory_space<vmem>>, %arg6: memref<1x4xf32, #tpu.memory_space<vmem>>, %arg7: memref<1x8x16x4xf32, #tpu.memory_space<vmem>>, %arg8: memref<1x1x2x4xf32, #tpu.memory_space<vmem>>, %arg9: memref<18x18x4xf32, #tpu.memory_space<vmem>>) attributes {dimension_semantics = [#tpu.dimension_semantics<parallel>, #tpu.dimension_semantics<arbitrary>], iteration_bounds = array<i64: 2, 2>, scalar_prefetch = 0 : i64, scratch_operands = 1 : i64, tpu.core_type = #tpu.core_type<tc>, window_params = [{transform_indices = @transform_0, window_bounds = array<i64: 1, 16, 16, 4>}, {pipeline_mode = #tpu.pipeline_mode<synchronous>, transform_indices = @transform_1, window_bounds = array<i64: 36, 4>}, {pipeline_mode = #tpu.pipeline_mode<synchronous>, transform_indices = @transform_2, window_bounds = array<i64: 1, 4>}, {pipeline_mode = #tpu.pipeline_mode<synchronous>, transform_indices = @transform_3, window_bounds = array<i64: 1, 4>}, {pipeline_mode = #tpu.pipeline_mode<synchronous>, transform_indices = @transform_4, window_bounds = array<i64: 1, 4>}, {transform_indices = @transform_5, window_bounds = array<i64: 1, 8, 16, 4>}, {transform_indices = @transform_6, window_bounds = array<i64: 1, 1, 2, 4>}]} {
    %c0_i32 = arith.constant 0 : i32
    %0 = arith.cmpi eq, %arg1, %c0_i32 : i32
    %1 = arith.extui %0 : i1 to i32
    %c0_i32_0 = arith.constant 0 : i32
    %2 = arith.cmpi ne, %1, %c0_i32_0 : i32
    scf.if %2 {
      %c0_16 = arith.constant 0 : index
      %c0_17 = arith.constant 0 : index
      %c0_18 = arith.constant 0 : index
      %c0_19 = arith.constant 0 : index
      %43 = vector.load %arg2[%c0_16, %c0_17, %c0_18, %c0_19] : memref<1x16x16x4xf32, #tpu.memory_space<vmem>>, vector<1x16x16x4xf32>
      %44 = vector.shape_cast %43 : vector<1x16x16x4xf32> to vector<16x16x4xf32>
      %c0_20 = arith.constant 0 : index
      %c0_21 = arith.constant 0 : index
      %45 = vector.load %arg5[%c0_20, %c0_21] : memref<1x4xf32, #tpu.memory_space<vmem>>, vector<1x4xf32>
      %46 = vector.shape_cast %45 : vector<1x4xf32> to vector<1x1x4xf32>
      %47 = vector.broadcast %46 : vector<1x1x4xf32> to vector<16x16x4xf32>
      %48 = arith.mulf %44, %47 : vector<16x16x4xf32>
      %c0_22 = arith.constant 0 : index
      %c0_23 = arith.constant 0 : index
      %49 = vector.load %arg6[%c0_22, %c0_23] : memref<1x4xf32, #tpu.memory_space<vmem>>, vector<1x4xf32>
      %50 = vector.shape_cast %49 : vector<1x4xf32> to vector<1x1x4xf32>
      %51 = vector.broadcast %50 : vector<1x1x4xf32> to vector<16x16x4xf32>
      %52 = arith.addf %48, %51 : vector<16x16x4xf32>
      %cst_24 = arith.constant 0.000000e+00 : f32
      %53 = vector.broadcast %cst_24 : f32 to vector<16x16x4xf32>
      %54 = arith.maximumf %52, %53 : vector<16x16x4xf32>
      %cst_25 = arith.constant 0.000000e+00 : f32
      %55 = vector.broadcast %cst_25 : f32 to vector<18x18x4xf32>
      %c0_26 = arith.constant 0 : index
      %c0_27 = arith.constant 0 : index
      %c0_28 = arith.constant 0 : index
      %56 = vector.load %arg9[%c0_26, %c0_27, %c0_28] : memref<18x18x4xf32, #tpu.memory_space<vmem>>, vector<18x18x4xf32>
      tpu.vector_store %arg9[%c0_26, %c0_27, %c0_28], %55 {strides = array<i32>} : memref<18x18x4xf32, #tpu.memory_space<vmem>>, vector<18x18x4xf32>,
      %c1 = arith.constant 1 : index
      %c1_29 = arith.constant 1 : index
      %c0_30 = arith.constant 0 : index
      %57 = vector.load %arg9[%c1, %c1_29, %c0_30] : memref<18x18x4xf32, #tpu.memory_space<vmem>>, vector<16x16x4xf32>
      tpu.vector_store %arg9[%c1, %c1_29, %c0_30], %54 {strides = array<i32>} : memref<18x18x4xf32, #tpu.memory_space<vmem>>, vector<16x16x4xf32>,
    } else {
    }
    %c8_i32 = arith.constant 8 : i32
    %3 = arith.muli %arg1, %c8_i32 : i32
    %4 = tpu.assume_multiple %3, 8 : i32
    %5 = arith.index_cast %4 : i32 to index
    %c0 = arith.constant 0 : index
    %c0_1 = arith.constant 0 : index
    %6 = vector.load %arg9[%5, %c0, %c0_1] : memref<18x18x4xf32, #tpu.memory_space<vmem>>, vector<10x18x4xf32>
    %7 = vector.extract_strided_slice %6 {offsets = [0, 0, 0], sizes = [8, 16, 4], strides = [1, 1, 1]} : vector<10x18x4xf32> to vector<8x16x4xf32>
    %8 = vector.shape_cast %7 : vector<8x16x4xf32> to vector<128x4xf32>
    %9 = vector.extract_strided_slice %6 {offsets = [0, 1, 0], sizes = [8, 16, 4], strides = [1, 1, 1]} : vector<10x18x4xf32> to vector<8x16x4xf32>
    %10 = vector.shape_cast %9 : vector<8x16x4xf32> to vector<128x4xf32>
    %11 = vector.extract_strided_slice %6 {offsets = [0, 2, 0], sizes = [8, 16, 4], strides = [1, 1, 1]} : vector<10x18x4xf32> to vector<8x16x4xf32>
    %12 = vector.shape_cast %11 : vector<8x16x4xf32> to vector<128x4xf32>
    %13 = vector.extract_strided_slice %6 {offsets = [1, 0, 0], sizes = [8, 16, 4], strides = [1, 1, 1]} : vector<10x18x4xf32> to vector<8x16x4xf32>
    %14 = vector.shape_cast %13 : vector<8x16x4xf32> to vector<128x4xf32>
    %15 = vector.extract_strided_slice %6 {offsets = [1, 1, 0], sizes = [8, 16, 4], strides = [1, 1, 1]} : vector<10x18x4xf32> to vector<8x16x4xf32>
    %16 = vector.shape_cast %15 : vector<8x16x4xf32> to vector<128x4xf32>
    %17 = vector.extract_strided_slice %6 {offsets = [1, 2, 0], sizes = [8, 16, 4], strides = [1, 1, 1]} : vector<10x18x4xf32> to vector<8x16x4xf32>
    %18 = vector.shape_cast %17 : vector<8x16x4xf32> to vector<128x4xf32>
    %19 = vector.extract_strided_slice %6 {offsets = [2, 0, 0], sizes = [8, 16, 4], strides = [1, 1, 1]} : vector<10x18x4xf32> to vector<8x16x4xf32>
    %20 = vector.shape_cast %19 : vector<8x16x4xf32> to vector<128x4xf32>
    %21 = vector.extract_strided_slice %6 {offsets = [2, 1, 0], sizes = [8, 16, 4], strides = [1, 1, 1]} : vector<10x18x4xf32> to vector<8x16x4xf32>
    %22 = vector.shape_cast %21 : vector<8x16x4xf32> to vector<128x4xf32>
    %23 = vector.extract_strided_slice %6 {offsets = [2, 2, 0], sizes = [8, 16, 4], strides = [1, 1, 1]} : vector<10x18x4xf32> to vector<8x16x4xf32>
    %24 = vector.shape_cast %23 : vector<8x16x4xf32> to vector<128x4xf32>
    %25 = tpu.concatenate %8, %10, %12, %14, %16, %18, %20, %22, %24 in 1 : vector<128x4xf32>, vector<128x4xf32>, vector<128x4xf32>, vector<128x4xf32>, vector<128x4xf32>, vector<128x4xf32>, vector<128x4xf32>, vector<128x4xf32>, vector<128x4xf32> -> vector<128x36xf32>
    %26 = arith.truncf %25 : vector<128x36xf32> to vector<128x36xbf16>
    %c0_2 = arith.constant 0 : index
    %c0_3 = arith.constant 0 : index
    %27 = vector.load %arg3[%c0_2, %c0_3] : memref<36x4xbf16, #tpu.memory_space<vmem>>, vector<36x4xbf16>
    %cst = arith.constant dense<0.000000e+00> : vector<128x4xf32>
    %28 = tpu.matmul %26, %27, %cst {dimension_numbers = #tpu.dot_dimension_numbers<[1], [0], [0], [1], [0, 0, 1, 1], [], []>} : vector<128x36xbf16>, vector<36x4xbf16>, vector<128x4xf32> -> vector<128x4xf32>
    %c0_4 = arith.constant 0 : index
    %c0_5 = arith.constant 0 : index
    %29 = vector.load %arg4[%c0_4, %c0_5] : memref<1x4xf32, #tpu.memory_space<vmem>>, vector<1x4xf32>
    %30 = vector.broadcast %29 : vector<1x4xf32> to vector<128x4xf32>
    %31 = arith.addf %28, %30 : vector<128x4xf32>
    %32 = vector.shape_cast %31 : vector<128x4xf32> to vector<1x8x16x4xf32>
    %c0_6 = arith.constant 0 : index
    %c0_7 = arith.constant 0 : index
    %c0_8 = arith.constant 0 : index
    %c0_9 = arith.constant 0 : index
    %33 = vector.load %arg7[%c0_6, %c0_7, %c0_8, %c0_9] : memref<1x8x16x4xf32, #tpu.memory_space<vmem>>, vector<1x8x16x4xf32>
    tpu.vector_store %arg7[%c0_6, %c0_7, %c0_8, %c0_9], %32 {strides = array<i32>} : memref<1x8x16x4xf32, #tpu.memory_space<vmem>>, vector<1x8x16x4xf32>,
    %cst_10 = arith.constant dense<0.000000e+00> : vector<4xf32>
    %34 = vector.multi_reduction <add>, %31, %cst_10 [0] : vector<128x4xf32> to vector<4xf32>
    %35 = vector.shape_cast %34 : vector<4xf32> to vector<1x4xf32>
    %36 = arith.mulf %31, %31 : vector<128x4xf32>
    %cst_11 = arith.constant dense<0.000000e+00> : vector<4xf32>
    %37 = vector.multi_reduction <add>, %36, %cst_11 [0] : vector<128x4xf32> to vector<4xf32>
    %38 = vector.shape_cast %37 : vector<4xf32> to vector<1x4xf32>
    %39 = tpu.concatenate %35, %38 in 0 : vector<1x4xf32>, vector<1x4xf32> -> vector<2x4xf32>
    %c0_12 = arith.constant 0 : index
    %c0_13 = arith.constant 0 : index
    %c0_14 = arith.constant 0 : index
    %c0_15 = arith.constant 0 : index
    %40 = vector.load %arg8[%c0_12, %c0_13, %c0_14, %c0_15] : memref<1x1x2x4xf32, #tpu.memory_space<vmem>>, vector<1x1x2x4xf32>
    %41 = vector.shape_cast %40 : vector<1x1x2x4xf32> to vector<2x4xf32>
    %42 = vector.shape_cast %39 : vector<2x4xf32> to vector<1x1x2x4xf32>
    tpu.vector_store %arg8[%c0_12, %c0_13, %c0_14, %c0_15], %42 {strides = array<i32>} : memref<1x1x2x4xf32, #tpu.memory_space<vmem>>, vector<1x1x2x4xf32>,
    return
  }
  func.func @transform_0(%arg0: i32, %arg1: i32) -> (i32, i32, i32, i32) {
    %c0_i32 = arith.constant 0 : i32
    %c0_i32_0 = arith.constant 0 : i32
    %c0_i32_1 = arith.constant 0 : i32
    %c0_i32_2 = arith.constant 0 : i32
    return %arg0, %c0_i32, %c0_i32_0, %c0_i32_1 : i32, i32, i32, i32
  }
  func.func @transform_1(%arg0: i32, %arg1: i32) -> (i32, i32) {
    %c0_i32 = arith.constant 0 : i32
    %c0_i32_0 = arith.constant 0 : i32
    %c0_i32_1 = arith.constant 0 : i32
    return %c0_i32, %c0_i32_0 : i32, i32
  }
  func.func @transform_2(%arg0: i32, %arg1: i32) -> (i32, i32) {
    %c0_i32 = arith.constant 0 : i32
    %c0_i32_0 = arith.constant 0 : i32
    %c0_i32_1 = arith.constant 0 : i32
    return %c0_i32, %c0_i32_0 : i32, i32
  }
  func.func @transform_3(%arg0: i32, %arg1: i32) -> (i32, i32) {
    %c0_i32 = arith.constant 0 : i32
    %c0_i32_0 = arith.constant 0 : i32
    %c0_i32_1 = arith.constant 0 : i32
    return %c0_i32, %c0_i32_0 : i32, i32
  }
  func.func @transform_4(%arg0: i32, %arg1: i32) -> (i32, i32) {
    %c0_i32 = arith.constant 0 : i32
    %c0_i32_0 = arith.constant 0 : i32
    %c0_i32_1 = arith.constant 0 : i32
    return %c0_i32, %c0_i32_0 : i32, i32
  }
  func.func @transform_5(%arg0: i32, %arg1: i32) -> (i32, i32, i32, i32) {
    %c0_i32 = arith.constant 0 : i32
    %c0_i32_0 = arith.constant 0 : i32
    %c0_i32_1 = arith.constant 0 : i32
    return %arg0, %arg1, %c0_i32, %c0_i32_0 : i32, i32, i32, i32
  }
  func.func @transform_6(%arg0: i32, %arg1: i32) -> (i32, i32, i32, i32) {
    %c0_i32 = arith.constant 0 : i32
    %c0_i32_0 = arith.constant 0 : i32
    %c0_i32_1 = arith.constant 0 : i32
    return %arg0, %arg1, %c0_i32, %c0_i32_0 : i32, i32, i32, i32
  }
}

module attributes {stable_mosaic.version = 11 : i64} {
  func.func @_bn_relu_kernel(%arg0: i32, %arg1: i32, %arg2: memref<1x8x16x4xf32, #tpu.memory_space<vmem>>, %arg3: memref<1x4xf32, #tpu.memory_space<vmem>>, %arg4: memref<1x4xf32, #tpu.memory_space<vmem>>, %arg5: memref<1x8x16x4xf32, #tpu.memory_space<vmem>>) attributes {dimension_semantics = [#tpu.dimension_semantics<parallel>, #tpu.dimension_semantics<parallel>], iteration_bounds = array<i64: 2, 2>, scalar_prefetch = 0 : i64, scratch_operands = 0 : i64, tpu.core_type = #tpu.core_type<tc>, window_params = [{transform_indices = @transform_0, window_bounds = array<i64: 1, 8, 16, 4>}, {pipeline_mode = #tpu.pipeline_mode<synchronous>, transform_indices = @transform_1, window_bounds = array<i64: 1, 4>}, {pipeline_mode = #tpu.pipeline_mode<synchronous>, transform_indices = @transform_2, window_bounds = array<i64: 1, 4>}, {transform_indices = @transform_3, window_bounds = array<i64: 1, 8, 16, 4>}]} {
    %c0 = arith.constant 0 : index
    %c0_0 = arith.constant 0 : index
    %c0_1 = arith.constant 0 : index
    %c0_2 = arith.constant 0 : index
    %0 = vector.load %arg2[%c0, %c0_0, %c0_1, %c0_2] : memref<1x8x16x4xf32, #tpu.memory_space<vmem>>, vector<1x8x16x4xf32>
    %c0_3 = arith.constant 0 : index
    %c0_4 = arith.constant 0 : index
    %1 = vector.load %arg3[%c0_3, %c0_4] : memref<1x4xf32, #tpu.memory_space<vmem>>, vector<1x4xf32>
    %2 = vector.shape_cast %1 : vector<1x4xf32> to vector<1x1x1x4xf32>
    %3 = vector.broadcast %2 : vector<1x1x1x4xf32> to vector<1x8x16x4xf32>
    %4 = arith.mulf %0, %3 : vector<1x8x16x4xf32>
    %c0_5 = arith.constant 0 : index
    %c0_6 = arith.constant 0 : index
    %5 = vector.load %arg4[%c0_5, %c0_6] : memref<1x4xf32, #tpu.memory_space<vmem>>, vector<1x4xf32>
    %6 = vector.shape_cast %5 : vector<1x4xf32> to vector<1x1x1x4xf32>
    %7 = vector.broadcast %6 : vector<1x1x1x4xf32> to vector<1x8x16x4xf32>
    %8 = arith.addf %4, %7 : vector<1x8x16x4xf32>
    %cst = arith.constant 0.000000e+00 : f32
    %9 = vector.broadcast %cst : f32 to vector<1x8x16x4xf32>
    %10 = arith.maximumf %8, %9 : vector<1x8x16x4xf32>
    %c0_7 = arith.constant 0 : index
    %c0_8 = arith.constant 0 : index
    %c0_9 = arith.constant 0 : index
    %c0_10 = arith.constant 0 : index
    %11 = vector.load %arg5[%c0_7, %c0_8, %c0_9, %c0_10] : memref<1x8x16x4xf32, #tpu.memory_space<vmem>>, vector<1x8x16x4xf32>
    tpu.vector_store %arg5[%c0_7, %c0_8, %c0_9, %c0_10], %10 {strides = array<i32>} : memref<1x8x16x4xf32, #tpu.memory_space<vmem>>, vector<1x8x16x4xf32>,
    return
  }
  func.func @transform_0(%arg0: i32, %arg1: i32) -> (i32, i32, i32, i32) {
    %c0_i32 = arith.constant 0 : i32
    %c0_i32_0 = arith.constant 0 : i32
    %c0_i32_1 = arith.constant 0 : i32
    return %arg0, %arg1, %c0_i32, %c0_i32_0 : i32, i32, i32, i32
  }
  func.func @transform_1(%arg0: i32, %arg1: i32) -> (i32, i32) {
    %c0_i32 = arith.constant 0 : i32
    %c0_i32_0 = arith.constant 0 : i32
    %c0_i32_1 = arith.constant 0 : i32
    return %c0_i32, %c0_i32_0 : i32, i32
  }
  func.func @transform_2(%arg0: i32, %arg1: i32) -> (i32, i32) {
    %c0_i32 = arith.constant 0 : i32
    %c0_i32_0 = arith.constant 0 : i32
    %c0_i32_1 = arith.constant 0 : i32
    return %c0_i32, %c0_i32_0 : i32, i32
  }
  func.func @transform_3(%arg0: i32, %arg1: i32) -> (i32, i32, i32, i32) {
    %c0_i32 = arith.constant 0 : i32
    %c0_i32_0 = arith.constant 0 : i32
    %c0_i32_1 = arith.constant 0 : i32
    return %arg0, %arg1, %c0_i32, %c0_i32_0 : i32, i32, i32, i32
  }
}

</mosaic_0001>

<llo_original>
// kernel: upsample_forward.7
$region0: #{upsample_forward.7}
  #allocation0 [shape = 'u32[]', space=smem, size = 0x4, offset = 0x4, fixed_abs, tag = 'smem constant byte address 0x4 - core index']
  #allocation1 [shape = 'u32[72,128]{1,0:T(1,128)}', space=vmem, size = 0x9000, scoped, tag = 'internal scratch']
  %s0 = inlined_call_operand.vmem [shape: f32[2,16,16,4], index: 0, kind: input, shape index: {}]
  %s1 = inlined_call_operand.vmem [shape: f32[1,4], index: 1, kind: input, shape index: {}]
  %s2 = inlined_call_operand.vmem [shape: f32[1,4], index: 2, kind: input, shape index: {}]
  %s3 = inlined_call_operand.vmem [shape: f32[2,16,16,4], index: 3, kind: output, shape index: {}]
  %s4 = sld [smem:[#allocation0]]
  $region45: #{upsample_forward.7} parent=0
    _
  %s6 = ssub.s32 1, %s4
  %s7 = scalar_select 0, %s6, %s4
  loop: start=0, step=1, limit=6
  $region2: #{upsample_forward.7} parent=0 // loop_pre_header
    _
  $region3: #{upsample_forward.7} parent=0 // loop_header
    %s9 = sphi 0, %s13
    %p10 = scmp.ge.s32.totalorder %s9, 6
    %s16 = sphi 0, %s28
    %s17 = sphi 0, %s24
    %s18 = sphi 0, %s16
    %s19 = sphi 0, %s17
    %s20 = sphi 0, %s18
    %s21 = sphi 0, %s19
    %s33 = sphi 0, %s35
    %s36 = sphi 0, %s33
    %s37 = sphi 0, %s36
    %s53 = sphi 0, %s37
    %s57 = sphi 0, %s57
    %s59 = sphi 0, %s57
    %s60 = sphi 0, %s59
    %s74 = sphi 0, %s60
    %s78 = sphi 0, %s78
    %s80 = sphi 0, %s78
    %s81 = sphi 0, %s80
    %s95 = sphi 0, %s81
    %s103 = sphi 0, %s105
    %s106 = sphi 0, %s103
    %s107 = sphi 0, %s106
    %s123 = sphi 0, %s107
  $region4: #{upsample_forward.7} parent=0 // loop_header_branch
    %12 = sbr.rel (%p10) target = $region8
  $region5: #{upsample_forward.7} parent=0 // loop_body
    %s14 = ssub.s32 %s9, 1
    %s15 = ssub.s32 %s9, 2
    %s22 = sadd.s32 1, %s17
    %p23 = scmp.ge.s32.totalorder %s22, 2
    %s24 = scalar_select %p23, 0, %s22
    %s25 = sadd.s32 1, %s16
    %s26 = scalar_select %p23, %s25, %s16
    %p27 = scmp.ge.s32.totalorder %s26, 2
    %s28 = scalar_select %p27, 0, %s26
    %s29 = ssub.s32 %s16, %s28
    %s30 = ssub.s32 %s17, %s24
    %s31 = sor.u32 %s29, %s30
    %p32 = scmp.eq.s32.totalorder %s31, 0
    %s34 = sadd.s32 %s33, 1
    %s35 = scalar_select %p32, %s33, %s34
    %p38 = pneg %p32
    %p39 = scmp.eq.s32.totalorder %s9, 3
    %p40 = por %p38, %p39
    %p41 = scmp.ne.s32.totalorder %s33, %s36
    %p42 = scmp.eq.s32.totalorder %s9, 0
    %p43 = por %p41, %p42
    %p44 = scmp.ne.s32.totalorder %s33, %s36
    %p45 = scmp.eq.s32.totalorder %s14, 3
    %p46 = por %p44, %p45
    %p47 = scmp.ne.s32.totalorder %s36, %s37
    %p48 = scmp.eq.s32.totalorder %s14, 0
    %p49 = por %p47, %p48
    %p50 = scmp.ne.s32.totalorder %s36, %s37
    %p51 = scmp.eq.s32.totalorder %s15, 3
    %p52 = por %p50, %p51
    %p54 = scmp.ne.s32.totalorder %s37, %s53
    %p55 = scmp.eq.s32.totalorder %s15, 0
    %p56 = por %p54, %p55
    %s58 = sadd.s32 %s57, 1
    %p61 = scmp.eq.s32.totalorder %s9, 3
    %p62 = scmp.ne.s32.totalorder %s57, %s59
    %p63 = scmp.eq.s32.totalorder %s9, 0
    %p64 = por %p62, %p63
    %p65 = scmp.ne.s32.totalorder %s57, %s59
    %p66 = scmp.eq.s32.totalorder %s14, 3
    %p67 = por %p65, %p66
    %p68 = scmp.ne.s32.totalorder %s59, %s60
    %p69 = scmp.eq.s32.totalorder %s14, 0
    %p70 = por %p68, %p69
    %p71 = scmp.ne.s32.totalorder %s59, %s60
    %p72 = scmp.eq.s32.totalorder %s15, 3
    %p73 = por %p71, %p72
    %p75 = scmp.ne.s32.totalorder %s60, %s74
    %p76 = scmp.eq.s32.totalorder %s15, 0
    %p77 = por %p75, %p76
    %s79 = sadd.s32 %s78, 1
    %p82 = scmp.eq.s32.totalorder %s9, 3
    %p83 = scmp.ne.s32.totalorder %s78, %s80
    %p84 = scmp.eq.s32.totalorder %s9, 0
    %p85 = por %p83, %p84
    %p86 = scmp.ne.s32.totalorder %s78, %s80
    %p87 = scmp.eq.s32.totalorder %s14, 3
    %p88 = por %p86, %p87
    %p89 = scmp.ne.s32.totalorder %s80, %s81
    %p90 = scmp.eq.s32.totalorder %s14, 0
    %p91 = por %p89, %p90
    %p92 = scmp.ne.s32.totalorder %s80, %s81
    %p93 = scmp.eq.s32.totalorder %s15, 3
    %p94 = por %p92, %p93
    %p96 = scmp.ne.s32.totalorder %s81, %s95
    %p97 = scmp.eq.s32.totalorder %s15, 0
    %p98 = por %p96, %p97
    %s99 = ssub.s32 %s16, %s28
    %s100 = ssub.s32 %s17, %s24
    %s101 = sor.u32 %s99, %s100
    %p102 = scmp.eq.s32.totalorder %s101, 0
    %s104 = sadd.s32 %s103, 1
    %s105 = scalar_select %p102, %s103, %s104
    %p108 = pneg %p102
    %p109 = scmp.eq.s32.totalorder %s9, 3
    %p110 = por %p108, %p109
    %p111 = scmp.ne.s32.totalorder %s103, %s106
    %p112 = scmp.eq.s32.totalorder %s9, 0
    %p113 = por %p111, %p112
    %p114 = scmp.ne.s32.totalorder %s103, %s106
    %p115 = scmp.eq.s32.totalorder %s14, 3
    %p116 = por %p114, %p115
    %p117 = scmp.ne.s32.totalorder %s106, %s107
    %p118 = scmp.eq.s32.totalorder %s14, 0
    %p119 = por %p117, %p118
    %p120 = scmp.ne.s32.totalorder %s106, %s107
    %p121 = scmp.eq.s32.totalorder %s15, 3
    %p122 = por %p120, %p121
    %p124 = scmp.ne.s32.totalorder %s107, %s123
    %p125 = scmp.eq.s32.totalorder %s15, 0
    %p126 = por %p124, %p125
    %p127 = scmp.le.s32.totalorder 1, %s9
    %p128 = scmp.lt.s32.totalorder %s9, 5
    %p129 = pnand %p127, %p128
    %p130 = pneg %p129
    // Predicated region
    $region9: #{upsample_forward.7} parent=5 // pred_check
      _
    $region10: #{upsample_forward.7} parent=5 // pred_check_branch
      %132 = sbr.rel (%p129) target = $region12
    $region11: #{upsample_forward.7} parent=5 // pred_region
      %s133 = ssub.s32 %s9, 1
      // Predicated region
      $region13: #{upsample_forward.7} parent=11 // pred_check
        %p134 = pneg %p70
      $region14: #{upsample_forward.7} parent=11 // pred_check_branch
        %136 = sbr.rel (%p134) target = $region16
      $region15: #{upsample_forward.7} parent=11 // pred_region
        _
      $region16: #{upsample_forward.7} parent=11 // pred_fallthru
        _
      // Predicated region
      $region17: #{upsample_forward.7} parent=11 // pred_check
        %p137 = pneg %p91
      $region18: #{upsample_forward.7} parent=11 // pred_check_branch
        %139 = sbr.rel (%p137) target = $region20
      $region19: #{upsample_forward.7} parent=11 // pred_region
        _
      $region20: #{upsample_forward.7} parent=11 // pred_fallthru
        _
    $region12: #{upsample_forward.7} parent=5 // pred_fallthru
      _
    %p140 = scmp.lt.s32.totalorder %s9, 4
    // Predicated region
    $region21: #{upsample_forward.7} parent=5 // pred_check
      %p141 = pneg %p140
    $region22: #{upsample_forward.7} parent=5 // pred_check_branch
      %143 = sbr.rel (%p141) target = $region24
    $region23: #{upsample_forward.7} parent=5 // pred_region
      // Predicated region
      $region25: #{upsample_forward.7} parent=23 // pred_check
        %p144 = pneg %p43
      $region26: #{upsample_forward.7} parent=23 // pred_check_branch
        %146 = sbr.rel (%p144) target = $region28
      $region27: #{upsample_forward.7} parent=23 // pred_region
        %s147 = smul.u32 8, %s17
        %p148 = scmp.lt.s32.totalorder %s16, 1
        %s149 = scalar_select %p148, %s16, 1
        %p150 = scmp.lt.s32.totalorder %s147, 15
        %s151 = scalar_select %p150, %s147, 15
        %s152 = smul.addr %s151, 2
        %s153 = smul.addr %s149, 32
        %s154 = sadd.s32 %s152, %s153
        %s155 = smul.addr %s154, 8
        %s156 = scalar_lea.vmem %s0, %s155
        %s157 = smul.u32 8, %s17
      $region28: #{upsample_forward.7} parent=23 // pred_fallthru
        _
    $region24: #{upsample_forward.7} parent=5 // pred_fallthru
      _
    %p158 = scmp.le.s32.totalorder 1, %s9
    %p159 = scmp.lt.s32.totalorder %s9, 5
    %p160 = pnand %p158, %p159
    %p161 = pneg %p160
    // Predicated region
    $region29: #{upsample_forward.7} parent=5 // pred_check
      _
    $region30: #{upsample_forward.7} parent=5 // pred_check_branch
      %163 = sbr.rel (%p160) target = $region32
    $region31: #{upsample_forward.7} parent=5 // pred_region
      %s164 = ssub.s32 %s9, 1
      %s165 = smul.u32 8, %s19
      %p166 = scmp.lt.s32.totalorder %s18, 1
      %s167 = scalar_select %p166, %s18, 1
      %p168 = scmp.lt.s32.totalorder %s165, 15
      %s169 = scalar_select %p168, %s165, 15
      %s170 = smul.addr %s169, 2
      %s171 = smul.addr %s167, 32
      %s172 = sadd.s32 %s170, %s171
      %s173 = smul.addr %s172, 8
      %s174 = scalar_lea.vmem %s0, %s173
      %p175 = pneg %p49
      %p176 = pneg %p46
      %p177 = pneg %p70
      %p178 = pneg %p67
      %p179 = pneg %p91
      %p180 = pneg %p88
      %p181 = pneg %p119
      %p182 = pneg %p116
      %s183 = smul.u32 8, %s19
      %p184 = scmp.lt.s32.totalorder %s18, 1
      %s185 = scalar_select %p184, %s18, 1
      %p186 = scmp.lt.s32.totalorder %s183, 15
      %s187 = scalar_select %p186, %s183, 15
      %s188 = smul.addr %s187, 2
      %s189 = smul.addr %s185, 32
      %s190 = sadd.s32 %s188, %s189
      %s191 = smul.addr %s190, 8
      %s192 = scalar_lea.vmem %s3, %s191
      %s193 = smul.u32 8, %s19
      %p194 = scmp.lt.s32.totalorder %s18, 1
      %s195 = scalar_select %p194, %s18, 1
      %p196 = scmp.lt.s32.totalorder %s193, 15
      %s197 = scalar_select %p196, %s193, 15
      %s198 = smul.addr %s197, 2
      %s199 = smul.addr %s195, 32
      %s200 = sadd.s32 %s198, %s199
      %s201 = smul.addr %s200, 8
      %s202 = scalar_lea.vmem %s0, %s201
      %s203 = smul.u32 8, %s19
      %s204 = smul.u32 8, %s19
      %p205 = scmp.lt.s32.totalorder %s18, 1
      %s206 = scalar_select %p205, %s18, 1
      %p207 = scmp.lt.s32.totalorder %s204, 15
      %s208 = scalar_select %p207, %s204, 15
      %s209 = smul.addr %s208, 2
      %s210 = smul.addr %s206, 32
      %s211 = sadd.s32 %s209, %s210
      %s212 = smul.addr %s211, 8
      %s213 = scalar_lea.vmem %s3, %s212
      %s214 = smul.u32 8, %s19
      %v215 = vld [vmem:[%s202] sm:$0xff]
      %v216 = vld [vmem:[%s202 + $0x8] sm:$0xff]
      %v217 = vld [vmem:[%s202 + $0x10] sm:$0xff]
      %v218 = vld [vmem:[%s202 + $0x18] sm:$0xff]
      %v219 = vld [vmem:[%s202 + $0x20] sm:$0xff]
      %v220 = vld [vmem:[%s202 + $0x28] sm:$0xff]
      %v221 = vld [vmem:[%s202 + $0x30] sm:$0xff]
      %v222 = vld [vmem:[%s202 + $0x38] sm:$0xff]
      %v223 = vld [vmem:[%s202 + $0x40] sm:$0xff]
      %v224 = vld [vmem:[%s202 + $0x48] sm:$0xff]
      %v225 = vld [vmem:[%s202 + $0x50] sm:$0xff]
      %v226 = vld [vmem:[%s202 + $0x58] sm:$0xff]
      %v227 = vld [vmem:[%s202 + $0x60] sm:$0xff]
      %v228 = vld [vmem:[%s202 + $0x68] sm:$0xff]
      %v229 = vld [vmem:[%s202 + $0x70] sm:$0xff]
      %v230 = vld [vmem:[%s202 + $0x78] sm:$0xff]
      %v231 = vld [vmem:[%s1] sm:$0x1]
      %v233 = vperm.slane %v231, 0
      %v235 = vmul.f32 %v215, %v233
      %v236 = vmul.f32 %v216, %v233
      %v237 = vmul.f32 %v217, %v233
      %v238 = vmul.f32 %v218, %v233
      %v239 = vmul.f32 %v219, %v233
      %v240 = vmul.f32 %v220, %v233
      %v241 = vmul.f32 %v221, %v233
      %v242 = vmul.f32 %v222, %v233
      %v243 = vmul.f32 %v223, %v233
      %v244 = vmul.f32 %v224, %v233
      %v245 = vmul.f32 %v225, %v233
      %v246 = vmul.f32 %v226, %v233
      %v247 = vmul.f32 %v227, %v233
      %v248 = vmul.f32 %v228, %v233
      %v249 = vmul.f32 %v229, %v233
      %v250 = vmul.f32 %v230, %v233
      %v251 = vld [vmem:[%s2] sm:$0x1]
      %v253 = vperm.slane %v251, 0
      %v255 = vadd.f32 %v235, %v253
      %v256 = vadd.f32 %v236, %v253
      %v257 = vadd.f32 %v237, %v253
      %v258 = vadd.f32 %v238, %v253
      %v259 = vadd.f32 %v239, %v253
      %v260 = vadd.f32 %v240, %v253
      %v261 = vadd.f32 %v241, %v253
      %v262 = vadd.f32 %v242, %v253
      %v263 = vadd.f32 %v243, %v253
      %v264 = vadd.f32 %v244, %v253
      %v265 = vadd.f32 %v245, %v253
      %v266 = vadd.f32 %v246, %v253
      %v267 = vadd.f32 %v247, %v253
      %v268 = vadd.f32 %v248, %v253
      %v269 = vadd.f32 %v249, %v253
      %v270 = vadd.f32 %v250, %v253
      %v271 = vmax.f32 %v255, 0.0
      %v272 = vmax.f32 %v256, 0.0
      %v273 = vmax.f32 %v257, 0.0
      %v274 = vmax.f32 %v258, 0.0
      %v275 = vmax.f32 %v259, 0.0
      %v276 = vmax.f32 %v260, 0.0
      %v277 = vmax.f32 %v261, 0.0
      %v278 = vmax.f32 %v262, 0.0
      %v279 = vmax.f32 %v263, 0.0
      %v280 = vmax.f32 %v264, 0.0
      %v281 = vmax.f32 %v265, 0.0
      %v282 = vmax.f32 %v266, 0.0
      %v283 = vmax.f32 %v267, 0.0
      %v284 = vmax.f32 %v268, 0.0
      %v285 = vmax.f32 %v269, 0.0
      %v286 = vmax.f32 %v270, 0.0
      %vm287 = vcmask 31744
      %288 = vst.msk [vmem:[%s213] sm:$0xff] %vm287, %v271
      %289 = vst.msk [vmem:[%s213 + $0x8] sm:$0xff] %vm287, %v272
      %290 = vst.msk [vmem:[%s213 + $0x10] sm:$0xff] %vm287, %v273
      %291 = vst.msk [vmem:[%s213 + $0x18] sm:$0xff] %vm287, %v274
      %292 = vst.msk [vmem:[%s213 + $0x20] sm:$0xff] %vm287, %v275
      %293 = vst.msk [vmem:[%s213 + $0x28] sm:$0xff] %vm287, %v276
      %294 = vst.msk [vmem:[%s213 + $0x30] sm:$0xff] %vm287, %v277
      %295 = vst.msk [vmem:[%s213 + $0x38] sm:$0xff] %vm287, %v278
      %296 = vst.msk [vmem:[%s213 + $0x40] sm:$0xff] %vm287, %v279
      %297 = vst.msk [vmem:[%s213 + $0x48] sm:$0xff] %vm287, %v280
      %298 = vst.msk [vmem:[%s213 + $0x50] sm:$0xff] %vm287, %v281
      %299 = vst.msk [vmem:[%s213 + $0x58] sm:$0xff] %vm287, %v282
      %300 = vst.msk [vmem:[%s213 + $0x60] sm:$0xff] %vm287, %v283
      %301 = vst.msk [vmem:[%s213 + $0x68] sm:$0xff] %vm287, %v284
      %302 = vst.msk [vmem:[%s213 + $0x70] sm:$0xff] %vm287, %v285
      %303 = vst.msk [vmem:[%s213 + $0x78] sm:$0xff] %vm287, %v286
      %s304 = smul.u32 8, %s19
      %p305 = scmp.lt.s32.totalorder %s18, 1
      %s306 = scalar_select %p305, %s18, 1
      %p307 = scmp.lt.s32.totalorder %s304, 15
      %s308 = scalar_select %p307, %s304, 15
      %s309 = smul.addr %s308, 2
      %s310 = smul.addr %s306, 32
      %s311 = sadd.s32 %s309, %s310
      %s312 = smul.addr %s311, 8
      %s313 = scalar_lea.vmem %s3, %s312
      // Predicated region
      $region33: #{upsample_forward.7} parent=31 // pred_check
        %p314 = pneg %p116
      $region34: #{upsample_forward.7} parent=31 // pred_check_branch
        %316 = sbr.rel (%p314) target = $region36
      $region35: #{upsample_forward.7} parent=31 // pred_region
        %s317 = smul.u32 8, %s19
      $region36: #{upsample_forward.7} parent=31 // pred_fallthru
        _
    $region32: #{upsample_forward.7} parent=5 // pred_fallthru
      _
    %p318 = scmp.le.s32.totalorder 2, %s9
    // Predicated region
    $region37: #{upsample_forward.7} parent=5 // pred_check
      %p319 = pneg %p318
    $region38: #{upsample_forward.7} parent=5 // pred_check_branch
      %321 = sbr.rel (%p319) target = $region40
    $region39: #{upsample_forward.7} parent=5 // pred_region
      %s322 = ssub.s32 %s9, 2
      // Predicated region
      $region41: #{upsample_forward.7} parent=39 // pred_check
        %p323 = pneg %p122
      $region42: #{upsample_forward.7} parent=39 // pred_check_branch
        %325 = sbr.rel (%p323) target = $region44
      $region43: #{upsample_forward.7} parent=39 // pred_region
        %s326 = smul.u32 8, %s21
        %p327 = scmp.lt.s32.totalorder %s20, 1
        %s328 = scalar_select %p327, %s20, 1
        %p329 = scmp.lt.s32.totalorder %s326, 15
        %s330 = scalar_select %p329, %s326, 15
        %s331 = smul.addr %s330, 2
        %s332 = smul.addr %s328, 32
        %s333 = sadd.s32 %s331, %s332
        %s334 = smul.addr %s333, 8
        %s335 = scalar_lea.vmem %s3, %s334
      $region44: #{upsample_forward.7} parent=39 // pred_fallthru
        _
    $region40: #{upsample_forward.7} parent=5 // pred_fallthru
      _
  $region6: #{upsample_forward.7} parent=0 // loop_footer
    %s13 = sadd.s32 1, %s9
  $region7: #{upsample_forward.7} parent=0 // loop_footer_branch
    %8 = sbr.rel target = $region3
  $region8: #{upsample_forward.7} parent=0 // loop_exit
    _

// kernel: upsample_forward.4
$region0: #{upsample_forward.4}
  #allocation0 [shape = 'u32[]', space=smem, size = 0x4, offset = 0x4, fixed_abs, tag = 'smem constant byte address 0x4 - core index']
  #allocation1 [shape = 'u32[72,128]{1,0:T(1,128)}', space=vmem, size = 0x9000, scoped, tag = 'internal scratch']
  %s0 = inlined_call_operand.vmem [shape: f32[2,64,4], index: 0, kind: input, shape index: {}]
  %s1 = inlined_call_operand.vmem [shape: f32[2,16,16,4], index: 1, kind: input, shape index: {}]
  %s2 = inlined_call_operand.vmem [shape: f32[256,64], index: 2, kind: input, shape index: {}]
  %s3 = inlined_call_operand.vmem [shape: f32[2,16,16,8], index: 3, kind: output, shape index: {}]
  %s4 = sld [smem:[#allocation0]]
  $region45: #{upsample_forward.4} parent=0
    _
  %s6 = ssub.s32 1, %s4
  %s7 = scalar_select 0, %s6, %s4
  loop: start=0, step=1, limit=4
  $region2: #{upsample_forward.4} parent=0 // loop_pre_header
    _
  $region3: #{upsample_forward.4} parent=0 // loop_header
    %s9 = sphi 0, %s13
    %p10 = scmp.ge.s32.totalorder %s9, 4
    %s19 = sphi 0, %s21
    %s22 = sphi 0, %s19
    %s23 = sphi 0, %s22
    %s39 = sphi 0, %s23
    %s45 = sphi 0, %s47
    %s48 = sphi 0, %s45
    %s49 = sphi 0, %s48
    %s65 = sphi 0, %s49
    %s69 = sphi 0, %s69
    %s71 = sphi 0, %s69
    %s72 = sphi 0, %s71
    %s86 = sphi 0, %s72
    %s92 = sphi 0, %s94
    %s95 = sphi 0, %s92
    %s96 = sphi 0, %s95
    %s112 = sphi 0, %s96
  $region4: #{upsample_forward.4} parent=0 // loop_header_branch
    %12 = sbr.rel (%p10) target = $region8
  $region5: #{upsample_forward.4} parent=0 // loop_body
    %s14 = ssub.s32 %s9, 1
    %s15 = ssub.s32 %s9, 2
    %s16 = sadd.s32 %s9, 1
    %s17 = ssub.s32 %s9, %s16
    %p18 = scmp.eq.s32.totalorder %s17, 0
    %s20 = sadd.s32 %s19, 1
    %s21 = scalar_select %p18, %s19, %s20
    %p24 = pneg %p18
    %p25 = scmp.eq.s32.totalorder %s9, 1
    %p26 = por %p24, %p25
    %p27 = scmp.ne.s32.totalorder %s19, %s22
    %p28 = scmp.eq.s32.totalorder %s9, 0
    %p29 = por %p27, %p28
    %p30 = scmp.ne.s32.totalorder %s19, %s22
    %p31 = scmp.eq.s32.totalorder %s14, 1
    %p32 = por %p30, %p31
    %p33 = scmp.ne.s32.totalorder %s22, %s23
    %p34 = scmp.eq.s32.totalorder %s14, 0
    %p35 = por %p33, %p34
    %p36 = scmp.ne.s32.totalorder %s22, %s23
    %p37 = scmp.eq.s32.totalorder %s15, 1
    %p38 = por %p36, %p37
    %p40 = scmp.ne.s32.totalorder %s23, %s39
    %p41 = scmp.eq.s32.totalorder %s15, 0
    %p42 = por %p40, %p41
    %s43 = ssub.s32 %s9, %s16
    %p44 = scmp.eq.s32.totalorder %s43, 0
    %s46 = sadd.s32 %s45, 1
    %s47 = scalar_select %p44, %s45, %s46
    %p50 = pneg %p44
    %p51 = scmp.eq.s32.totalorder %s9, 1
    %p52 = por %p50, %p51
    %p53 = scmp.ne.s32.totalorder %s45, %s48
    %p54 = scmp.eq.s32.totalorder %s9, 0
    %p55 = por %p53, %p54
    %p56 = scmp.ne.s32.totalorder %s45, %s48
    %p57 = scmp.eq.s32.totalorder %s14, 1
    %p58 = por %p56, %p57
    %p59 = scmp.ne.s32.totalorder %s48, %s49
    %p60 = scmp.eq.s32.totalorder %s14, 0
    %p61 = por %p59, %p60
    %p62 = scmp.ne.s32.totalorder %s48, %s49
    %p63 = scmp.eq.s32.totalorder %s15, 1
    %p64 = por %p62, %p63
    %p66 = scmp.ne.s32.totalorder %s49, %s65
    %p67 = scmp.eq.s32.totalorder %s15, 0
    %p68 = por %p66, %p67
    %s70 = sadd.s32 %s69, 1
    %p73 = scmp.eq.s32.totalorder %s9, 1
    %p74 = scmp.ne.s32.totalorder %s69, %s71
    %p75 = scmp.eq.s32.totalorder %s9, 0
    %p76 = por %p74, %p75
    %p77 = scmp.ne.s32.totalorder %s69, %s71
    %p78 = scmp.eq.s32.totalorder %s14, 1
    %p79 = por %p77, %p78
    %p80 = scmp.ne.s32.totalorder %s71, %s72
    %p81 = scmp.eq.s32.totalorder %s14, 0
    %p82 = por %p80, %p81
    %p83 = scmp.ne.s32.totalorder %s71, %s72
    %p84 = scmp.eq.s32.totalorder %s15, 1
    %p85 = por %p83, %p84
    %p87 = scmp.ne.s32.totalorder %s72, %s86
    %p88 = scmp.eq.s32.totalorder %s15, 0
    %p89 = por %p87, %p88
    %s90 = ssub.s32 %s9, %s16
    %p91 = scmp.eq.s32.totalorder %s90, 0
    %s93 = sadd.s32 %s92, 1
    %s94 = scalar_select %p91, %s92, %s93
    %p97 = pneg %p91
    %p98 = scmp.eq.s32.totalorder %s9, 1
    %p99 = por %p97, %p98
    %p100 = scmp.ne.s32.totalorder %s92, %s95
    %p101 = scmp.eq.s32.totalorder %s9, 0
    %p102 = por %p100, %p101
    %p103 = scmp.ne.s32.totalorder %s92, %s95
    %p104 = scmp.eq.s32.totalorder %s14, 1
    %p105 = por %p103, %p104
    %p106 = scmp.ne.s32.totalorder %s95, %s96
    %p107 = scmp.eq.s32.totalorder %s14, 0
    %p108 = por %p106, %p107
    %p109 = scmp.ne.s32.totalorder %s95, %s96
    %p110 = scmp.eq.s32.totalorder %s15, 1
    %p111 = por %p109, %p110
    %p113 = scmp.ne.s32.totalorder %s96, %s112
    %p114 = scmp.eq.s32.totalorder %s15, 0
    %p115 = por %p113, %p114
    %p116 = scmp.le.s32.totalorder 1, %s9
    %p117 = scmp.lt.s32.totalorder %s9, 3
    %p118 = pnand %p116, %p117
    %p119 = pneg %p118
    // Predicated region
    $region9: #{upsample_forward.4} parent=5 // pred_check
      _
    $region10: #{upsample_forward.4} parent=5 // pred_check_branch
      %121 = sbr.rel (%p118) target = $region12
    $region11: #{upsample_forward.4} parent=5 // pred_region
      %s122 = ssub.s32 %s9, 1
      // Predicated region
      $region13: #{upsample_forward.4} parent=11 // pred_check
        %p123 = pneg %p82
      $region14: #{upsample_forward.4} parent=11 // pred_check_branch
        %125 = sbr.rel (%p123) target = $region16
      $region15: #{upsample_forward.4} parent=11 // pred_region
        _
      $region16: #{upsample_forward.4} parent=11 // pred_fallthru
        _
    $region12: #{upsample_forward.4} parent=5 // pred_fallthru
      _
    %p126 = scmp.lt.s32.totalorder %s9, 2
    // Predicated region
    $region17: #{upsample_forward.4} parent=5 // pred_check
      %p127 = pneg %p126
    $region18: #{upsample_forward.4} parent=5 // pred_check_branch
      %129 = sbr.rel (%p127) target = $region20
    $region19: #{upsample_forward.4} parent=5 // pred_region
      // Predicated region
      $region21: #{upsample_forward.4} parent=19 // pred_check
        %p130 = pneg %p29
      $region22: #{upsample_forward.4} parent=19 // pred_check_branch
        %132 = sbr.rel (%p130) target = $region24
      $region23: #{upsample_forward.4} parent=19 // pred_region
        %p133 = scmp.lt.s32.totalorder %s9, 1
        %s134 = scalar_select %p133, %s9, 1
        %s135 = smul.addr %s134, 8
        %s136 = smul.addr %s135, 8
        %s137 = scalar_lea.vmem %s0, %s136
      $region24: #{upsample_forward.4} parent=19 // pred_fallthru
        _
      // Predicated region
      $region25: #{upsample_forward.4} parent=19 // pred_check
        %p138 = pneg %p55
      $region26: #{upsample_forward.4} parent=19 // pred_check_branch
        %140 = sbr.rel (%p138) target = $region28
      $region27: #{upsample_forward.4} parent=19 // pred_region
        %p141 = scmp.lt.s32.totalorder %s9, 1
        %s142 = scalar_select %p141, %s9, 1
        %s143 = smul.addr %s142, 32
        %s144 = smul.addr %s143, 8
        %s145 = scalar_lea.vmem %s1, %s144
      $region28: #{upsample_forward.4} parent=19 // pred_fallthru
        _
    $region20: #{upsample_forward.4} parent=5 // pred_fallthru
      _
    %p146 = scmp.le.s32.totalorder 1, %s9
    %p147 = scmp.lt.s32.totalorder %s9, 3
    %p148 = pnand %p146, %p147
    %p149 = pneg %p148
    // Predicated region
    $region29: #{upsample_forward.4} parent=5 // pred_check
      _
    $region30: #{upsample_forward.4} parent=5 // pred_check_branch
      %151 = sbr.rel (%p148) target = $region32
    $region31: #{upsample_forward.4} parent=5 // pred_region
      %s152 = ssub.s32 %s9, 1
      %p153 = scmp.lt.s32.totalorder %s14, 1
      %s154 = scalar_select %p153, %s14, 1
      %s155 = smul.addr %s154, 8
      %s156 = smul.addr %s155, 8
      %s157 = scalar_lea.vmem %s0, %s156
      %p158 = pneg %p35
      %p159 = pneg %p32
      %p160 = scmp.lt.s32.totalorder %s14, 1
      %s161 = scalar_select %p160, %s14, 1
      %s162 = smul.addr %s161, 32
      %s163 = smul.addr %s162, 8
      %s164 = scalar_lea.vmem %s1, %s163
      %p165 = pneg %p61
      %p166 = pneg %p58
      %p167 = pneg %p82
      %p168 = pneg %p79
      %p169 = pneg %p108
      %p170 = pneg %p105
      %p171 = scmp.lt.s32.totalorder %s14, 1
      %s172 = scalar_select %p171, %s14, 1
      %s173 = smul.addr %s172, 32
      %s174 = smul.addr %s173, 8
      %s175 = scalar_lea.vmem %s3, %s174
      %p176 = scmp.lt.s32.totalorder %s14, 1
      %s177 = scalar_select %p176, %s14, 1
      %s178 = smul.addr %s177, 8
      %s179 = smul.addr %s178, 8
      %s180 = scalar_lea.vmem %s0, %s179
      %p181 = scmp.lt.s32.totalorder %s14, 1
      %s182 = scalar_select %p181, %s14, 1
      %s183 = smul.addr %s182, 32
      %s184 = smul.addr %s183, 8
      %s185 = scalar_lea.vmem %s1, %s184
      %p186 = scmp.lt.s32.totalorder %s14, 1
      %s187 = scalar_select %p186, %s14, 1
      %s188 = smul.addr %s187, 32
      %s189 = smul.addr %s188, 8
      %s190 = scalar_lea.vmem %s3, %s189
      %v191 = vld [vmem:[%s2] sm:$0xff]
      %v192 = vld [vmem:[%s2 + $0x8] sm:$0xff]
      %v193 = vld [vmem:[%s2 + $0x10] sm:$0xff]
      %v194 = vld [vmem:[%s2 + $0x18] sm:$0xff]
      %v195 = vld [vmem:[%s2 + $0x20] sm:$0xff]
      %v196 = vld [vmem:[%s2 + $0x28] sm:$0xff]
      %v197 = vld [vmem:[%s2 + $0x30] sm:$0xff]
      %v198 = vld [vmem:[%s2 + $0x38] sm:$0xff]
      %v199 = vld [vmem:[%s2 + $0x40] sm:$0xff]
      %v200 = vld [vmem:[%s2 + $0x48] sm:$0xff]
      %v201 = vld [vmem:[%s2 + $0x50] sm:$0xff]
      %v202 = vld [vmem:[%s2 + $0x58] sm:$0xff]
      %v203 = vld [vmem:[%s2 + $0x60] sm:$0xff]
      %v204 = vld [vmem:[%s2 + $0x68] sm:$0xff]
      %v205 = vld [vmem:[%s2 + $0x70] sm:$0xff]
      %v206 = vld [vmem:[%s2 + $0x78] sm:$0xff]
      %v207 = vld [vmem:[%s2 + $0x80] sm:$0xff]
      %v208 = vld [vmem:[%s2 + $0x88] sm:$0xff]
      %v209 = vld [vmem:[%s2 + $0x90] sm:$0xff]
      %v210 = vld [vmem:[%s2 + $0x98] sm:$0xff]
      %v211 = vld [vmem:[%s2 + $0xa0] sm:$0xff]
      %v212 = vld [vmem:[%s2 + $0xa8] sm:$0xff]
      %v213 = vld [vmem:[%s2 + $0xb0] sm:$0xff]
      %v214 = vld [vmem:[%s2 + $0xb8] sm:$0xff]
      %v215 = vld [vmem:[%s2 + $0xc0] sm:$0xff]
      %v216 = vld [vmem:[%s2 + $0xc8] sm:$0xff]
      %v217 = vld [vmem:[%s2 + $0xd0] sm:$0xff]
      %v218 = vld [vmem:[%s2 + $0xd8] sm:$0xff]
      %v219 = vld [vmem:[%s2 + $0xe0] sm:$0xff]
      %v220 = vld [vmem:[%s2 + $0xe8] sm:$0xff]
      %v221 = vld [vmem:[%s2 + $0xf0] sm:$0xff]
      %v222 = vld [vmem:[%s2 + $0xf8] sm:$0xff]
      %v223 = vld [vmem:[%s180] sm:$0xff]
      %v224 = vld [vmem:[%s180 + $0x8] sm:$0xff]
      %v225 = vld [vmem:[%s180 + $0x10] sm:$0xff]
      %v226 = vld [vmem:[%s180 + $0x18] sm:$0xff]
      %v227 = vld [vmem:[%s180 + $0x20] sm:$0xff]
      %v228 = vld [vmem:[%s180 + $0x28] sm:$0xff]
      %v229 = vld [vmem:[%s180 + $0x30] sm:$0xff]
      %v230 = vld [vmem:[%s180 + $0x38] sm:$0xff]
      %vm231 = vcmask 523264
      %v233 = vsel %vm231, %v191, 0
      %v236 = vsel %vm231, %v192, 0
      %v239 = vsel %vm231, %v193, 0
      %v242 = vsel %vm231, %v194, 0
      %v245 = vsel %vm231, %v195, 0
      %v248 = vsel %vm231, %v196, 0
      %v251 = vsel %vm231, %v197, 0
      %v254 = vsel %vm231, %v198, 0
      %v257 = vsel %vm231, %v199, 0
      %v260 = vsel %vm231, %v200, 0
      %v263 = vsel %vm231, %v201, 0
      %v266 = vsel %vm231, %v202, 0
      %v269 = vsel %vm231, %v203, 0
      %v272 = vsel %vm231, %v204, 0
      %v275 = vsel %vm231, %v205, 0
      %v278 = vsel %vm231, %v206, 0
      %v281 = vsel %vm231, %v207, 0
      %v284 = vsel %vm231, %v208, 0
      %v287 = vsel %vm231, %v209, 0
      %v290 = vsel %vm231, %v210, 0
      %v293 = vsel %vm231, %v211, 0
      %v296 = vsel %vm231, %v212, 0
      %v299 = vsel %vm231, %v213, 0
      %v302 = vsel %vm231, %v214, 0
      %v305 = vsel %vm231, %v215, 0
      %v308 = vsel %vm231, %v216, 0
      %v311 = vsel %vm231, %v217, 0
      %v314 = vsel %vm231, %v218, 0
      %v317 = vsel %vm231, %v219, 0
      %v320 = vsel %vm231, %v220, 0
      %v323 = vsel %vm231, %v221, 0
      %v326 = vsel %vm231, %v222, 0
      %328 = vmatpush.msra.mxu0 0.0
      %329 = vmatpush.msra.mxu0 0.0
      %330 = vmatpush.msra.mxu0 0.0
      %331 = vmatpush.msra.mxu0 0.0
      %332 = vmatpush.msra.mxu0 0.0
      %333 = vmatpush.msra.mxu0 0.0
      %334 = vmatpush.msra.mxu0 0.0
      %335 = vmatpush.msra.mxu0 0.0
      %336 = vmatpush.msra.mxu0 %v230
      %337 = vmatpush.msra.mxu0 %v229
      %338 = vmatpush.msra.mxu0 %v228
      %339 = vmatpush.msra.mxu0 %v227
      %340 = vmatpush.msra.mxu0 %v226
      %341 = vmatpush.msra.mxu0 %v225
      %342 = vmatpush.msra.mxu0 %v224
      %343 = vmatpush.msra.mxu0 %v223
      %344 = vmatmul.f32.gmra.mxu0 %v233
      %v345 = vpop.f32.mrf.mxu0
      %v346 = vadd.f32 0.0, %v345
      %347 = vmatmul.f32.gmra.mxu0 %v236
      %v348 = vpop.f32.mrf.mxu0
      %v349 = vadd.f32 0.0, %v348
      %350 = vmatmul.f32.gmra.mxu0 %v239
      %v351 = vpop.f32.mrf.mxu0
      %v352 = vadd.f32 0.0, %v351
      %353 = vmatmul.f32.gmra.mxu0 %v242
      %v354 = vpop.f32.mrf.mxu0
      %v355 = vadd.f32 0.0, %v354
      %356 = vmatmul.f32.gmra.mxu0 %v245
      %v357 = vpop.f32.mrf.mxu0
      %v358 = vadd.f32 0.0, %v357
      %359 = vmatmul.f32.gmra.mxu0 %v248
      %v360 = vpop.f32.mrf.mxu0
      %v361 = vadd.f32 0.0, %v360
      %362 = vmatmul.f32.gmra.mxu0 %v251
      %v363 = vpop.f32.mrf.mxu0
      %v364 = vadd.f32 0.0, %v363
      %365 = vmatmul.f32.gmra.mxu0 %v254
      %v366 = vpop.f32.mrf.mxu0
      %v367 = vadd.f32 0.0, %v366
      %368 = vmatmul.f32.gmra.mxu0 %v257
      %v369 = vpop.f32.mrf.mxu0
      %v370 = vadd.f32 0.0, %v369
      %371 = vmatmul.f32.gmra.mxu0 %v260
      %v372 = vpop.f32.mrf.mxu0
      %v373 = vadd.f32 0.0, %v372
      %374 = vmatmul.f32.gmra.mxu0 %v263
      %v375 = vpop.f32.mrf.mxu0
      %v376 = vadd.f32 0.0, %v375
      %377 = vmatmul.f32.gmra.mxu0 %v266
      %v378 = vpop.f32.mrf.mxu0
      %v379 = vadd.f32 0.0, %v378
      %380 = vmatmul.f32.gmra.mxu0 %v269
      %v381 = vpop.f32.mrf.mxu0
      %v382 = vadd.f32 0.0, %v381
      %383 = vmatmul.f32.gmra.mxu0 %v272
      %v384 = vpop.f32.mrf.mxu0
      %v385 = vadd.f32 0.0, %v384
      %386 = vmatmul.f32.gmra.mxu0 %v275
      %v387 = vpop.f32.mrf.mxu0
      %v388 = vadd.f32 0.0, %v387
      %389 = vmatmul.f32.gmra.mxu0 %v278
      %v390 = vpop.f32.mrf.mxu0
      %v391 = vadd.f32 0.0, %v390
      %392 = vmatmul.f32.gmra.mxu0 %v281
      %v393 = vpop.f32.mrf.mxu0
      %v394 = vadd.f32 0.0, %v393
      %395 = vmatmul.f32.gmra.mxu0 %v284
      %v396 = vpop.f32.mrf.mxu0
      %v397 = vadd.f32 0.0, %v396
      %398 = vmatmul.f32.gmra.mxu0 %v287
      %v399 = vpop.f32.mrf.mxu0
      %v400 = vadd.f32 0.0, %v399
      %401 = vmatmul.f32.gmra.mxu0 %v290
      %v402 = vpop.f32.mrf.mxu0
      %v403 = vadd.f32 0.0, %v402
      %404 = vmatmul.f32.gmra.mxu0 %v293
      %v405 = vpop.f32.mrf.mxu0
      %v406 = vadd.f32 0.0, %v405
      %407 = vmatmul.f32.gmra.mxu0 %v296
      %v408 = vpop.f32.mrf.mxu0
      %v409 = vadd.f32 0.0, %v408
      %410 = vmatmul.f32.gmra.mxu0 %v299
      %v411 = vpop.f32.mrf.mxu0
      %v412 = vadd.f32 0.0, %v411
      %413 = vmatmul.f32.gmra.mxu0 %v302
      %v414 = vpop.f32.mrf.mxu0
      %v415 = vadd.f32 0.0, %v414
      %416 = vmatmul.f32.gmra.mxu0 %v305
      %v417 = vpop.f32.mrf.mxu0
      %v418 = vadd.f32 0.0, %v417
      %419 = vmatmul.f32.gmra.mxu0 %v308
      %v420 = vpop.f32.mrf.mxu0
      %v421 = vadd.f32 0.0, %v420
      %422 = vmatmul.f32.gmra.mxu0 %v311
      %v423 = vpop.f32.mrf.mxu0
      %v424 = vadd.f32 0.0, %v423
      %425 = vmatmul.f32.gmra.mxu0 %v314
      %v426 = vpop.f32.mrf.mxu0
      %v427 = vadd.f32 0.0, %v426
      %428 = vmatmul.f32.gmra.mxu0 %v317
      %v429 = vpop.f32.mrf.mxu0
      %v430 = vadd.f32 0.0, %v429
      %431 = vmatmul.f32.gmra.mxu0 %v320
      %v432 = vpop.f32.mrf.mxu0
      %v433 = vadd.f32 0.0, %v432
      %434 = vmatmul.f32.gmra.mxu0 %v323
      %v435 = vpop.f32.mrf.mxu0
      %v436 = vadd.f32 0.0, %v435
      %437 = vmatmul.f32.gmra.mxu0 %v326
      %v438 = vpop.f32.mrf.mxu0
      %v439 = vadd.f32 0.0, %v438
      %440 = vdwg.mxu0
      %v441 = vld [vmem:[%s185] sm:$0xff]
      %v442 = vld [vmem:[%s185 + $0x8] sm:$0xff]
      %v443 = vld [vmem:[%s185 + $0x10] sm:$0xff]
      %v444 = vld [vmem:[%s185 + $0x18] sm:$0xff]
      %v445 = vld [vmem:[%s185 + $0x20] sm:$0xff]
      %v446 = vld [vmem:[%s185 + $0x28] sm:$0xff]
      %v447 = vld [vmem:[%s185 + $0x30] sm:$0xff]
      %v448 = vld [vmem:[%s185 + $0x38] sm:$0xff]
      %v449 = vld [vmem:[%s185 + $0x40] sm:$0xff]
      %v450 = vld [vmem:[%s185 + $0x48] sm:$0xff]
      %v451 = vld [vmem:[%s185 + $0x50] sm:$0xff]
      %v452 = vld [vmem:[%s185 + $0x58] sm:$0xff]
      %v453 = vld [vmem:[%s185 + $0x60] sm:$0xff]
      %v454 = vld [vmem:[%s185 + $0x68] sm:$0xff]
      %v455 = vld [vmem:[%s185 + $0x70] sm:$0xff]
      %v456 = vld [vmem:[%s185 + $0x78] sm:$0xff]
      %v457 = vld [vmem:[%s185 + $0x80] sm:$0xff]
      %v458 = vld [vmem:[%s185 + $0x88] sm:$0xff]
      %v459 = vld [vmem:[%s185 + $0x90] sm:$0xff]
      %v460 = vld [vmem:[%s185 + $0x98] sm:$0xff]
      %v461 = vld [vmem:[%s185 + $0xa0] sm:$0xff]
      %v462 = vld [vmem:[%s185 + $0xa8] sm:$0xff]
      %v463 = vld [vmem:[%s185 + $0xb0] sm:$0xff]
      %v464 = vld [vmem:[%s185 + $0xb8] sm:$0xff]
      %v465 = vld [vmem:[%s185 + $0xc0] sm:$0xff]
      %v466 = vld [vmem:[%s185 + $0xc8] sm:$0xff]
      %v467 = vld [vmem:[%s185 + $0xd0] sm:$0xff]
      %v468 = vld [vmem:[%s185 + $0xd8] sm:$0xff]
      %v469 = vld [vmem:[%s185 + $0xe0] sm:$0xff]
      %v470 = vld [vmem:[%s185 + $0xe8] sm:$0xff]
      %v471 = vld [vmem:[%s185 + $0xf0] sm:$0xff]
      %v472 = vld [vmem:[%s185 + $0xf8] sm:$0xff]
      %505 = vrot.lane.b32.xlu0 %v441, 4
      %v506 = vpop.permute.xlu0 %505
      %507 = vrot.lane.b32.xlu0 %v442, 4
      %v508 = vpop.permute.xlu0 %507
      %509 = vrot.lane.b32.xlu0 %v443, 4
      %v510 = vpop.permute.xlu0 %509
      %511 = vrot.lane.b32.xlu0 %v444, 4
      %v512 = vpop.permute.xlu0 %511
      %513 = vrot.lane.b32.xlu0 %v445, 4
      %v514 = vpop.permute.xlu0 %513
      %515 = vrot.lane.b32.xlu0 %v446, 4
      %v516 = vpop.permute.xlu0 %515
      %517 = vrot.lane.b32.xlu0 %v447, 4
      %v518 = vpop.permute.xlu0 %517
      %519 = vrot.lane.b32.xlu0 %v448, 4
      %v520 = vpop.permute.xlu0 %519
      %521 = vrot.lane.b32.xlu0 %v449, 4
      %v522 = vpop.permute.xlu0 %521
      %523 = vrot.lane.b32.xlu0 %v450, 4
      %v524 = vpop.permute.xlu0 %523
      %525 = vrot.lane.b32.xlu0 %v451, 4
      %v526 = vpop.permute.xlu0 %525
      %527 = vrot.lane.b32.xlu0 %v452, 4
      %v528 = vpop.permute.xlu0 %527
      %529 = vrot.lane.b32.xlu0 %v453, 4
      %v530 = vpop.permute.xlu0 %529
      %531 = vrot.lane.b32.xlu0 %v454, 4
      %v532 = vpop.permute.xlu0 %531
      %533 = vrot.lane.b32.xlu0 %v455, 4
      %v534 = vpop.permute.xlu0 %533
      %535 = vrot.lane.b32.xlu0 %v456, 4
      %v536 = vpop.permute.xlu0 %535
      %537 = vrot.lane.b32.xlu0 %v457, 4
      %v538 = vpop.permute.xlu0 %537
      %539 = vrot.lane.b32.xlu0 %v458, 4
      %v540 = vpop.permute.xlu0 %539
      %541 = vrot.lane.b32.xlu0 %v459, 4
      %v542 = vpop.permute.xlu0 %541
      %543 = vrot.lane.b32.xlu0 %v460, 4
      %v544 = vpop.permute.xlu0 %543
      %545 = vrot.lane.b32.xlu0 %v461, 4
      %v546 = vpop.permute.xlu0 %545
      %547 = vrot.lane.b32.xlu0 %v462, 4
      %v548 = vpop.permute.xlu0 %547
      %549 = vrot.lane.b32.xlu0 %v463, 4
      %v550 = vpop.permute.xlu0 %549
      %551 = vrot.lane.b32.xlu0 %v464, 4
      %v552 = vpop.permute.xlu0 %551
      %553 = vrot.lane.b32.xlu0 %v465, 4
      %v554 = vpop.permute.xlu0 %553
      %555 = vrot.lane.b32.xlu0 %v466, 4
      %v556 = vpop.permute.xlu0 %555
      %557 = vrot.lane.b32.xlu0 %v467, 4
      %v558 = vpop.permute.xlu0 %557
      %559 = vrot.lane.b32.xlu0 %v468, 4
      %v560 = vpop.permute.xlu0 %559
      %561 = vrot.lane.b32.xlu0 %v469, 4
      %v562 = vpop.permute.xlu0 %561
      %563 = vrot.lane.b32.xlu0 %v470, 4
      %v564 = vpop.permute.xlu0 %563
      %565 = vrot.lane.b32.xlu0 %v471, 4
      %v566 = vpop.permute.xlu0 %565
      %567 = vrot.lane.b32.xlu0 %v472, 4
      %v568 = vpop.permute.xlu0 %567
      %vm601 = vcmask 31744
      %v602 = vsel %vm601, %v346, %v506
      %v603 = vsel %vm601, %v349, %v508
      %v604 = vsel %vm601, %v352, %v510
      %v605 = vsel %vm601, %v355, %v512
      %v606 = vsel %vm601, %v358, %v514
      %v607 = vsel %vm601, %v361, %v516
      %v608 = vsel %vm601, %v364, %v518
      %v609 = vsel %vm601, %v367, %v520
      %v610 = vsel %vm601, %v370, %v522
      %v611 = vsel %vm601, %v373, %v524
      %v612 = vsel %vm601, %v376, %v526
      %v613 = vsel %vm601, %v379, %v528
      %v614 = vsel %vm601, %v382, %v530
      %v615 = vsel %vm601, %v385, %v532
      %v616 = vsel %vm601, %v388, %v534
      %v617 = vsel %vm601, %v391, %v536
      %v618 = vsel %vm601, %v394, %v538
      %v619 = vsel %vm601, %v397, %v540
      %v620 = vsel %vm601, %v400, %v542
      %v621 = vsel %vm601, %v403, %v544
      %v622 = vsel %vm601, %v406, %v546
      %v623 = vsel %vm601, %v409, %v548
      %v624 = vsel %vm601, %v412, %v550
      %v625 = vsel %vm601, %v415, %v552
      %v626 = vsel %vm601, %v418, %v554
      %v627 = vsel %vm601, %v421, %v556
      %v628 = vsel %vm601, %v424, %v558
      %v629 = vsel %vm601, %v427, %v560
      %v630 = vsel %vm601, %v430, %v562
      %v631 = vsel %vm601, %v433, %v564
      %v632 = vsel %vm601, %v436, %v566
      %v633 = vsel %vm601, %v439, %v568
      %vm634 = vcmask 64512
      %635 = vst.msk [vmem:[%s190] sm:$0xff] %vm634, %v602
      %636 = vst.msk [vmem:[%s190 + $0x8] sm:$0xff] %vm634, %v603
      %637 = vst.msk [vmem:[%s190 + $0x10] sm:$0xff] %vm634, %v604
      %638 = vst.msk [vmem:[%s190 + $0x18] sm:$0xff] %vm634, %v605
      %639 = vst.msk [vmem:[%s190 + $0x20] sm:$0xff] %vm634, %v606
      %640 = vst.msk [vmem:[%s190 + $0x28] sm:$0xff] %vm634, %v607
      %641 = vst.msk [vmem:[%s190 + $0x30] sm:$0xff] %vm634, %v608
      %642 = vst.msk [vmem:[%s190 + $0x38] sm:$0xff] %vm634, %v609
      %643 = vst.msk [vmem:[%s190 + $0x40] sm:$0xff] %vm634, %v610
      %644 = vst.msk [vmem:[%s190 + $0x48] sm:$0xff] %vm634, %v611
      %645 = vst.msk [vmem:[%s190 + $0x50] sm:$0xff] %vm634, %v612
      %646 = vst.msk [vmem:[%s190 + $0x58] sm:$0xff] %vm634, %v613
      %647 = vst.msk [vmem:[%s190 + $0x60] sm:$0xff] %vm634, %v614
      %648 = vst.msk [vmem:[%s190 + $0x68] sm:$0xff] %vm634, %v615
      %649 = vst.msk [vmem:[%s190 + $0x70] sm:$0xff] %vm634, %v616
      %650 = vst.msk [vmem:[%s190 + $0x78] sm:$0xff] %vm634, %v617
      %651 = vst.msk [vmem:[%s190 + $0x80] sm:$0xff] %vm634, %v618
      %652 = vst.msk [vmem:[%s190 + $0x88] sm:$0xff] %vm634, %v619
      %653 = vst.msk [vmem:[%s190 + $0x90] sm:$0xff] %vm634, %v620
      %654 = vst.msk [vmem:[%s190 + $0x98] sm:$0xff] %vm634, %v621
      %655 = vst.msk [vmem:[%s190 + $0xa0] sm:$0xff] %vm634, %v622
      %656 = vst.msk [vmem:[%s190 + $0xa8] sm:$0xff] %vm634, %v623
      %657 = vst.msk [vmem:[%s190 + $0xb0] sm:$0xff] %vm634, %v624
      %658 = vst.msk [vmem:[%s190 + $0xb8] sm:$0xff] %vm634, %v625
      %659 = vst.msk [vmem:[%s190 + $0xc0] sm:$0xff] %vm634, %v626
      %660 = vst.msk [vmem:[%s190 + $0xc8] sm:$0xff] %vm634, %v627
      %661 = vst.msk [vmem:[%s190 + $0xd0] sm:$0xff] %vm634, %v628
      %662 = vst.msk [vmem:[%s190 + $0xd8] sm:$0xff] %vm634, %v629
      %663 = vst.msk [vmem:[%s190 + $0xe0] sm:$0xff] %vm634, %v630
      %664 = vst.msk [vmem:[%s190 + $0xe8] sm:$0xff] %vm634, %v631
      %665 = vst.msk [vmem:[%s190 + $0xf0] sm:$0xff] %vm634, %v632
      %666 = vst.msk [vmem:[%s190 + $0xf8] sm:$0xff] %vm634, %v633
      %p667 = scmp.lt.s32.totalorder %s14, 1
      %s668 = scalar_select %p667, %s14, 1
      %s669 = smul.addr %s668, 32
      %s670 = smul.addr %s669, 8
      %s671 = scalar_lea.vmem %s3, %s670
      // Predicated region
      $region33: #{upsample_forward.4} parent=31 // pred_check
        %p672 = pneg %p105
      $region34: #{upsample_forward.4} parent=31 // pred_check_branch
        %674 = sbr.rel (%p672) target = $region36
      $region35: #{upsample_forward.4} parent=31 // pred_region
        _
      $region36: #{upsample_forward.4} parent=31 // pred_fallthru
        _
    $region32: #{upsample_forward.4} parent=5 // pred_fallthru
      _
    %p675 = scmp.le.s32.totalorder 2, %s9
    // Predicated region
    $region37: #{upsample_forward.4} parent=5 // pred_check
      %p676 = pneg %p675
    $region38: #{upsample_forward.4} parent=5 // pred_check_branch
      %678 = sbr.rel (%p676) target = $region40
    $region39: #{upsample_forward.4} parent=5 // pred_region
      %s679 = ssub.s32 %s9, 2
      // Predicated region
      $region41: #{upsample_forward.4} parent=39 // pred_check
        %p680 = pneg %p111
      $region42: #{upsample_forward.4} parent=39 // pred_check_branch
        %682 = sbr.rel (%p680) target = $region44
      $region43: #{upsample_forward.4} parent=39 // pred_region
        %p683 = scmp.lt.s32.totalorder %s15, 1
        %s684 = scalar_select %p683, %s15, 1
        %s685 = smul.addr %s684, 32
        %s686 = smul.addr %s685, 8
        %s687 = scalar_lea.vmem %s3, %s686
      $region44: #{upsample_forward.4} parent=39 // pred_fallthru
        _
    $region40: #{upsample_forward.4} parent=5 // pred_fallthru
      _
  $region6: #{upsample_forward.4} parent=0 // loop_footer
    %s13 = sadd.s32 1, %s9
  $region7: #{upsample_forward.4} parent=0 // loop_footer_branch
    %8 = sbr.rel target = $region3
  $region8: #{upsample_forward.4} parent=0 // loop_exit
    _

// kernel: upsample_forward.5
$region0: #{upsample_forward.5}
  #allocation0 [shape = 'u32[]', space=smem, size = 0x4, offset = 0x4, fixed_abs, tag = 'smem constant byte address 0x4 - core index']
  #allocation1 [shape = 'u32[72,128]{1,0:T(1,128)}', space=vmem, size = 0x9000, scoped, tag = 'internal scratch']
  #allocation2 [shape = 'f32[18,18,8]{2,1,0:T(8,128)}', space=vmem, size = 0x36000, scoped, tag = 'scratch operand']
  %s0 = inlined_call_operand.vmem [shape: f32[2,16,16,8], index: 0, kind: input, shape index: {}]
  %s1 = inlined_call_operand.vmem [shape: bf16[72,4], index: 1, kind: input, shape index: {}]
  %s2 = inlined_call_operand.vmem [shape: f32[1,4], index: 2, kind: input, shape index: {}]
  %s3 = inlined_call_operand.vmem [shape: f32[1,8], index: 3, kind: input, shape index: {}]
  %s4 = inlined_call_operand.vmem [shape: f32[1,8], index: 4, kind: input, shape index: {}]
  %s5 = inlined_call_operand.vmem [shape: f32[2,16,16,4], index: 5, kind: output, shape index: {0}]
  %s6 = inlined_call_operand.vmem [shape: f32[2,2,2,4], index: 6, kind: output, shape index: {1}]
  %7 = xla_tuple %s5, %s6
  %s8 = sld [smem:[#allocation0]]
  $region65: #{upsample_forward.5} parent=0
    _
  %s10 = ssub.s32 1, %s8
  %s11 = scalar_select 0, %s10, %s8
  loop: start=0, step=1, limit=6
  $region2: #{upsample_forward.5} parent=0 // loop_pre_header
    _
  $region3: #{upsample_forward.5} parent=0 // loop_header
    %s13 = sphi 0, %s17
    %p14 = scmp.ge.s32.totalorder %s13, 6
    %s20 = sphi 0, %s32
    %s21 = sphi 0, %s28
    %s22 = sphi 0, %s20
    %s23 = sphi 0, %s21
    %s24 = sphi 0, %s22
    %s25 = sphi 0, %s23
    %s35 = sphi 0, %s37
    %s38 = sphi 0, %s35
    %s39 = sphi 0, %s38
    %s55 = sphi 0, %s39
    %s59 = sphi 0, %s59
    %s61 = sphi 0, %s59
    %s62 = sphi 0, %s61
    %s76 = sphi 0, %s62
    %s80 = sphi 0, %s80
    %s82 = sphi 0, %s80
    %s83 = sphi 0, %s82
    %s97 = sphi 0, %s83
    %s101 = sphi 0, %s101
    %s103 = sphi 0, %s101
    %s104 = sphi 0, %s103
    %s118 = sphi 0, %s104
    %s122 = sphi 0, %s122
    %s124 = sphi 0, %s122
    %s125 = sphi 0, %s124
    %s139 = sphi 0, %s125
    %s147 = sphi 0, %s149
    %s150 = sphi 0, %s147
    %s151 = sphi 0, %s150
    %s167 = sphi 0, %s151
    %s175 = sphi 0, %s177
    %s178 = sphi 0, %s175
    %s179 = sphi 0, %s178
    %s195 = sphi 0, %s179
  $region4: #{upsample_forward.5} parent=0 // loop_header_branch
    %16 = sbr.rel (%p14) target = $region8
  $region5: #{upsample_forward.5} parent=0 // loop_body
    %s18 = ssub.s32 %s13, 1
    %s19 = ssub.s32 %s13, 2
    %s26 = sadd.s32 1, %s21
    %p27 = scmp.ge.s32.totalorder %s26, 2
    %s28 = scalar_select %p27, 0, %s26
    %s29 = sadd.s32 1, %s20
    %s30 = scalar_select %p27, %s29, %s20
    %p31 = scmp.ge.s32.totalorder %s30, 2
    %s32 = scalar_select %p31, 0, %s30
    %s33 = ssub.s32 %s20, %s32
    %p34 = scmp.eq.s32.totalorder %s33, 0
    %s36 = sadd.s32 %s35, 1
    %s37 = scalar_select %p34, %s35, %s36
    %p40 = pneg %p34
    %p41 = scmp.eq.s32.totalorder %s13, 3
    %p42 = por %p40, %p41
    %p43 = scmp.ne.s32.totalorder %s35, %s38
    %p44 = scmp.eq.s32.totalorder %s13, 0
    %p45 = por %p43, %p44
    %p46 = scmp.ne.s32.totalorder %s35, %s38
    %p47 = scmp.eq.s32.totalorder %s18, 3
    %p48 = por %p46, %p47
    %p49 = scmp.ne.s32.totalorder %s38, %s39
    %p50 = scmp.eq.s32.totalorder %s18, 0
    %p51 = por %p49, %p50
    %p52 = scmp.ne.s32.totalorder %s38, %s39
    %p53 = scmp.eq.s32.totalorder %s19, 3
    %p54 = por %p52, %p53
    %p56 = scmp.ne.s32.totalorder %s39, %s55
    %p57 = scmp.eq.s32.totalorder %s19, 0
    %p58 = por %p56, %p57
    %s60 = sadd.s32 %s59, 1
    %p63 = scmp.eq.s32.totalorder %s13, 3
    %p64 = scmp.ne.s32.totalorder %s59, %s61
    %p65 = scmp.eq.s32.totalorder %s13, 0
    %p66 = por %p64, %p65
    %p67 = scmp.ne.s32.totalorder %s59, %s61
    %p68 = scmp.eq.s32.totalorder %s18, 3
    %p69 = por %p67, %p68
    %p70 = scmp.ne.s32.totalorder %s61, %s62
    %p71 = scmp.eq.s32.totalorder %s18, 0
    %p72 = por %p70, %p71
    %p73 = scmp.ne.s32.totalorder %s61, %s62
    %p74 = scmp.eq.s32.totalorder %s19, 3
    %p75 = por %p73, %p74
    %p77 = scmp.ne.s32.totalorder %s62, %s76
    %p78 = scmp.eq.s32.totalorder %s19, 0
    %p79 = por %p77, %p78
    %s81 = sadd.s32 %s80, 1
    %p84 = scmp.eq.s32.totalorder %s13, 3
    %p85 = scmp.ne.s32.totalorder %s80, %s82
    %p86 = scmp.eq.s32.totalorder %s13, 0
    %p87 = por %p85, %p86
    %p88 = scmp.ne.s32.totalorder %s80, %s82
    %p89 = scmp.eq.s32.totalorder %s18, 3
    %p90 = por %p88, %p89
    %p91 = scmp.ne.s32.totalorder %s82, %s83
    %p92 = scmp.eq.s32.totalorder %s18, 0
    %p93 = por %p91, %p92
    %p94 = scmp.ne.s32.totalorder %s82, %s83
    %p95 = scmp.eq.s32.totalorder %s19, 3
    %p96 = por %p94, %p95
    %p98 = scmp.ne.s32.totalorder %s83, %s97
    %p99 = scmp.eq.s32.totalorder %s19, 0
    %p100 = por %p98, %p99
    %s102 = sadd.s32 %s101, 1
    %p105 = scmp.eq.s32.totalorder %s13, 3
    %p106 = scmp.ne.s32.totalorder %s101, %s103
    %p107 = scmp.eq.s32.totalorder %s13, 0
    %p108 = por %p106, %p107
    %p109 = scmp.ne.s32.totalorder %s101, %s103
    %p110 = scmp.eq.s32.totalorder %s18, 3
    %p111 = por %p109, %p110
    %p112 = scmp.ne.s32.totalorder %s103, %s104
    %p113 = scmp.eq.s32.totalorder %s18, 0
    %p114 = por %p112, %p113
    %p115 = scmp.ne.s32.totalorder %s103, %s104
    %p116 = scmp.eq.s32.totalorder %s19, 3
    %p117 = por %p115, %p116
    %p119 = scmp.ne.s32.totalorder %s104, %s118
    %p120 = scmp.eq.s32.totalorder %s19, 0
    %p121 = por %p119, %p120
    %s123 = sadd.s32 %s122, 1
    %p126 = scmp.eq.s32.totalorder %s13, 3
    %p127 = scmp.ne.s32.totalorder %s122, %s124
    %p128 = scmp.eq.s32.totalorder %s13, 0
    %p129 = por %p127, %p128
    %p130 = scmp.ne.s32.totalorder %s122, %s124
    %p131 = scmp.eq.s32.totalorder %s18, 3
    %p132 = por %p130, %p131
    %p133 = scmp.ne.s32.totalorder %s124, %s125
    %p134 = scmp.eq.s32.totalorder %s18, 0
    %p135 = por %p133, %p134
    %p136 = scmp.ne.s32.totalorder %s124, %s125
    %p137 = scmp.eq.s32.totalorder %s19, 3
    %p138 = por %p136, %p137
    %p140 = scmp.ne.s32.totalorder %s125, %s139
    %p141 = scmp.eq.s32.totalorder %s19, 0
    %p142 = por %p140, %p141
    %s143 = ssub.s32 %s20, %s32
    %s144 = ssub.s32 %s21, %s28
    %s145 = sor.u32 %s143, %s144
    %p146 = scmp.eq.s32.totalorder %s145, 0
    %s148 = sadd.s32 %s147, 1
    %s149 = scalar_select %p146, %s147, %s148
    %p152 = pneg %p146
    %p153 = scmp.eq.s32.totalorder %s13, 3
    %p154 = por %p152, %p153
    %p155 = scmp.ne.s32.totalorder %s147, %s150
    %p156 = scmp.eq.s32.totalorder %s13, 0
    %p157 = por %p155, %p156
    %p158 = scmp.ne.s32.totalorder %s147, %s150
    %p159 = scmp.eq.s32.totalorder %s18, 3
    %p160 = por %p158, %p159
    %p161 = scmp.ne.s32.totalorder %s150, %s151
    %p162 = scmp.eq.s32.totalorder %s18, 0
    %p163 = por %p161, %p162
    %p164 = scmp.ne.s32.totalorder %s150, %s151
    %p165 = scmp.eq.s32.totalorder %s19, 3
    %p166 = por %p164, %p165
    %p168 = scmp.ne.s32.totalorder %s151, %s167
    %p169 = scmp.eq.s32.totalorder %s19, 0
    %p170 = por %p168, %p169
    %s171 = ssub.s32 %s20, %s32
    %s172 = ssub.s32 %s21, %s28
    %s173 = sor.u32 %s171, %s172
    %p174 = scmp.eq.s32.totalorder %s173, 0
    %s176 = sadd.s32 %s175, 1
    %s177 = scalar_select %p174, %s175, %s176
    %p180 = pneg %p174
    %p181 = scmp.eq.s32.totalorder %s13, 3
    %p182 = por %p180, %p181
    %p183 = scmp.ne.s32.totalorder %s175, %s178
    %p184 = scmp.eq.s32.totalorder %s13, 0
    %p185 = por %p183, %p184
    %p186 = scmp.ne.s32.totalorder %s175, %s178
    %p187 = scmp.eq.s32.totalorder %s18, 3
    %p188 = por %p186, %p187
    %p189 = scmp.ne.s32.totalorder %s178, %s179
    %p190 = scmp.eq.s32.totalorder %s18, 0
    %p191 = por %p189, %p190
    %p192 = scmp.ne.s32.totalorder %s178, %s179
    %p193 = scmp.eq.s32.totalorder %s19, 3
    %p194 = por %p192, %p193
    %p196 = scmp.ne.s32.totalorder %s179, %s195
    %p197 = scmp.eq.s32.totalorder %s19, 0
    %p198 = por %p196, %p197
    %p199 = scmp.le.s32.totalorder 1, %s13
    %p200 = scmp.lt.s32.totalorder %s13, 5
    %p201 = pnand %p199, %p200
    %p202 = pneg %p201
    // Predicated region
    $region9: #{upsample_forward.5} parent=5 // pred_check
      _
    $region10: #{upsample_forward.5} parent=5 // pred_check_branch
      %204 = sbr.rel (%p201) target = $region12
    $region11: #{upsample_forward.5} parent=5 // pred_region
      %s205 = ssub.s32 %s13, 1
      // Predicated region
      $region13: #{upsample_forward.5} parent=11 // pred_check
        %p206 = pneg %p72
      $region14: #{upsample_forward.5} parent=11 // pred_check_branch
        %208 = sbr.rel (%p206) target = $region16
      $region15: #{upsample_forward.5} parent=11 // pred_region
        _
      $region16: #{upsample_forward.5} parent=11 // pred_fallthru
        _
      // Predicated region
      $region17: #{upsample_forward.5} parent=11 // pred_check
        %p209 = pneg %p93
      $region18: #{upsample_forward.5} parent=11 // pred_check_branch
        %211 = sbr.rel (%p209) target = $region20
      $region19: #{upsample_forward.5} parent=11 // pred_region
        _
      $region20: #{upsample_forward.5} parent=11 // pred_fallthru
        _
      // Predicated region
      $region21: #{upsample_forward.5} parent=11 // pred_check
        %p212 = pneg %p114
      $region22: #{upsample_forward.5} parent=11 // pred_check_branch
        %214 = sbr.rel (%p212) target = $region24
      $region23: #{upsample_forward.5} parent=11 // pred_region
        _
      $region24: #{upsample_forward.5} parent=11 // pred_fallthru
        _
      // Predicated region
      $region25: #{upsample_forward.5} parent=11 // pred_check
        %p215 = pneg %p135
      $region26: #{upsample_forward.5} parent=11 // pred_check_branch
        %217 = sbr.rel (%p215) target = $region28
      $region27: #{upsample_forward.5} parent=11 // pred_region
        _
      $region28: #{upsample_forward.5} parent=11 // pred_fallthru
        _
    $region12: #{upsample_forward.5} parent=5 // pred_fallthru
      _
    %p218 = scmp.lt.s32.totalorder %s13, 4
    // Predicated region
    $region29: #{upsample_forward.5} parent=5 // pred_check
      %p219 = pneg %p218
    $region30: #{upsample_forward.5} parent=5 // pred_check_branch
      %221 = sbr.rel (%p219) target = $region32
    $region31: #{upsample_forward.5} parent=5 // pred_region
      // Predicated region
      $region33: #{upsample_forward.5} parent=31 // pred_check
        %p222 = pneg %p45
      $region34: #{upsample_forward.5} parent=31 // pred_check_branch
        %224 = sbr.rel (%p222) target = $region36
      $region35: #{upsample_forward.5} parent=31 // pred_region
        %p225 = scmp.lt.s32.totalorder %s20, 1
        %s226 = scalar_select %p225, %s20, 1
        %s227 = smul.addr %s226, 32
        %s228 = smul.addr %s227, 8
        %s229 = scalar_lea.vmem %s0, %s228
      $region36: #{upsample_forward.5} parent=31 // pred_fallthru
        _
    $region32: #{upsample_forward.5} parent=5 // pred_fallthru
      _
    %p230 = scmp.le.s32.totalorder 1, %s13
    %p231 = scmp.lt.s32.totalorder %s13, 5
    %p232 = pnand %p230, %p231
    %p233 = pneg %p232
    // Predicated region
    $region37: #{upsample_forward.5} parent=5 // pred_check
      _
    $region38: #{upsample_forward.5} parent=5 // pred_check_branch
      %235 = sbr.rel (%p232) target = $region40
    $region39: #{upsample_forward.5} parent=5 // pred_region
      %s236 = ssub.s32 %s13, 1
      %p237 = scmp.lt.s32.totalorder %s22, 1
      %s238 = scalar_select %p237, %s22, 1
      %s239 = smul.addr %s238, 32
      %s240 = smul.addr %s239, 8
      %s241 = scalar_lea.vmem %s0, %s240
      %p242 = pneg %p51
      %p243 = pneg %p48
      %p244 = pneg %p72
      %p245 = pneg %p69
      %p246 = pneg %p93
      %p247 = pneg %p90
      %p248 = pneg %p114
      %p249 = pneg %p111
      %p250 = pneg %p135
      %p251 = pneg %p132
      %p252 = pneg %p163
      %p253 = pneg %p160
      %s254 = smul.u32 8, %s23
      %p255 = scmp.lt.s32.totalorder %s22, 1
      %s256 = scalar_select %p255, %s22, 1
      %p257 = scmp.lt.s32.totalorder %s254, 15
      %s258 = scalar_select %p257, %s254, 15
      %s259 = smul.addr %s258, 2
      %s260 = smul.addr %s256, 32
      %s261 = sadd.s32 %s259, %s260
      %s262 = smul.addr %s261, 8
      %s263 = scalar_lea.vmem %s5, %s262
      %p264 = pneg %p191
      %p265 = pneg %p188
      %p266 = scmp.lt.s32.totalorder %s22, 1
      %s267 = scalar_select %p266, %s22, 1
      %p268 = scmp.lt.s32.totalorder %s23, 1
      %s269 = scalar_select %p268, %s23, 1
      %s270 = smul.addr %s267, 2
      %s271 = sadd.s32 %s269, %s270
      %s272 = smul.addr %s271, 2
      %s273 = scalar_lea.vmem %s6, %s272
      %p274 = scmp.lt.s32.totalorder %s22, 1
      %s275 = scalar_select %p274, %s22, 1
      %s276 = smul.addr %s275, 32
      %s277 = smul.addr %s276, 8
      %s278 = scalar_lea.vmem %s0, %s277
      %s279 = smul.u32 8, %s23
      %p280 = scmp.lt.s32.totalorder %s22, 1
      %s281 = scalar_select %p280, %s22, 1
      %p282 = scmp.lt.s32.totalorder %s279, 15
      %s283 = scalar_select %p282, %s279, 15
      %s284 = smul.addr %s283, 2
      %s285 = smul.addr %s281, 32
      %s286 = sadd.s32 %s284, %s285
      %s287 = smul.addr %s286, 8
      %s288 = scalar_lea.vmem %s5, %s287
      %s289 = smul.u32 8, %s23
      %p290 = scmp.lt.s32.totalorder %s22, 1
      %s291 = scalar_select %p290, %s22, 1
      %p292 = scmp.lt.s32.totalorder %s23, 1
      %s293 = scalar_select %p292, %s23, 1
      %s294 = smul.addr %s291, 2
      %s295 = sadd.s32 %s293, %s294
      %s296 = smul.addr %s295, 2
      %s297 = scalar_lea.vmem %s6, %s296
      %p299 = scmp.eq.s32.totalorder %s23, 0
      // Predicated region
      $region41: #{upsample_forward.5} parent=39 // pred_check
        %p300 = pneg %p299
      $region42: #{upsample_forward.5} parent=39 // pred_check_branch
        %302 = sbr.rel (%p300) target = $region44
      $region43: #{upsample_forward.5} parent=39 // pred_region
        %v303 = vld [vmem:[%s278] sm:$0xff]
        %v304 = vld [vmem:[%s278 + $0x8] sm:$0xff]
        %v305 = vld [vmem:[%s278 + $0x10] sm:$0xff]
        %v306 = vld [vmem:[%s278 + $0x18] sm:$0xff]
        %v307 = vld [vmem:[%s278 + $0x20] sm:$0xff]
        %v308 = vld [vmem:[%s278 + $0x28] sm:$0xff]
        %v309 = vld [vmem:[%s278 + $0x30] sm:$0xff]
        %v310 = vld [vmem:[%s278 + $0x38] sm:$0xff]
        %v311 = vld [vmem:[%s278 + $0x40] sm:$0xff]
        %v312 = vld [vmem:[%s278 + $0x48] sm:$0xff]
        %v313 = vld [vmem:[%s278 + $0x50] sm:$0xff]
        %v314 = vld [vmem:[%s278 + $0x58] sm:$0xff]
        %v315 = vld [vmem:[%s278 + $0x60] sm:$0xff]
        %v316 = vld [vmem:[%s278 + $0x68] sm:$0xff]
        %v317 = vld [vmem:[%s278 + $0x70] sm:$0xff]
        %v318 = vld [vmem:[%s278 + $0x78] sm:$0xff]
        %v319 = vld [vmem:[%s278 + $0x80] sm:$0xff]
        %v320 = vld [vmem:[%s278 + $0x88] sm:$0xff]
        %v321 = vld [vmem:[%s278 + $0x90] sm:$0xff]
        %v322 = vld [vmem:[%s278 + $0x98] sm:$0xff]
        %v323 = vld [vmem:[%s278 + $0xa0] sm:$0xff]
        %v324 = vld [vmem:[%s278 + $0xa8] sm:$0xff]
        %v325 = vld [vmem:[%s278 + $0xb0] sm:$0xff]
        %v326 = vld [vmem:[%s278 + $0xb8] sm:$0xff]
        %v327 = vld [vmem:[%s278 + $0xc0] sm:$0xff]
        %v328 = vld [vmem:[%s278 + $0xc8] sm:$0xff]
        %v329 = vld [vmem:[%s278 + $0xd0] sm:$0xff]
        %v330 = vld [vmem:[%s278 + $0xd8] sm:$0xff]
        %v331 = vld [vmem:[%s278 + $0xe0] sm:$0xff]
        %v332 = vld [vmem:[%s278 + $0xe8] sm:$0xff]
        %v333 = vld [vmem:[%s278 + $0xf0] sm:$0xff]
        %v334 = vld [vmem:[%s278 + $0xf8] sm:$0xff]
        %vm335 = vcmask 64512
        %336 = vst.msk [vmem:[#allocation2] sm:$0xff] %vm335, 0.0
        %337 = vst.msk [vmem:[#allocation2 + $0x8] sm:$0xff] %vm335, 0.0
        %vm338 = vcmask 58368
        %339 = vst.msk [vmem:[#allocation2 + $0x10] sm:$0x3] %vm338, 0.0
        %340 = vst.msk [vmem:[#allocation2 + $0x18] sm:$0xff] %vm335, 0.0
        %341 = vst.msk [vmem:[#allocation2 + $0x20] sm:$0xff] %vm335, 0.0
        %342 = vst.msk [vmem:[#allocation2 + $0x28] sm:$0x3] %vm338, 0.0
        %343 = vst.msk [vmem:[#allocation2 + $0x30] sm:$0xff] %vm335, 0.0
        %344 = vst.msk [vmem:[#allocation2 + $0x38] sm:$0xff] %vm335, 0.0
        %345 = vst.msk [vmem:[#allocation2 + $0x40] sm:$0x3] %vm338, 0.0
        %346 = vst.msk [vmem:[#allocation2 + $0x48] sm:$0xff] %vm335, 0.0
        %347 = vst.msk [vmem:[#allocation2 + $0x50] sm:$0xff] %vm335, 0.0
        %348 = vst.msk [vmem:[#allocation2 + $0x58] sm:$0x3] %vm338, 0.0
        %349 = vst.msk [vmem:[#allocation2 + $0x60] sm:$0xff] %vm335, 0.0
        %350 = vst.msk [vmem:[#allocation2 + $0x68] sm:$0xff] %vm335, 0.0
        %351 = vst.msk [vmem:[#allocation2 + $0x70] sm:$0x3] %vm338, 0.0
        %352 = vst.msk [vmem:[#allocation2 + $0x78] sm:$0xff] %vm335, 0.0
        %353 = vst.msk [vmem:[#allocation2 + $0x80] sm:$0xff] %vm335, 0.0
        %354 = vst.msk [vmem:[#allocation2 + $0x88] sm:$0x3] %vm338, 0.0
        %355 = vst.msk [vmem:[#allocation2 + $0x90] sm:$0xff] %vm335, 0.0
        %356 = vst.msk [vmem:[#allocation2 + $0x98] sm:$0xff] %vm335, 0.0
        %357 = vst.msk [vmem:[#allocation2 + $0xa0] sm:$0x3] %vm338, 0.0
        %358 = vst.msk [vmem:[#allocation2 + $0xa8] sm:$0xff] %vm335, 0.0
        %359 = vst.msk [vmem:[#allocation2 + $0xb0] sm:$0xff] %vm335, 0.0
        %360 = vst.msk [vmem:[#allocation2 + $0xb8] sm:$0x3] %vm338, 0.0
        %361 = vst.msk [vmem:[#allocation2 + $0xc0] sm:$0xff] %vm335, 0.0
        %362 = vst.msk [vmem:[#allocation2 + $0xc8] sm:$0xff] %vm335, 0.0
        %363 = vst.msk [vmem:[#allocation2 + $0xd0] sm:$0x3] %vm338, 0.0
        %364 = vst.msk [vmem:[#allocation2 + $0xd8] sm:$0xff] %vm335, 0.0
        %365 = vst.msk [vmem:[#allocation2 + $0xe0] sm:$0xff] %vm335, 0.0
        %366 = vst.msk [vmem:[#allocation2 + $0xe8] sm:$0x3] %vm338, 0.0
        %367 = vst.msk [vmem:[#allocation2 + $0xf0] sm:$0xff] %vm335, 0.0
        %368 = vst.msk [vmem:[#allocation2 + $0xf8] sm:$0xff] %vm335, 0.0
        %369 = vst.msk [vmem:[#allocation2 + $0x100] sm:$0x3] %vm338, 0.0
        %370 = vst.msk [vmem:[#allocation2 + $0x108] sm:$0xff] %vm335, 0.0
        %371 = vst.msk [vmem:[#allocation2 + $0x110] sm:$0xff] %vm335, 0.0
        %372 = vst.msk [vmem:[#allocation2 + $0x118] sm:$0x3] %vm338, 0.0
        %373 = vst.msk [vmem:[#allocation2 + $0x120] sm:$0xff] %vm335, 0.0
        %374 = vst.msk [vmem:[#allocation2 + $0x128] sm:$0xff] %vm335, 0.0
        %375 = vst.msk [vmem:[#allocation2 + $0x130] sm:$0x3] %vm338, 0.0
        %376 = vst.msk [vmem:[#allocation2 + $0x138] sm:$0xff] %vm335, 0.0
        %377 = vst.msk [vmem:[#allocation2 + $0x140] sm:$0xff] %vm335, 0.0
        %378 = vst.msk [vmem:[#allocation2 + $0x148] sm:$0x3] %vm338, 0.0
        %379 = vst.msk [vmem:[#allocation2 + $0x150] sm:$0xff] %vm335, 0.0
        %380 = vst.msk [vmem:[#allocation2 + $0x158] sm:$0xff] %vm335, 0.0
        %381 = vst.msk [vmem:[#allocation2 + $0x160] sm:$0x3] %vm338, 0.0
        %382 = vst.msk [vmem:[#allocation2 + $0x168] sm:$0xff] %vm335, 0.0
        %383 = vst.msk [vmem:[#allocation2 + $0x170] sm:$0xff] %vm335, 0.0
        %384 = vst.msk [vmem:[#allocation2 + $0x178] sm:$0x3] %vm338, 0.0
        %385 = vst.msk [vmem:[#allocation2 + $0x180] sm:$0xff] %vm335, 0.0
        %386 = vst.msk [vmem:[#allocation2 + $0x188] sm:$0xff] %vm335, 0.0
        %387 = vst.msk [vmem:[#allocation2 + $0x190] sm:$0x3] %vm338, 0.0
        %388 = vst.msk [vmem:[#allocation2 + $0x198] sm:$0xff] %vm335, 0.0
        %389 = vst.msk [vmem:[#allocation2 + $0x1a0] sm:$0xff] %vm335, 0.0
        %390 = vst.msk [vmem:[#allocation2 + $0x1a8] sm:$0x3] %vm338, 0.0
        %s391 = scalar_lea.vmem [#allocation2], 24
        %392 = vst.msk [vmem:[%s391 + $0x1] sm:$0xff] %vm335, %v303
        %393 = vst.msk [vmem:[%s391 + $0x9] sm:$0xff] %vm335, %v304
        %394 = vst.msk [vmem:[%s391 + $0x19] sm:$0xff] %vm335, %v305
        %395 = vst.msk [vmem:[%s391 + $0x21] sm:$0xff] %vm335, %v306
        %396 = vst.msk [vmem:[%s391 + $0x31] sm:$0xff] %vm335, %v307
        %397 = vst.msk [vmem:[%s391 + $0x39] sm:$0xff] %vm335, %v308
        %398 = vst.msk [vmem:[%s391 + $0x49] sm:$0xff] %vm335, %v309
        %399 = vst.msk [vmem:[%s391 + $0x51] sm:$0xff] %vm335, %v310
        %400 = vst.msk [vmem:[%s391 + $0x61] sm:$0xff] %vm335, %v311
        %401 = vst.msk [vmem:[%s391 + $0x69] sm:$0xff] %vm335, %v312
        %402 = vst.msk [vmem:[%s391 + $0x79] sm:$0xff] %vm335, %v313
        %403 = vst.msk [vmem:[%s391 + $0x81] sm:$0xff] %vm335, %v314
        %404 = vst.msk [vmem:[%s391 + $0x91] sm:$0xff] %vm335, %v315
        %405 = vst.msk [vmem:[%s391 + $0x99] sm:$0xff] %vm335, %v316
        %406 = vst.msk [vmem:[%s391 + $0xa9] sm:$0xff] %vm335, %v317
        %407 = vst.msk [vmem:[%s391 + $0xb1] sm:$0xff] %vm335, %v318
        %408 = vst.msk [vmem:[%s391 + $0xc1] sm:$0xff] %vm335, %v319
        %409 = vst.msk [vmem:[%s391 + $0xc9] sm:$0xff] %vm335, %v320
        %410 = vst.msk [vmem:[%s391 + $0xd9] sm:$0xff] %vm335, %v321
        %411 = vst.msk [vmem:[%s391 + $0xe1] sm:$0xff] %vm335, %v322
        %412 = vst.msk [vmem:[%s391 + $0xf1] sm:$0xff] %vm335, %v323
        %413 = vst.msk [vmem:[%s391 + $0xf9] sm:$0xff] %vm335, %v324
        %414 = vst.msk [vmem:[%s391 + $0x109] sm:$0xff] %vm335, %v325
        %415 = vst.msk [vmem:[%s391 + $0x111] sm:$0xff] %vm335, %v326
        %416 = vst.msk [vmem:[%s391 + $0x121] sm:$0xff] %vm335, %v327
        %417 = vst.msk [vmem:[%s391 + $0x129] sm:$0xff] %vm335, %v328
        %418 = vst.msk [vmem:[%s391 + $0x139] sm:$0xff] %vm335, %v329
        %419 = vst.msk [vmem:[%s391 + $0x141] sm:$0xff] %vm335, %v330
        %420 = vst.msk [vmem:[%s391 + $0x151] sm:$0xff] %vm335, %v331
        %421 = vst.msk [vmem:[%s391 + $0x159] sm:$0xff] %vm335, %v332
        %422 = vst.msk [vmem:[%s391 + $0x169] sm:$0xff] %vm335, %v333
        %423 = vst.msk [vmem:[%s391 + $0x171] sm:$0xff] %vm335, %v334
      $region44: #{upsample_forward.5} parent=39 // pred_fallthru
        _
      %s424 = smul.u32 %s23, 8
      %s425 = smul.u32 %s424, 24
      %s426 = scalar_lea.vmem [#allocation2], %s425
      %v427 = vld [vmem:[%s426] sm:$0xff]
      %v428 = vld [vmem:[%s426 + $0x8] sm:$0xff]
      %v429 = vld [vmem:[%s426 + $0x10] sm:$0x3]
      %v430 = vld [vmem:[%s426 + $0x18] sm:$0xff]
      %v431 = vld [vmem:[%s426 + $0x20] sm:$0xff]
      %v432 = vld [vmem:[%s426 + $0x28] sm:$0x3]
      %v433 = vld [vmem:[%s426 + $0x30] sm:$0xff]
      %v434 = vld [vmem:[%s426 + $0x38] sm:$0xff]
      %v435 = vld [vmem:[%s426 + $0x40] sm:$0x3]
      %v436 = vld [vmem:[%s426 + $0x48] sm:$0xff]
      %v437 = vld [vmem:[%s426 + $0x50] sm:$0xff]
      %v438 = vld [vmem:[%s426 + $0x58] sm:$0x3]
      %v439 = vld [vmem:[%s426 + $0x60] sm:$0xff]
      %v440 = vld [vmem:[%s426 + $0x68] sm:$0xff]
      %v441 = vld [vmem:[%s426 + $0x70] sm:$0x3]
      %v442 = vld [vmem:[%s426 + $0x78] sm:$0xff]
      %v443 = vld [vmem:[%s426 + $0x80] sm:$0xff]
      %v444 = vld [vmem:[%s426 + $0x88] sm:$0x3]
      %v445 = vld [vmem:[%s426 + $0x90] sm:$0xff]
      %v446 = vld [vmem:[%s426 + $0x98] sm:$0xff]
      %v447 = vld [vmem:[%s426 + $0xa0] sm:$0x3]
      %v448 = vld [vmem:[%s426 + $0xa8] sm:$0xff]
      %v449 = vld [vmem:[%s426 + $0xb0] sm:$0xff]
      %v450 = vld [vmem:[%s426 + $0xb8] sm:$0x3]
      %v451 = vld [vmem:[%s426 + $0xc0] sm:$0xff]
      %v452 = vld [vmem:[%s426 + $0xc8] sm:$0xff]
      %v453 = vld [vmem:[%s426 + $0xd0] sm:$0x3]
      %v454 = vld [vmem:[%s426 + $0xd8] sm:$0xff]
      %v455 = vld [vmem:[%s426 + $0xe0] sm:$0xff]
      %v456 = vld [vmem:[%s426 + $0xe8] sm:$0x3]
      %vm481 = vcmask 1046528
      %v482 = vrot.slane %v427, 1
      %v483 = vrot.slane %v428, 1
      %v484 = vsel %vm481, %v482, %v483
      %v485 = vrot.slane %v429, 1
      %v486 = vsel %vm481, %v483, %v485
      %v487 = vrot.slane %v430, 1
      %v488 = vrot.slane %v431, 1
      %v489 = vsel %vm481, %v487, %v488
      %v490 = vrot.slane %v432, 1
      %v491 = vsel %vm481, %v488, %v490
      %v492 = vrot.slane %v433, 1
      %v493 = vrot.slane %v434, 1
      %v494 = vsel %vm481, %v492, %v493
      %v495 = vrot.slane %v435, 1
      %v496 = vsel %vm481, %v493, %v495
      %v497 = vrot.slane %v436, 1
      %v498 = vrot.slane %v437, 1
      %v499 = vsel %vm481, %v497, %v498
      %v500 = vrot.slane %v438, 1
      %v501 = vsel %vm481, %v498, %v500
      %v502 = vrot.slane %v439, 1
      %v503 = vrot.slane %v440, 1
      %v504 = vsel %vm481, %v502, %v503
      %v505 = vrot.slane %v441, 1
      %v506 = vsel %vm481, %v503, %v505
      %v507 = vrot.slane %v442, 1
      %v508 = vrot.slane %v443, 1
      %v509 = vsel %vm481, %v507, %v508
      %v510 = vrot.slane %v444, 1
      %v511 = vsel %vm481, %v508, %v510
      %v512 = vrot.slane %v445, 1
      %v513 = vrot.slane %v446, 1
      %v514 = vsel %vm481, %v512, %v513
      %v515 = vrot.slane %v447, 1
      %v516 = vsel %vm481, %v513, %v515
      %v517 = vrot.slane %v448, 1
      %v518 = vrot.slane %v449, 1
      %v519 = vsel %vm481, %v517, %v518
      %v520 = vrot.slane %v450, 1
      %v521 = vsel %vm481, %v518, %v520
      %vm522 = vcmask 1045504
      %v523 = vrot.slane %v427, 2
      %v524 = vrot.slane %v428, 2
      %v525 = vsel %vm522, %v523, %v524
      %v526 = vrot.slane %v429, 2
      %v527 = vsel %vm522, %v524, %v526
      %v528 = vrot.slane %v430, 2
      %v529 = vrot.slane %v431, 2
      %v530 = vsel %vm522, %v528, %v529
      %v531 = vrot.slane %v432, 2
      %v532 = vsel %vm522, %v529, %v531
      %v533 = vrot.slane %v433, 2
      %v534 = vrot.slane %v434, 2
      %v535 = vsel %vm522, %v533, %v534
      %v536 = vrot.slane %v435, 2
      %v537 = vsel %vm522, %v534, %v536
      %v538 = vrot.slane %v436, 2
      %v539 = vrot.slane %v437, 2
      %v540 = vsel %vm522, %v538, %v539
      %v541 = vrot.slane %v438, 2
      %v542 = vsel %vm522, %v539, %v541
      %v543 = vrot.slane %v439, 2
      %v544 = vrot.slane %v440, 2
      %v545 = vsel %vm522, %v543, %v544
      %v546 = vrot.slane %v441, 2
      %v547 = vsel %vm522, %v544, %v546
      %v548 = vrot.slane %v442, 2
      %v549 = vrot.slane %v443, 2
      %v550 = vsel %vm522, %v548, %v549
      %v551 = vrot.slane %v444, 2
      %v552 = vsel %vm522, %v549, %v551
      %v553 = vrot.slane %v445, 2
      %v554 = vrot.slane %v446, 2
      %v555 = vsel %vm522, %v553, %v554
      %v556 = vrot.slane %v447, 2
      %v557 = vsel %vm522, %v554, %v556
      %v558 = vrot.slane %v448, 2
      %v559 = vrot.slane %v449, 2
      %v560 = vsel %vm522, %v558, %v559
      %v561 = vrot.slane %v450, 2
      %v562 = vsel %vm522, %v559, %v561
      %v566 = vrot.slane %v451, 1
      %v567 = vrot.slane %v452, 1
      %v568 = vsel %vm481, %v566, %v567
      %v569 = vrot.slane %v453, 1
      %v570 = vsel %vm481, %v567, %v569
      %v571 = vrot.slane %v451, 2
      %v572 = vrot.slane %v452, 2
      %v573 = vsel %vm522, %v571, %v572
      %v574 = vrot.slane %v453, 2
      %v575 = vsel %vm522, %v572, %v574
      %v579 = vrot.slane %v454, 1
      %v580 = vrot.slane %v455, 1
      %v581 = vsel %vm481, %v579, %v580
      %v582 = vrot.slane %v456, 1
      %v583 = vsel %vm481, %v580, %v582
      %v584 = vrot.slane %v454, 2
      %v585 = vrot.slane %v455, 2
      %v586 = vsel %vm522, %v584, %v585
      %v587 = vrot.slane %v456, 2
      %v588 = vsel %vm522, %v585, %v587
      %589 = vrot.lane.b32.xlu0 %v484, 8
      %v590 = vpop.permute.xlu0 %589
      %591 = vrot.lane.b32.xlu0 %v486, 8
      %v592 = vpop.permute.xlu0 %591
      %593 = vrot.lane.b32.xlu0 %v489, 8
      %v594 = vpop.permute.xlu0 %593
      %595 = vrot.lane.b32.xlu0 %v491, 8
      %v596 = vpop.permute.xlu0 %595
      %597 = vrot.lane.b32.xlu0 %v494, 8
      %v598 = vpop.permute.xlu0 %597
      %599 = vrot.lane.b32.xlu0 %v496, 8
      %v600 = vpop.permute.xlu0 %599
      %601 = vrot.lane.b32.xlu0 %v499, 8
      %v602 = vpop.permute.xlu0 %601
      %603 = vrot.lane.b32.xlu0 %v501, 8
      %v604 = vpop.permute.xlu0 %603
      %605 = vrot.lane.b32.xlu0 %v504, 8
      %v606 = vpop.permute.xlu0 %605
      %607 = vrot.lane.b32.xlu0 %v506, 8
      %v608 = vpop.permute.xlu0 %607
      %609 = vrot.lane.b32.xlu0 %v509, 8
      %v610 = vpop.permute.xlu0 %609
      %611 = vrot.lane.b32.xlu0 %v511, 8
      %v612 = vpop.permute.xlu0 %611
      %613 = vrot.lane.b32.xlu0 %v514, 8
      %v614 = vpop.permute.xlu0 %613
      %615 = vrot.lane.b32.xlu0 %v516, 8
      %v616 = vpop.permute.xlu0 %615
      %617 = vrot.lane.b32.xlu0 %v519, 8
      %v618 = vpop.permute.xlu0 %617
      %619 = vrot.lane.b32.xlu0 %v521, 8
      %v620 = vpop.permute.xlu0 %619
      %637 = vrot.lane.b32.xlu0 %v525, 16
      %v638 = vpop.permute.xlu0 %637
      %639 = vrot.lane.b32.xlu0 %v527, 16
      %v640 = vpop.permute.xlu0 %639
      %641 = vrot.lane.b32.xlu0 %v530, 16
      %v642 = vpop.permute.xlu0 %641
      %643 = vrot.lane.b32.xlu0 %v532, 16
      %v644 = vpop.permute.xlu0 %643
      %645 = vrot.lane.b32.xlu0 %v535, 16
      %v646 = vpop.permute.xlu0 %645
      %647 = vrot.lane.b32.xlu0 %v537, 16
      %v648 = vpop.permute.xlu0 %647
      %649 = vrot.lane.b32.xlu0 %v540, 16
      %v650 = vpop.permute.xlu0 %649
      %651 = vrot.lane.b32.xlu0 %v542, 16
      %v652 = vpop.permute.xlu0 %651
      %653 = vrot.lane.b32.xlu0 %v545, 16
      %v654 = vpop.permute.xlu0 %653
      %655 = vrot.lane.b32.xlu0 %v547, 16
      %v656 = vpop.permute.xlu0 %655
      %657 = vrot.lane.b32.xlu0 %v550, 16
      %v658 = vpop.permute.xlu0 %657
      %659 = vrot.lane.b32.xlu0 %v552, 16
      %v660 = vpop.permute.xlu0 %659
      %661 = vrot.lane.b32.xlu0 %v555, 16
      %v662 = vpop.permute.xlu0 %661
      %663 = vrot.lane.b32.xlu0 %v557, 16
      %v664 = vpop.permute.xlu0 %663
      %665 = vrot.lane.b32.xlu0 %v560, 16
      %v666 = vpop.permute.xlu0 %665
      %667 = vrot.lane.b32.xlu0 %v562, 16
      %v668 = vpop.permute.xlu0 %667
      %685 = vrot.lane.b32.xlu0 %v430, 24
      %v686 = vpop.permute.xlu0 %685
      %687 = vrot.lane.b32.xlu0 %v431, 24
      %v688 = vpop.permute.xlu0 %687
      %689 = vrot.lane.b32.xlu0 %v433, 24
      %v690 = vpop.permute.xlu0 %689
      %691 = vrot.lane.b32.xlu0 %v434, 24
      %v692 = vpop.permute.xlu0 %691
      %693 = vrot.lane.b32.xlu0 %v436, 24
      %v694 = vpop.permute.xlu0 %693
      %695 = vrot.lane.b32.xlu0 %v437, 24
      %v696 = vpop.permute.xlu0 %695
      %697 = vrot.lane.b32.xlu0 %v439, 24
      %v698 = vpop.permute.xlu0 %697
      %699 = vrot.lane.b32.xlu0 %v440, 24
      %v700 = vpop.permute.xlu0 %699
      %701 = vrot.lane.b32.xlu0 %v442, 24
      %v702 = vpop.permute.xlu0 %701
      %703 = vrot.lane.b32.xlu0 %v443, 24
      %v704 = vpop.permute.xlu0 %703
      %705 = vrot.lane.b32.xlu0 %v445, 24
      %v706 = vpop.permute.xlu0 %705
      %707 = vrot.lane.b32.xlu0 %v446, 24
      %v708 = vpop.permute.xlu0 %707
      %709 = vrot.lane.b32.xlu0 %v448, 24
      %v710 = vpop.permute.xlu0 %709
      %711 = vrot.lane.b32.xlu0 %v449, 24
      %v712 = vpop.permute.xlu0 %711
      %713 = vrot.lane.b32.xlu0 %v451, 24
      %v714 = vpop.permute.xlu0 %713
      %715 = vrot.lane.b32.xlu0 %v452, 24
      %v716 = vpop.permute.xlu0 %715
      %733 = vrot.lane.b32.xlu0 %v489, 32
      %v734 = vpop.permute.xlu0 %733
      %735 = vrot.lane.b32.xlu0 %v491, 32
      %v736 = vpop.permute.xlu0 %735
      %737 = vrot.lane.b32.xlu0 %v494, 32
      %v738 = vpop.permute.xlu0 %737
      %739 = vrot.lane.b32.xlu0 %v496, 32
      %v740 = vpop.permute.xlu0 %739
      %741 = vrot.lane.b32.xlu0 %v499, 32
      %v742 = vpop.permute.xlu0 %741
      %743 = vrot.lane.b32.xlu0 %v501, 32
      %v744 = vpop.permute.xlu0 %743
      %745 = vrot.lane.b32.xlu0 %v504, 32
      %v746 = vpop.permute.xlu0 %745
      %747 = vrot.lane.b32.xlu0 %v506, 32
      %v748 = vpop.permute.xlu0 %747
      %749 = vrot.lane.b32.xlu0 %v509, 32
      %v750 = vpop.permute.xlu0 %749
      %751 = vrot.lane.b32.xlu0 %v511, 32
      %v752 = vpop.permute.xlu0 %751
      %753 = vrot.lane.b32.xlu0 %v514, 32
      %v754 = vpop.permute.xlu0 %753
      %755 = vrot.lane.b32.xlu0 %v516, 32
      %v756 = vpop.permute.xlu0 %755
      %757 = vrot.lane.b32.xlu0 %v519, 32
      %v758 = vpop.permute.xlu0 %757
      %759 = vrot.lane.b32.xlu0 %v521, 32
      %v760 = vpop.permute.xlu0 %759
      %761 = vrot.lane.b32.xlu0 %v568, 32
      %v762 = vpop.permute.xlu0 %761
      %763 = vrot.lane.b32.xlu0 %v570, 32
      %v764 = vpop.permute.xlu0 %763
      %781 = vrot.lane.b32.xlu0 %v530, 40
      %v782 = vpop.permute.xlu0 %781
      %783 = vrot.lane.b32.xlu0 %v532, 40
      %v784 = vpop.permute.xlu0 %783
      %785 = vrot.lane.b32.xlu0 %v535, 40
      %v786 = vpop.permute.xlu0 %785
      %787 = vrot.lane.b32.xlu0 %v537, 40
      %v788 = vpop.permute.xlu0 %787
      %789 = vrot.lane.b32.xlu0 %v540, 40
      %v790 = vpop.permute.xlu0 %789
      %791 = vrot.lane.b32.xlu0 %v542, 40
      %v792 = vpop.permute.xlu0 %791
      %793 = vrot.lane.b32.xlu0 %v545, 40
      %v794 = vpop.permute.xlu0 %793
      %795 = vrot.lane.b32.xlu0 %v547, 40
      %v796 = vpop.permute.xlu0 %795
      %797 = vrot.lane.b32.xlu0 %v550, 40
      %v798 = vpop.permute.xlu0 %797
      %799 = vrot.lane.b32.xlu0 %v552, 40
      %v800 = vpop.permute.xlu0 %799
      %801 = vrot.lane.b32.xlu0 %v555, 40
      %v802 = vpop.permute.xlu0 %801
      %803 = vrot.lane.b32.xlu0 %v557, 40
      %v804 = vpop.permute.xlu0 %803
      %805 = vrot.lane.b32.xlu0 %v560, 40
      %v806 = vpop.permute.xlu0 %805
      %807 = vrot.lane.b32.xlu0 %v562, 40
      %v808 = vpop.permute.xlu0 %807
      %809 = vrot.lane.b32.xlu0 %v573, 40
      %v810 = vpop.permute.xlu0 %809
      %811 = vrot.lane.b32.xlu0 %v575, 40
      %v812 = vpop.permute.xlu0 %811
      %829 = vrot.lane.b32.xlu0 %v433, 48
      %v830 = vpop.permute.xlu0 %829
      %831 = vrot.lane.b32.xlu0 %v434, 48
      %v832 = vpop.permute.xlu0 %831
      %833 = vrot.lane.b32.xlu0 %v436, 48
      %v834 = vpop.permute.xlu0 %833
      %835 = vrot.lane.b32.xlu0 %v437, 48
      %v836 = vpop.permute.xlu0 %835
      %837 = vrot.lane.b32.xlu0 %v439, 48
      %v838 = vpop.permute.xlu0 %837
      %839 = vrot.lane.b32.xlu0 %v440, 48
      %v840 = vpop.permute.xlu0 %839
      %841 = vrot.lane.b32.xlu0 %v442, 48
      %v842 = vpop.permute.xlu0 %841
      %843 = vrot.lane.b32.xlu0 %v443, 48
      %v844 = vpop.permute.xlu0 %843
      %845 = vrot.lane.b32.xlu0 %v445, 48
      %v846 = vpop.permute.xlu0 %845
      %847 = vrot.lane.b32.xlu0 %v446, 48
      %v848 = vpop.permute.xlu0 %847
      %849 = vrot.lane.b32.xlu0 %v448, 48
      %v850 = vpop.permute.xlu0 %849
      %851 = vrot.lane.b32.xlu0 %v449, 48
      %v852 = vpop.permute.xlu0 %851
      %853 = vrot.lane.b32.xlu0 %v451, 48
      %v854 = vpop.permute.xlu0 %853
      %855 = vrot.lane.b32.xlu0 %v452, 48
      %v856 = vpop.permute.xlu0 %855
      %857 = vrot.lane.b32.xlu0 %v454, 48
      %v858 = vpop.permute.xlu0 %857
      %859 = vrot.lane.b32.xlu0 %v455, 48
      %v860 = vpop.permute.xlu0 %859
      %877 = vrot.lane.b32.xlu0 %v494, 56
      %v878 = vpop.permute.xlu0 %877
      %879 = vrot.lane.b32.xlu0 %v496, 56
      %v880 = vpop.permute.xlu0 %879
      %881 = vrot.lane.b32.xlu0 %v499, 56
      %v882 = vpop.permute.xlu0 %881
      %883 = vrot.lane.b32.xlu0 %v501, 56
      %v884 = vpop.permute.xlu0 %883
      %885 = vrot.lane.b32.xlu0 %v504, 56
      %v886 = vpop.permute.xlu0 %885
      %887 = vrot.lane.b32.xlu0 %v506, 56
      %v888 = vpop.permute.xlu0 %887
      %889 = vrot.lane.b32.xlu0 %v509, 56
      %v890 = vpop.permute.xlu0 %889
      %891 = vrot.lane.b32.xlu0 %v511, 56
      %v892 = vpop.permute.xlu0 %891
      %893 = vrot.lane.b32.xlu0 %v514, 56
      %v894 = vpop.permute.xlu0 %893
      %895 = vrot.lane.b32.xlu0 %v516, 56
      %v896 = vpop.permute.xlu0 %895
      %897 = vrot.lane.b32.xlu0 %v519, 56
      %v898 = vpop.permute.xlu0 %897
      %899 = vrot.lane.b32.xlu0 %v521, 56
      %v900 = vpop.permute.xlu0 %899
      %901 = vrot.lane.b32.xlu0 %v568, 56
      %v902 = vpop.permute.xlu0 %901
      %903 = vrot.lane.b32.xlu0 %v570, 56
      %v904 = vpop.permute.xlu0 %903
      %905 = vrot.lane.b32.xlu0 %v581, 56
      %v906 = vpop.permute.xlu0 %905
      %907 = vrot.lane.b32.xlu0 %v583, 56
      %v908 = vpop.permute.xlu0 %907
      %925 = vrot.lane.b32.xlu0 %v535, 64
      %v926 = vpop.permute.xlu0 %925
      %927 = vrot.lane.b32.xlu0 %v537, 64
      %v928 = vpop.permute.xlu0 %927
      %929 = vrot.lane.b32.xlu0 %v540, 64
      %v930 = vpop.permute.xlu0 %929
      %931 = vrot.lane.b32.xlu0 %v542, 64
      %v932 = vpop.permute.xlu0 %931
      %933 = vrot.lane.b32.xlu0 %v545, 64
      %v934 = vpop.permute.xlu0 %933
      %935 = vrot.lane.b32.xlu0 %v547, 64
      %v936 = vpop.permute.xlu0 %935
      %937 = vrot.lane.b32.xlu0 %v550, 64
      %v938 = vpop.permute.xlu0 %937
      %939 = vrot.lane.b32.xlu0 %v552, 64
      %v940 = vpop.permute.xlu0 %939
      %941 = vrot.lane.b32.xlu0 %v555, 64
      %v942 = vpop.permute.xlu0 %941
      %943 = vrot.lane.b32.xlu0 %v557, 64
      %v944 = vpop.permute.xlu0 %943
      %945 = vrot.lane.b32.xlu0 %v560, 64
      %v946 = vpop.permute.xlu0 %945
      %947 = vrot.lane.b32.xlu0 %v562, 64
      %v948 = vpop.permute.xlu0 %947
      %949 = vrot.lane.b32.xlu0 %v573, 64
      %v950 = vpop.permute.xlu0 %949
      %951 = vrot.lane.b32.xlu0 %v575, 64
      %v952 = vpop.permute.xlu0 %951
      %953 = vrot.lane.b32.xlu0 %v586, 64
      %v954 = vpop.permute.xlu0 %953
      %955 = vrot.lane.b32.xlu0 %v588, 64
      %v956 = vpop.permute.xlu0 %955
      %vm973 = vcmask 64512
      %v974 = vsel %vm973, %v427, %v590
      %v975 = vsel %vm973, %v428, %v592
      %v976 = vsel %vm973, %v430, %v594
      %v977 = vsel %vm973, %v431, %v596
      %v978 = vsel %vm973, %v433, %v598
      %v979 = vsel %vm973, %v434, %v600
      %v980 = vsel %vm973, %v436, %v602
      %v981 = vsel %vm973, %v437, %v604
      %v982 = vsel %vm973, %v439, %v606
      %v983 = vsel %vm973, %v440, %v608
      %v984 = vsel %vm973, %v442, %v610
      %v985 = vsel %vm973, %v443, %v612
      %v986 = vsel %vm973, %v445, %v614
      %v987 = vsel %vm973, %v446, %v616
      %v988 = vsel %vm973, %v448, %v618
      %v989 = vsel %vm973, %v449, %v620
      %vm990 = vcmask 130048
      %v991 = vsel %vm990, %v974, %v638
      %v992 = vsel %vm990, %v975, %v640
      %v993 = vsel %vm990, %v976, %v642
      %v994 = vsel %vm990, %v977, %v644
      %v995 = vsel %vm990, %v978, %v646
      %v996 = vsel %vm990, %v979, %v648
      %v997 = vsel %vm990, %v980, %v650
      %v998 = vsel %vm990, %v981, %v652
      %v999 = vsel %vm990, %v982, %v654
      %v1000 = vsel %vm990, %v983, %v656
      %v1001 = vsel %vm990, %v984, %v658
      %v1002 = vsel %vm990, %v985, %v660
      %v1003 = vsel %vm990, %v986, %v662
      %v1004 = vsel %vm990, %v987, %v664
      %v1005 = vsel %vm990, %v988, %v666
      %v1006 = vsel %vm990, %v989, %v668
      %vm1007 = vcmask 195584
      %v1008 = vsel %vm1007, %v991, %v686
      %v1009 = vsel %vm1007, %v992, %v688
      %v1010 = vsel %vm1007, %v993, %v690
      %v1011 = vsel %vm1007, %v994, %v692
      %v1012 = vsel %vm1007, %v995, %v694
      %v1013 = vsel %vm1007, %v996, %v696
      %v1014 = vsel %vm1007, %v997, %v698
      %v1015 = vsel %vm1007, %v998, %v700
      %v1016 = vsel %vm1007, %v999, %v702
      %v1017 = vsel %vm1007, %v1000, %v704
      %v1018 = vsel %vm1007, %v1001, %v706
      %v1019 = vsel %vm1007, %v1002, %v708
      %v1020 = vsel %vm1007, %v1003, %v710
      %v1021 = vsel %vm1007, %v1004, %v712
      %v1022 = vsel %vm1007, %v1005, %v714
      %v1023 = vsel %vm1007, %v1006, %v716
      %vm1024 = vcmask 261120
      %v1025 = vsel %vm1024, %v1008, %v734
      %v1026 = vsel %vm1024, %v1009, %v736
      %v1027 = vsel %vm1024, %v1010, %v738
      %v1028 = vsel %vm1024, %v1011, %v740
      %v1029 = vsel %vm1024, %v1012, %v742
      %v1030 = vsel %vm1024, %v1013, %v744
      %v1031 = vsel %vm1024, %v1014, %v746
      %v1032 = vsel %vm1024, %v1015, %v748
      %v1033 = vsel %vm1024, %v1016, %v750
      %v1034 = vsel %vm1024, %v1017, %v752
      %v1035 = vsel %vm1024, %v1018, %v754
      %v1036 = vsel %vm1024, %v1019, %v756
      %v1037 = vsel %vm1024, %v1020, %v758
      %v1038 = vsel %vm1024, %v1021, %v760
      %v1039 = vsel %vm1024, %v1022, %v762
      %v1040 = vsel %vm1024, %v1023, %v764
      %vm1041 = vcmask 326656
      %v1042 = vsel %vm1041, %v1025, %v782
      %v1043 = vsel %vm1041, %v1026, %v784
      %v1044 = vsel %vm1041, %v1027, %v786
      %v1045 = vsel %vm1041, %v1028, %v788
      %v1046 = vsel %vm1041, %v1029, %v790
      %v1047 = vsel %vm1041, %v1030, %v792
      %v1048 = vsel %vm1041, %v1031, %v794
      %v1049 = vsel %vm1041, %v1032, %v796
      %v1050 = vsel %vm1041, %v1033, %v798
      %v1051 = vsel %vm1041, %v1034, %v800
      %v1052 = vsel %vm1041, %v1035, %v802
      %v1053 = vsel %vm1041, %v1036, %v804
      %v1054 = vsel %vm1041, %v1037, %v806
      %v1055 = vsel %vm1041, %v1038, %v808
      %v1056 = vsel %vm1041, %v1039, %v810
      %v1057 = vsel %vm1041, %v1040, %v812
      %vm1058 = vcmask 392192
      %v1059 = vsel %vm1058, %v1042, %v830
      %v1060 = vsel %vm1058, %v1043, %v832
      %v1061 = vsel %vm1058, %v1044, %v834
      %v1062 = vsel %vm1058, %v1045, %v836
      %v1063 = vsel %vm1058, %v1046, %v838
      %v1064 = vsel %vm1058, %v1047, %v840
      %v1065 = vsel %vm1058, %v1048, %v842
      %v1066 = vsel %vm1058, %v1049, %v844
      %v1067 = vsel %vm1058, %v1050, %v846
      %v1068 = vsel %vm1058, %v1051, %v848
      %v1069 = vsel %vm1058, %v1052, %v850
      %v1070 = vsel %vm1058, %v1053, %v852
      %v1071 = vsel %vm1058, %v1054, %v854
      %v1072 = vsel %vm1058, %v1055, %v856
      %v1073 = vsel %vm1058, %v1056, %v858
      %v1074 = vsel %vm1058, %v1057, %v860
      %vm1075 = vcmask 457728
      %v1076 = vsel %vm1075, %v1059, %v878
      %v1077 = vsel %vm1075, %v1060, %v880
      %v1078 = vsel %vm1075, %v1061, %v882
      %v1079 = vsel %vm1075, %v1062, %v884
      %v1080 = vsel %vm1075, %v1063, %v886
      %v1081 = vsel %vm1075, %v1064, %v888
      %v1082 = vsel %vm1075, %v1065, %v890
      %v1083 = vsel %vm1075, %v1066, %v892
      %v1084 = vsel %vm1075, %v1067, %v894
      %v1085 = vsel %vm1075, %v1068, %v896
      %v1086 = vsel %vm1075, %v1069, %v898
      %v1087 = vsel %vm1075, %v1070, %v900
      %v1088 = vsel %vm1075, %v1071, %v902
      %v1089 = vsel %vm1075, %v1072, %v904
      %v1090 = vsel %vm1075, %v1073, %v906
      %v1091 = vsel %vm1075, %v1074, %v908
      %vm1092 = vcmask 523264
      %v1093 = vsel %vm1092, %v1076, %v926
      %v1094 = vsel %vm1092, %v1077, %v928
      %v1095 = vsel %vm1092, %v1078, %v930
      %v1096 = vsel %vm1092, %v1079, %v932
      %v1097 = vsel %vm1092, %v1080, %v934
      %v1098 = vsel %vm1092, %v1081, %v936
      %v1099 = vsel %vm1092, %v1082, %v938
      %v1100 = vsel %vm1092, %v1083, %v940
      %v1101 = vsel %vm1092, %v1084, %v942
      %v1102 = vsel %vm1092, %v1085, %v944
      %v1103 = vsel %vm1092, %v1086, %v946
      %v1104 = vsel %vm1092, %v1087, %v948
      %v1105 = vsel %vm1092, %v1088, %v950
      %v1106 = vsel %vm1092, %v1089, %v952
      %v1107 = vsel %vm1092, %v1090, %v954
      %v1108 = vsel %vm1092, %v1091, %v956
      %v1109 = vpack.c.bf16 %v1094, %v1093
      %v1110 = vpack.c.bf16 %v1096, %v1095
      %v1111 = vpack.c.bf16 %v1098, %v1097
      %v1112 = vpack.c.bf16 %v1100, %v1099
      %v1113 = vpack.c.bf16 %v1102, %v1101
      %v1114 = vpack.c.bf16 %v1104, %v1103
      %v1115 = vpack.c.bf16 %v1106, %v1105
      %v1116 = vpack.c.bf16 %v1108, %v1107
      %v1117 = vld [vmem:[%s1] sm:$0xf]
      %v1118 = vld [vmem:[%s1 + $0x4] sm:$0xf]
      %v1119 = vld [vmem:[%s1 + $0x8] sm:$0xf]
      %v1120 = vld [vmem:[%s1 + $0xc] sm:$0xf]
      %v1121 = vld [vmem:[%s1 + $0x10] sm:$0xf]
      %v1122 = vld [vmem:[%s1 + $0x14] sm:$0xf]
      %v1123 = vld [vmem:[%s1 + $0x18] sm:$0xf]
      %v1124 = vld [vmem:[%s1 + $0x1c] sm:$0xf]
      %v1125 = vld [vmem:[%s1 + $0x20] sm:$0xf]
      %v1126 = vld [vmem:[%s2] sm:$0x1]
      %v1128 = vperm.slane %v1126, 0
      %v1139 = vunpack.c.l.b16 %v1117
      %v1140 = vunpack.c.l.b16 %v1118
      %v1141 = vunpack.c.l.b16 %v1119
      %v1142 = vunpack.c.l.b16 %v1120
      %v1143 = vunpack.c.l.b16 %v1121
      %v1144 = vunpack.c.l.b16 %v1122
      %v1145 = vunpack.c.l.b16 %v1123
      %v1146 = vunpack.c.l.b16 %v1124
      %v1147 = vunpack.c.l.b16 %v1125
      %v1148 = vpack.c.b16 %v1140, %v1139
      %v1149 = vpack.c.b16 %v1142, %v1141
      %v1150 = vpack.c.b16 %v1144, %v1143
      %v1151 = vpack.c.b16 %v1146, %v1145
      %v1152 = vpack.c.b16 %v1147, %v1147
      %vm1157 = vcmask 588800
      %v1159 = vsel %vm1157, %v1109, 0
      %v1162 = vsel %vm1157, %v1110, 0
      %v1165 = vsel %vm1157, %v1111, 0
      %v1168 = vsel %vm1157, %v1112, 0
      %v1171 = vsel %vm1157, %v1113, 0
      %v1174 = vsel %vm1157, %v1114, 0
      %v1177 = vsel %vm1157, %v1115, 0
      %v1180 = vsel %vm1157, %v1116, 0
      %vm1182 = vcmask 1043456
      %v1184 = vsel %vm1182, %v1152, 0
      %1186 = vmatpush.bf16.msra.mxu0 0
      %1187 = vmatpush.bf16.msra.mxu0 0
      %1188 = vmatpush.bf16.msra.mxu0 0
      %1189 = vmatpush.bf16.msra.mxu0 %v1184
      %1190 = vmatpush.bf16.msra.mxu0 %v1151
      %1191 = vmatpush.bf16.msra.mxu0 %v1150
      %1192 = vmatpush.bf16.msra.mxu0 %v1149
      %1193 = vmatpush.bf16.msra.mxu0 %v1148
      %1194 = vmatmul.bf16.gmra.mxu0 %v1159
      %v1195 = vpop.f32.mrf.mxu0
      %v1196 = vadd.f32 %v1128, %v1195
      %v1197 = vpop.f32.mrf.mxu0
      %v1198 = vadd.f32 %v1128, %v1197
      %1199 = vmatmul.bf16.gmra.mxu0 %v1162
      %v1200 = vpop.f32.mrf.mxu0
      %v1201 = vadd.f32 %v1128, %v1200
      %v1202 = vpop.f32.mrf.mxu0
      %v1203 = vadd.f32 %v1128, %v1202
      %1204 = vmatmul.bf16.gmra.mxu0 %v1165
      %v1205 = vpop.f32.mrf.mxu0
      %v1206 = vadd.f32 %v1128, %v1205
      %v1207 = vpop.f32.mrf.mxu0
      %v1208 = vadd.f32 %v1128, %v1207
      %1209 = vmatmul.bf16.gmra.mxu0 %v1168
      %v1210 = vpop.f32.mrf.mxu0
      %v1211 = vadd.f32 %v1128, %v1210
      %v1212 = vpop.f32.mrf.mxu0
      %v1213 = vadd.f32 %v1128, %v1212
      %1214 = vmatmul.bf16.gmra.mxu0 %v1171
      %v1215 = vpop.f32.mrf.mxu0
      %v1216 = vadd.f32 %v1128, %v1215
      %v1217 = vpop.f32.mrf.mxu0
      %v1218 = vadd.f32 %v1128, %v1217
      %1219 = vmatmul.bf16.gmra.mxu0 %v1174
      %v1220 = vpop.f32.mrf.mxu0
      %v1221 = vadd.f32 %v1128, %v1220
      %v1222 = vpop.f32.mrf.mxu0
      %v1223 = vadd.f32 %v1128, %v1222
      %1224 = vmatmul.bf16.gmra.mxu0 %v1177
      %v1225 = vpop.f32.mrf.mxu0
      %v1226 = vadd.f32 %v1128, %v1225
      %v1227 = vpop.f32.mrf.mxu0
      %v1228 = vadd.f32 %v1128, %v1227
      %1229 = vmatmul.bf16.gmra.mxu0 %v1180
      %v1230 = vpop.f32.mrf.mxu0
      %v1231 = vadd.f32 %v1128, %v1230
      %v1232 = vpop.f32.mrf.mxu0
      %v1233 = vadd.f32 %v1128, %v1232
      %1234 = vdwg.mxu0
      %vm1235 = vcmask 31744
      %1236 = vst.msk [vmem:[%s288] sm:$0xff] %vm1235, %v1196
      %1237 = vst.msk [vmem:[%s288 + $0x8] sm:$0xff] %vm1235, %v1198
      %1238 = vst.msk [vmem:[%s288 + $0x10] sm:$0xff] %vm1235, %v1201
      %1239 = vst.msk [vmem:[%s288 + $0x18] sm:$0xff] %vm1235, %v1203
      %1240 = vst.msk [vmem:[%s288 + $0x20] sm:$0xff] %vm1235, %v1206
      %1241 = vst.msk [vmem:[%s288 + $0x28] sm:$0xff] %vm1235, %v1208
      %1242 = vst.msk [vmem:[%s288 + $0x30] sm:$0xff] %vm1235, %v1211
      %1243 = vst.msk [vmem:[%s288 + $0x38] sm:$0xff] %vm1235, %v1213
      %1244 = vst.msk [vmem:[%s288 + $0x40] sm:$0xff] %vm1235, %v1216
      %1245 = vst.msk [vmem:[%s288 + $0x48] sm:$0xff] %vm1235, %v1218
      %1246 = vst.msk [vmem:[%s288 + $0x50] sm:$0xff] %vm1235, %v1221
      %1247 = vst.msk [vmem:[%s288 + $0x58] sm:$0xff] %vm1235, %v1223
      %1248 = vst.msk [vmem:[%s288 + $0x60] sm:$0xff] %vm1235, %v1226
      %1249 = vst.msk [vmem:[%s288 + $0x68] sm:$0xff] %vm1235, %v1228
      %1250 = vst.msk [vmem:[%s288 + $0x70] sm:$0xff] %vm1235, %v1231
      %1251 = vst.msk [vmem:[%s288 + $0x78] sm:$0xff] %vm1235, %v1233
      %v1252 = vsel %vm1235, %v1196, 0.0
      %v1253 = vsel %vm1235, %v1198, 0.0
      %v1254 = vadd.f32 %v1252, %v1253
      %v1255 = vsel %vm1235, %v1201, 0.0
      %v1256 = vadd.f32 %v1254, %v1255
      %v1257 = vsel %vm1235, %v1203, 0.0
      %v1258 = vadd.f32 %v1256, %v1257
      %v1259 = vsel %vm1235, %v1206, 0.0
      %v1260 = vadd.f32 %v1258, %v1259
      %v1261 = vsel %vm1235, %v1208, 0.0
      %v1262 = vadd.f32 %v1260, %v1261
      %v1263 = vsel %vm1235, %v1211, 0.0
      %v1264 = vadd.f32 %v1262, %v1263
      %v1265 = vsel %vm1235, %v1213, 0.0
      %v1266 = vadd.f32 %v1264, %v1265
      %v1267 = vsel %vm1235, %v1216, 0.0
      %v1268 = vadd.f32 %v1266, %v1267
      %v1269 = vsel %vm1235, %v1218, 0.0
      %v1270 = vadd.f32 %v1268, %v1269
      %v1271 = vsel %vm1235, %v1221, 0.0
      %v1272 = vadd.f32 %v1270, %v1271
      %v1273 = vsel %vm1235, %v1223, 0.0
      %v1274 = vadd.f32 %v1272, %v1273
      %v1275 = vsel %vm1235, %v1226, 0.0
      %v1276 = vadd.f32 %v1274, %v1275
      %v1277 = vsel %vm1235, %v1228, 0.0
      %v1278 = vadd.f32 %v1276, %v1277
      %v1279 = vsel %vm1235, %v1231, 0.0
      %v1280 = vadd.f32 %v1278, %v1279
      %v1281 = vsel %vm1235, %v1233, 0.0
      %v1282 = vadd.f32 %v1280, %v1281
      %v1283 = vrot.slane %v1282, 4
      %v1284 = vadd.f32 %v1282, %v1283
      %v1285 = vrot.slane %v1284, 2
      %v1286 = vadd.f32 %v1284, %v1285
      %v1287 = vrot.slane %v1286, 1
      %v1288 = vadd.f32 %v1286, %v1287
      %v1289 = vmul.f32 %v1196, %v1196
      %v1290 = vmul.f32 %v1198, %v1198
      %v1291 = vmul.f32 %v1201, %v1201
      %v1292 = vmul.f32 %v1203, %v1203
      %v1293 = vmul.f32 %v1206, %v1206
      %v1294 = vmul.f32 %v1208, %v1208
      %v1295 = vmul.f32 %v1211, %v1211
      %v1296 = vmul.f32 %v1213, %v1213
      %v1297 = vmul.f32 %v1216, %v1216
      %v1298 = vmul.f32 %v1218, %v1218
      %v1299 = vmul.f32 %v1221, %v1221
      %v1300 = vmul.f32 %v1223, %v1223
      %v1301 = vmul.f32 %v1226, %v1226
      %v1302 = vmul.f32 %v1228, %v1228
      %v1303 = vmul.f32 %v1231, %v1231
      %v1304 = vmul.f32 %v1233, %v1233
      %v1305 = vsel %vm1235, %v1289, 0.0
      %v1306 = vsel %vm1235, %v1290, 0.0
      %v1307 = vadd.f32 %v1305, %v1306
      %v1308 = vsel %vm1235, %v1291, 0.0
      %v1309 = vadd.f32 %v1307, %v1308
      %v1310 = vsel %vm1235, %v1292, 0.0
      %v1311 = vadd.f32 %v1309, %v1310
      %v1312 = vsel %vm1235, %v1293, 0.0
      %v1313 = vadd.f32 %v1311, %v1312
      %v1314 = vsel %vm1235, %v1294, 0.0
      %v1315 = vadd.f32 %v1313, %v1314
      %v1316 = vsel %vm1235, %v1295, 0.0
      %v1317 = vadd.f32 %v1315, %v1316
      %v1318 = vsel %vm1235, %v1296, 0.0
      %v1319 = vadd.f32 %v1317, %v1318
      %v1320 = vsel %vm1235, %v1297, 0.0
      %v1321 = vadd.f32 %v1319, %v1320
      %v1322 = vsel %vm1235, %v1298, 0.0
      %v1323 = vadd.f32 %v1321, %v1322
      %v1324 = vsel %vm1235, %v1299, 0.0
      %v1325 = vadd.f32 %v1323, %v1324
      %v1326 = vsel %vm1235, %v1300, 0.0
      %v1327 = vadd.f32 %v1325, %v1326
      %v1328 = vsel %vm1235, %v1301, 0.0
      %v1329 = vadd.f32 %v1327, %v1328
      %v1330 = vsel %vm1235, %v1302, 0.0
      %v1331 = vadd.f32 %v1329, %v1330
      %v1332 = vsel %vm1235, %v1303, 0.0
      %v1333 = vadd.f32 %v1331, %v1332
      %v1334 = vsel %vm1235, %v1304, 0.0
      %v1335 = vadd.f32 %v1333, %v1334
      %v1336 = vrot.slane %v1335, 4
      %v1337 = vadd.f32 %v1335, %v1336
      %v1338 = vrot.slane %v1337, 2
      %v1339 = vadd.f32 %v1337, %v1338
      %v1340 = vrot.slane %v1339, 1
      %v1341 = vadd.f32 %v1339, %v1340
      %vm1342 = vcmask 1040384
      %v1343 = vsel %vm1342, %v1288, %v1341
      %vm1344 = vcmask 25600
      %1345 = vst.msk [vmem:[%s297] sm:$0x3] %vm1344, %v1343
      %s1346 = smul.u32 8, %s23
      %p1347 = scmp.lt.s32.totalorder %s22, 1
      %s1348 = scalar_select %p1347, %s22, 1
      %p1349 = scmp.lt.s32.totalorder %s1346, 15
      %s1350 = scalar_select %p1349, %s1346, 15
      %s1351 = smul.addr %s1350, 2
      %s1352 = smul.addr %s1348, 32
      %s1353 = sadd.s32 %s1351, %s1352
      %s1354 = smul.addr %s1353, 8
      %s1355 = scalar_lea.vmem %s5, %s1354
      %p1356 = scmp.lt.s32.totalorder %s22, 1
      %s1357 = scalar_select %p1356, %s22, 1
      %p1358 = scmp.lt.s32.totalorder %s23, 1
      %s1359 = scalar_select %p1358, %s23, 1
      %s1360 = smul.addr %s1357, 2
      %s1361 = sadd.s32 %s1359, %s1360
      %s1362 = smul.addr %s1361, 2
      %s1363 = scalar_lea.vmem %s6, %s1362
      // Predicated region
      $region45: #{upsample_forward.5} parent=39 // pred_check
        %p1364 = pneg %p160
      $region46: #{upsample_forward.5} parent=39 // pred_check_branch
        %1366 = sbr.rel (%p1364) target = $region48
      $region47: #{upsample_forward.5} parent=39 // pred_region
        %s1367 = smul.u32 8, %s23
      $region48: #{upsample_forward.5} parent=39 // pred_fallthru
        _
      // Predicated region
      $region49: #{upsample_forward.5} parent=39 // pred_check
        %p1368 = pneg %p188
      $region50: #{upsample_forward.5} parent=39 // pred_check_branch
        %1370 = sbr.rel (%p1368) target = $region52
      $region51: #{upsample_forward.5} parent=39 // pred_region
        _
      $region52: #{upsample_forward.5} parent=39 // pred_fallthru
        _
    $region40: #{upsample_forward.5} parent=5 // pred_fallthru
      _
    %p1371 = scmp.le.s32.totalorder 2, %s13
    // Predicated region
    $region53: #{upsample_forward.5} parent=5 // pred_check
      %p1372 = pneg %p1371
    $region54: #{upsample_forward.5} parent=5 // pred_check_branch
      %1374 = sbr.rel (%p1372) target = $region56
    $region55: #{upsample_forward.5} parent=5 // pred_region
      %s1375 = ssub.s32 %s13, 2
      // Predicated region
      $region57: #{upsample_forward.5} parent=55 // pred_check
        %p1376 = pneg %p166
      $region58: #{upsample_forward.5} parent=55 // pred_check_branch
        %1378 = sbr.rel (%p1376) target = $region60
      $region59: #{upsample_forward.5} parent=55 // pred_region
        %s1379 = smul.u32 8, %s25
        %p1380 = scmp.lt.s32.totalorder %s24, 1
        %s1381 = scalar_select %p1380, %s24, 1
        %p1382 = scmp.lt.s32.totalorder %s1379, 15
        %s1383 = scalar_select %p1382, %s1379, 15
        %s1384 = smul.addr %s1383, 2
        %s1385 = smul.addr %s1381, 32
        %s1386 = sadd.s32 %s1384, %s1385
        %s1387 = smul.addr %s1386, 8
        %s1388 = scalar_lea.vmem %s5, %s1387
      $region60: #{upsample_forward.5} parent=55 // pred_fallthru
        _
      // Predicated region
      $region61: #{upsample_forward.5} parent=55 // pred_check
        %p1389 = pneg %p194
      $region62: #{upsample_forward.5} parent=55 // pred_check_branch
        %1391 = sbr.rel (%p1389) target = $region64
      $region63: #{upsample_forward.5} parent=55 // pred_region
        %p1392 = scmp.lt.s32.totalorder %s24, 1
        %s1393 = scalar_select %p1392, %s24, 1
        %p1394 = scmp.lt.s32.totalorder %s25, 1
        %s1395 = scalar_select %p1394, %s25, 1
        %s1396 = smul.addr %s1393, 2
        %s1397 = sadd.s32 %s1395, %s1396
        %s1398 = smul.addr %s1397, 2
        %s1399 = scalar_lea.vmem %s6, %s1398
      $region64: #{upsample_forward.5} parent=55 // pred_fallthru
        _
    $region56: #{upsample_forward.5} parent=5 // pred_fallthru
      _
  $region6: #{upsample_forward.5} parent=0 // loop_footer
    %s17 = sadd.s32 1, %s13
  $region7: #{upsample_forward.5} parent=0 // loop_footer_branch
    %12 = sbr.rel target = $region3
  $region8: #{upsample_forward.5} parent=0 // loop_exit
    _

// kernel: upsample_forward.6
$region0: #{upsample_forward.6}
  #allocation0 [shape = 'u32[]', space=smem, size = 0x4, offset = 0x4, fixed_abs, tag = 'smem constant byte address 0x4 - core index']
  #allocation1 [shape = 'u32[72,128]{1,0:T(1,128)}', space=vmem, size = 0x9000, scoped, tag = 'internal scratch']
  #allocation2 [shape = 'f32[18,18,4]{2,1,0:T(8,128)}', space=vmem, size = 0x36000, scoped, tag = 'scratch operand']
  %s0 = inlined_call_operand.vmem [shape: f32[2,16,16,4], index: 0, kind: input, shape index: {}]
  %s1 = inlined_call_operand.vmem [shape: bf16[36,4], index: 1, kind: input, shape index: {}]
  %s2 = inlined_call_operand.vmem [shape: f32[1,4], index: 2, kind: input, shape index: {}]
  %s3 = inlined_call_operand.vmem [shape: f32[1,4], index: 3, kind: input, shape index: {}]
  %s4 = inlined_call_operand.vmem [shape: f32[1,4], index: 4, kind: input, shape index: {}]
  %s5 = inlined_call_operand.vmem [shape: f32[2,16,16,4], index: 5, kind: output, shape index: {0}]
  %s6 = inlined_call_operand.vmem [shape: f32[2,2,2,4], index: 6, kind: output, shape index: {1}]
  %7 = xla_tuple %s5, %s6
  %s8 = sld [smem:[#allocation0]]
  $region65: #{upsample_forward.6} parent=0
    _
  %s10 = ssub.s32 1, %s8
  %s11 = scalar_select 0, %s10, %s8
  loop: start=0, step=1, limit=6
  $region2: #{upsample_forward.6} parent=0 // loop_pre_header
    _
  $region3: #{upsample_forward.6} parent=0 // loop_header
    %s13 = sphi 0, %s17
    %p14 = scmp.ge.s32.totalorder %s13, 6
    %s20 = sphi 0, %s32
    %s21 = sphi 0, %s28
    %s22 = sphi 0, %s20
    %s23 = sphi 0, %s21
    %s24 = sphi 0, %s22
    %s25 = sphi 0, %s23
    %s35 = sphi 0, %s37
    %s38 = sphi 0, %s35
    %s39 = sphi 0, %s38
    %s55 = sphi 0, %s39
    %s59 = sphi 0, %s59
    %s61 = sphi 0, %s59
    %s62 = sphi 0, %s61
    %s76 = sphi 0, %s62
    %s80 = sphi 0, %s80
    %s82 = sphi 0, %s80
    %s83 = sphi 0, %s82
    %s97 = sphi 0, %s83
    %s101 = sphi 0, %s101
    %s103 = sphi 0, %s101
    %s104 = sphi 0, %s103
    %s118 = sphi 0, %s104
    %s122 = sphi 0, %s122
    %s124 = sphi 0, %s122
    %s125 = sphi 0, %s124
    %s139 = sphi 0, %s125
    %s147 = sphi 0, %s149
    %s150 = sphi 0, %s147
    %s151 = sphi 0, %s150
    %s167 = sphi 0, %s151
    %s175 = sphi 0, %s177
    %s178 = sphi 0, %s175
    %s179 = sphi 0, %s178
    %s195 = sphi 0, %s179
  $region4: #{upsample_forward.6} parent=0 // loop_header_branch
    %16 = sbr.rel (%p14) target = $region8
  $region5: #{upsample_forward.6} parent=0 // loop_body
    %s18 = ssub.s32 %s13, 1
    %s19 = ssub.s32 %s13, 2
    %s26 = sadd.s32 1, %s21
    %p27 = scmp.ge.s32.totalorder %s26, 2
    %s28 = scalar_select %p27, 0, %s26
    %s29 = sadd.s32 1, %s20
    %s30 = scalar_select %p27, %s29, %s20
    %p31 = scmp.ge.s32.totalorder %s30, 2
    %s32 = scalar_select %p31, 0, %s30
    %s33 = ssub.s32 %s20, %s32
    %p34 = scmp.eq.s32.totalorder %s33, 0
    %s36 = sadd.s32 %s35, 1
    %s37 = scalar_select %p34, %s35, %s36
    %p40 = pneg %p34
    %p41 = scmp.eq.s32.totalorder %s13, 3
    %p42 = por %p40, %p41
    %p43 = scmp.ne.s32.totalorder %s35, %s38
    %p44 = scmp.eq.s32.totalorder %s13, 0
    %p45 = por %p43, %p44
    %p46 = scmp.ne.s32.totalorder %s35, %s38
    %p47 = scmp.eq.s32.totalorder %s18, 3
    %p48 = por %p46, %p47
    %p49 = scmp.ne.s32.totalorder %s38, %s39
    %p50 = scmp.eq.s32.totalorder %s18, 0
    %p51 = por %p49, %p50
    %p52 = scmp.ne.s32.totalorder %s38, %s39
    %p53 = scmp.eq.s32.totalorder %s19, 3
    %p54 = por %p52, %p53
    %p56 = scmp.ne.s32.totalorder %s39, %s55
    %p57 = scmp.eq.s32.totalorder %s19, 0
    %p58 = por %p56, %p57
    %s60 = sadd.s32 %s59, 1
    %p63 = scmp.eq.s32.totalorder %s13, 3
    %p64 = scmp.ne.s32.totalorder %s59, %s61
    %p65 = scmp.eq.s32.totalorder %s13, 0
    %p66 = por %p64, %p65
    %p67 = scmp.ne.s32.totalorder %s59, %s61
    %p68 = scmp.eq.s32.totalorder %s18, 3
    %p69 = por %p67, %p68
    %p70 = scmp.ne.s32.totalorder %s61, %s62
    %p71 = scmp.eq.s32.totalorder %s18, 0
    %p72 = por %p70, %p71
    %p73 = scmp.ne.s32.totalorder %s61, %s62
    %p74 = scmp.eq.s32.totalorder %s19, 3
    %p75 = por %p73, %p74
    %p77 = scmp.ne.s32.totalorder %s62, %s76
    %p78 = scmp.eq.s32.totalorder %s19, 0
    %p79 = por %p77, %p78
    %s81 = sadd.s32 %s80, 1
    %p84 = scmp.eq.s32.totalorder %s13, 3
    %p85 = scmp.ne.s32.totalorder %s80, %s82
    %p86 = scmp.eq.s32.totalorder %s13, 0
    %p87 = por %p85, %p86
    %p88 = scmp.ne.s32.totalorder %s80, %s82
    %p89 = scmp.eq.s32.totalorder %s18, 3
    %p90 = por %p88, %p89
    %p91 = scmp.ne.s32.totalorder %s82, %s83
    %p92 = scmp.eq.s32.totalorder %s18, 0
    %p93 = por %p91, %p92
    %p94 = scmp.ne.s32.totalorder %s82, %s83
    %p95 = scmp.eq.s32.totalorder %s19, 3
    %p96 = por %p94, %p95
    %p98 = scmp.ne.s32.totalorder %s83, %s97
    %p99 = scmp.eq.s32.totalorder %s19, 0
    %p100 = por %p98, %p99
    %s102 = sadd.s32 %s101, 1
    %p105 = scmp.eq.s32.totalorder %s13, 3
    %p106 = scmp.ne.s32.totalorder %s101, %s103
    %p107 = scmp.eq.s32.totalorder %s13, 0
    %p108 = por %p106, %p107
    %p109 = scmp.ne.s32.totalorder %s101, %s103
    %p110 = scmp.eq.s32.totalorder %s18, 3
    %p111 = por %p109, %p110
    %p112 = scmp.ne.s32.totalorder %s103, %s104
    %p113 = scmp.eq.s32.totalorder %s18, 0
    %p114 = por %p112, %p113
    %p115 = scmp.ne.s32.totalorder %s103, %s104
    %p116 = scmp.eq.s32.totalorder %s19, 3
    %p117 = por %p115, %p116
    %p119 = scmp.ne.s32.totalorder %s104, %s118
    %p120 = scmp.eq.s32.totalorder %s19, 0
    %p121 = por %p119, %p120
    %s123 = sadd.s32 %s122, 1
    %p126 = scmp.eq.s32.totalorder %s13, 3
    %p127 = scmp.ne.s32.totalorder %s122, %s124
    %p128 = scmp.eq.s32.totalorder %s13, 0
    %p129 = por %p127, %p128
    %p130 = scmp.ne.s32.totalorder %s122, %s124
    %p131 = scmp.eq.s32.totalorder %s18, 3
    %p132 = por %p130, %p131
    %p133 = scmp.ne.s32.totalorder %s124, %s125
    %p134 = scmp.eq.s32.totalorder %s18, 0
    %p135 = por %p133, %p134
    %p136 = scmp.ne.s32.totalorder %s124, %s125
    %p137 = scmp.eq.s32.totalorder %s19, 3
    %p138 = por %p136, %p137
    %p140 = scmp.ne.s32.totalorder %s125, %s139
    %p141 = scmp.eq.s32.totalorder %s19, 0
    %p142 = por %p140, %p141
    %s143 = ssub.s32 %s20, %s32
    %s144 = ssub.s32 %s21, %s28
    %s145 = sor.u32 %s143, %s144
    %p146 = scmp.eq.s32.totalorder %s145, 0
    %s148 = sadd.s32 %s147, 1
    %s149 = scalar_select %p146, %s147, %s148
    %p152 = pneg %p146
    %p153 = scmp.eq.s32.totalorder %s13, 3
    %p154 = por %p152, %p153
    %p155 = scmp.ne.s32.totalorder %s147, %s150
    %p156 = scmp.eq.s32.totalorder %s13, 0
    %p157 = por %p155, %p156
    %p158 = scmp.ne.s32.totalorder %s147, %s150
    %p159 = scmp.eq.s32.totalorder %s18, 3
    %p160 = por %p158, %p159
    %p161 = scmp.ne.s32.totalorder %s150, %s151
    %p162 = scmp.eq.s32.totalorder %s18, 0
    %p163 = por %p161, %p162
    %p164 = scmp.ne.s32.totalorder %s150, %s151
    %p165 = scmp.eq.s32.totalorder %s19, 3
    %p166 = por %p164, %p165
    %p168 = scmp.ne.s32.totalorder %s151, %s167
    %p169 = scmp.eq.s32.totalorder %s19, 0
    %p170 = por %p168, %p169
    %s171 = ssub.s32 %s20, %s32
    %s172 = ssub.s32 %s21, %s28
    %s173 = sor.u32 %s171, %s172
    %p174 = scmp.eq.s32.totalorder %s173, 0
    %s176 = sadd.s32 %s175, 1
    %s177 = scalar_select %p174, %s175, %s176
    %p180 = pneg %p174
    %p181 = scmp.eq.s32.totalorder %s13, 3
    %p182 = por %p180, %p181
    %p183 = scmp.ne.s32.totalorder %s175, %s178
    %p184 = scmp.eq.s32.totalorder %s13, 0
    %p185 = por %p183, %p184
    %p186 = scmp.ne.s32.totalorder %s175, %s178
    %p187 = scmp.eq.s32.totalorder %s18, 3
    %p188 = por %p186, %p187
    %p189 = scmp.ne.s32.totalorder %s178, %s179
    %p190 = scmp.eq.s32.totalorder %s18, 0
    %p191 = por %p189, %p190
    %p192 = scmp.ne.s32.totalorder %s178, %s179
    %p193 = scmp.eq.s32.totalorder %s19, 3
    %p194 = por %p192, %p193
    %p196 = scmp.ne.s32.totalorder %s179, %s195
    %p197 = scmp.eq.s32.totalorder %s19, 0
    %p198 = por %p196, %p197
    %p199 = scmp.le.s32.totalorder 1, %s13
    %p200 = scmp.lt.s32.totalorder %s13, 5
    %p201 = pnand %p199, %p200
    %p202 = pneg %p201
    // Predicated region
    $region9: #{upsample_forward.6} parent=5 // pred_check
      _
    $region10: #{upsample_forward.6} parent=5 // pred_check_branch
      %204 = sbr.rel (%p201) target = $region12
    $region11: #{upsample_forward.6} parent=5 // pred_region
      %s205 = ssub.s32 %s13, 1
      // Predicated region
      $region13: #{upsample_forward.6} parent=11 // pred_check
        %p206 = pneg %p72
      $region14: #{upsample_forward.6} parent=11 // pred_check_branch
        %208 = sbr.rel (%p206) target = $region16
      $region15: #{upsample_forward.6} parent=11 // pred_region
        _
      $region16: #{upsample_forward.6} parent=11 // pred_fallthru
        _
      // Predicated region
      $region17: #{upsample_forward.6} parent=11 // pred_check
        %p209 = pneg %p93
      $region18: #{upsample_forward.6} parent=11 // pred_check_branch
        %211 = sbr.rel (%p209) target = $region20
      $region19: #{upsample_forward.6} parent=11 // pred_region
        _
      $region20: #{upsample_forward.6} parent=11 // pred_fallthru
        _
      // Predicated region
      $region21: #{upsample_forward.6} parent=11 // pred_check
        %p212 = pneg %p114
      $region22: #{upsample_forward.6} parent=11 // pred_check_branch
        %214 = sbr.rel (%p212) target = $region24
      $region23: #{upsample_forward.6} parent=11 // pred_region
        _
      $region24: #{upsample_forward.6} parent=11 // pred_fallthru
        _
      // Predicated region
      $region25: #{upsample_forward.6} parent=11 // pred_check
        %p215 = pneg %p135
      $region26: #{upsample_forward.6} parent=11 // pred_check_branch
        %217 = sbr.rel (%p215) target = $region28
      $region27: #{upsample_forward.6} parent=11 // pred_region
        _
      $region28: #{upsample_forward.6} parent=11 // pred_fallthru
        _
    $region12: #{upsample_forward.6} parent=5 // pred_fallthru
      _
    %p218 = scmp.lt.s32.totalorder %s13, 4
    // Predicated region
    $region29: #{upsample_forward.6} parent=5 // pred_check
      %p219 = pneg %p218
    $region30: #{upsample_forward.6} parent=5 // pred_check_branch
      %221 = sbr.rel (%p219) target = $region32
    $region31: #{upsample_forward.6} parent=5 // pred_region
      // Predicated region
      $region33: #{upsample_forward.6} parent=31 // pred_check
        %p222 = pneg %p45
      $region34: #{upsample_forward.6} parent=31 // pred_check_branch
        %224 = sbr.rel (%p222) target = $region36
      $region35: #{upsample_forward.6} parent=31 // pred_region
        %p225 = scmp.lt.s32.totalorder %s20, 1
        %s226 = scalar_select %p225, %s20, 1
        %s227 = smul.addr %s226, 32
        %s228 = smul.addr %s227, 8
        %s229 = scalar_lea.vmem %s0, %s228
      $region36: #{upsample_forward.6} parent=31 // pred_fallthru
        _
    $region32: #{upsample_forward.6} parent=5 // pred_fallthru
      _
    %p230 = scmp.le.s32.totalorder 1, %s13
    %p231 = scmp.lt.s32.totalorder %s13, 5
    %p232 = pnand %p230, %p231
    %p233 = pneg %p232
    // Predicated region
    $region37: #{upsample_forward.6} parent=5 // pred_check
      _
    $region38: #{upsample_forward.6} parent=5 // pred_check_branch
      %235 = sbr.rel (%p232) target = $region40
    $region39: #{upsample_forward.6} parent=5 // pred_region
      %s236 = ssub.s32 %s13, 1
      %p237 = scmp.lt.s32.totalorder %s22, 1
      %s238 = scalar_select %p237, %s22, 1
      %s239 = smul.addr %s238, 32
      %s240 = smul.addr %s239, 8
      %s241 = scalar_lea.vmem %s0, %s240
      %p242 = pneg %p51
      %p243 = pneg %p48
      %p244 = pneg %p72
      %p245 = pneg %p69
      %p246 = pneg %p93
      %p247 = pneg %p90
      %p248 = pneg %p114
      %p249 = pneg %p111
      %p250 = pneg %p135
      %p251 = pneg %p132
      %p252 = pneg %p163
      %p253 = pneg %p160
      %s254 = smul.u32 8, %s23
      %p255 = scmp.lt.s32.totalorder %s22, 1
      %s256 = scalar_select %p255, %s22, 1
      %p257 = scmp.lt.s32.totalorder %s254, 15
      %s258 = scalar_select %p257, %s254, 15
      %s259 = smul.addr %s258, 2
      %s260 = smul.addr %s256, 32
      %s261 = sadd.s32 %s259, %s260
      %s262 = smul.addr %s261, 8
      %s263 = scalar_lea.vmem %s5, %s262
      %p264 = pneg %p191
      %p265 = pneg %p188
      %p266 = scmp.lt.s32.totalorder %s22, 1
      %s267 = scalar_select %p266, %s22, 1
      %p268 = scmp.lt.s32.totalorder %s23, 1
      %s269 = scalar_select %p268, %s23, 1
      %s270 = smul.addr %s267, 2
      %s271 = sadd.s32 %s269, %s270
      %s272 = smul.addr %s271, 2
      %s273 = scalar_lea.vmem %s6, %s272
      %p274 = scmp.lt.s32.totalorder %s22, 1
      %s275 = scalar_select %p274, %s22, 1
      %s276 = smul.addr %s275, 32
      %s277 = smul.addr %s276, 8
      %s278 = scalar_lea.vmem %s0, %s277
      %s279 = smul.u32 8, %s23
      %p280 = scmp.lt.s32.totalorder %s22, 1
      %s281 = scalar_select %p280, %s22, 1
      %p282 = scmp.lt.s32.totalorder %s279, 15
      %s283 = scalar_select %p282, %s279, 15
      %s284 = smul.addr %s283, 2
      %s285 = smul.addr %s281, 32
      %s286 = sadd.s32 %s284, %s285
      %s287 = smul.addr %s286, 8
      %s288 = scalar_lea.vmem %s5, %s287
      %s289 = smul.u32 8, %s23
      %p290 = scmp.lt.s32.totalorder %s22, 1
      %s291 = scalar_select %p290, %s22, 1
      %p292 = scmp.lt.s32.totalorder %s23, 1
      %s293 = scalar_select %p292, %s23, 1
      %s294 = smul.addr %s291, 2
      %s295 = sadd.s32 %s293, %s294
      %s296 = smul.addr %s295, 2
      %s297 = scalar_lea.vmem %s6, %s296
      %p299 = scmp.eq.s32.totalorder %s23, 0
      // Predicated region
      $region41: #{upsample_forward.6} parent=39 // pred_check
        %p300 = pneg %p299
      $region42: #{upsample_forward.6} parent=39 // pred_check_branch
        %302 = sbr.rel (%p300) target = $region44
      $region43: #{upsample_forward.6} parent=39 // pred_region
        %v303 = vld [vmem:[%s278] sm:$0xff]
        %v304 = vld [vmem:[%s278 + $0x8] sm:$0xff]
        %v305 = vld [vmem:[%s278 + $0x10] sm:$0xff]
        %v306 = vld [vmem:[%s278 + $0x18] sm:$0xff]
        %v307 = vld [vmem:[%s278 + $0x20] sm:$0xff]
        %v308 = vld [vmem:[%s278 + $0x28] sm:$0xff]
        %v309 = vld [vmem:[%s278 + $0x30] sm:$0xff]
        %v310 = vld [vmem:[%s278 + $0x38] sm:$0xff]
        %v311 = vld [vmem:[%s278 + $0x40] sm:$0xff]
        %v312 = vld [vmem:[%s278 + $0x48] sm:$0xff]
        %v313 = vld [vmem:[%s278 + $0x50] sm:$0xff]
        %v314 = vld [vmem:[%s278 + $0x58] sm:$0xff]
        %v315 = vld [vmem:[%s278 + $0x60] sm:$0xff]
        %v316 = vld [vmem:[%s278 + $0x68] sm:$0xff]
        %v317 = vld [vmem:[%s278 + $0x70] sm:$0xff]
        %v318 = vld [vmem:[%s278 + $0x78] sm:$0xff]
        %v319 = vld [vmem:[%s278 + $0x80] sm:$0xff]
        %v320 = vld [vmem:[%s278 + $0x88] sm:$0xff]
        %v321 = vld [vmem:[%s278 + $0x90] sm:$0xff]
        %v322 = vld [vmem:[%s278 + $0x98] sm:$0xff]
        %v323 = vld [vmem:[%s278 + $0xa0] sm:$0xff]
        %v324 = vld [vmem:[%s278 + $0xa8] sm:$0xff]
        %v325 = vld [vmem:[%s278 + $0xb0] sm:$0xff]
        %v326 = vld [vmem:[%s278 + $0xb8] sm:$0xff]
        %v327 = vld [vmem:[%s278 + $0xc0] sm:$0xff]
        %v328 = vld [vmem:[%s278 + $0xc8] sm:$0xff]
        %v329 = vld [vmem:[%s278 + $0xd0] sm:$0xff]
        %v330 = vld [vmem:[%s278 + $0xd8] sm:$0xff]
        %v331 = vld [vmem:[%s278 + $0xe0] sm:$0xff]
        %v332 = vld [vmem:[%s278 + $0xe8] sm:$0xff]
        %v333 = vld [vmem:[%s278 + $0xf0] sm:$0xff]
        %v334 = vld [vmem:[%s278 + $0xf8] sm:$0xff]
        %v335 = vld [vmem:[%s3] sm:$0x1]
        %v337 = vperm.slane %v335, 0
        %v339 = vmul.f32 %v303, %v337
        %v340 = vmul.f32 %v304, %v337
        %v341 = vmul.f32 %v305, %v337
        %v342 = vmul.f32 %v306, %v337
        %v343 = vmul.f32 %v307, %v337
        %v344 = vmul.f32 %v308, %v337
        %v345 = vmul.f32 %v309, %v337
        %v346 = vmul.f32 %v310, %v337
        %v347 = vmul.f32 %v311, %v337
        %v348 = vmul.f32 %v312, %v337
        %v349 = vmul.f32 %v313, %v337
        %v350 = vmul.f32 %v314, %v337
        %v351 = vmul.f32 %v315, %v337
        %v352 = vmul.f32 %v316, %v337
        %v353 = vmul.f32 %v317, %v337
        %v354 = vmul.f32 %v318, %v337
        %v355 = vmul.f32 %v319, %v337
        %v356 = vmul.f32 %v320, %v337
        %v357 = vmul.f32 %v321, %v337
        %v358 = vmul.f32 %v322, %v337
        %v359 = vmul.f32 %v323, %v337
        %v360 = vmul.f32 %v324, %v337
        %v361 = vmul.f32 %v325, %v337
        %v362 = vmul.f32 %v326, %v337
        %v363 = vmul.f32 %v327, %v337
        %v364 = vmul.f32 %v328, %v337
        %v365 = vmul.f32 %v329, %v337
        %v366 = vmul.f32 %v330, %v337
        %v367 = vmul.f32 %v331, %v337
        %v368 = vmul.f32 %v332, %v337
        %v369 = vmul.f32 %v333, %v337
        %v370 = vmul.f32 %v334, %v337
        %v371 = vld [vmem:[%s4] sm:$0x1]
        %v373 = vperm.slane %v371, 0
        %v375 = vadd.f32 %v339, %v373
        %v376 = vadd.f32 %v340, %v373
        %v377 = vadd.f32 %v341, %v373
        %v378 = vadd.f32 %v342, %v373
        %v379 = vadd.f32 %v343, %v373
        %v380 = vadd.f32 %v344, %v373
        %v381 = vadd.f32 %v345, %v373
        %v382 = vadd.f32 %v346, %v373
        %v383 = vadd.f32 %v347, %v373
        %v384 = vadd.f32 %v348, %v373
        %v385 = vadd.f32 %v349, %v373
        %v386 = vadd.f32 %v350, %v373
        %v387 = vadd.f32 %v351, %v373
        %v388 = vadd.f32 %v352, %v373
        %v389 = vadd.f32 %v353, %v373
        %v390 = vadd.f32 %v354, %v373
        %v391 = vadd.f32 %v355, %v373
        %v392 = vadd.f32 %v356, %v373
        %v393 = vadd.f32 %v357, %v373
        %v394 = vadd.f32 %v358, %v373
        %v395 = vadd.f32 %v359, %v373
        %v396 = vadd.f32 %v360, %v373
        %v397 = vadd.f32 %v361, %v373
        %v398 = vadd.f32 %v362, %v373
        %v399 = vadd.f32 %v363, %v373
        %v400 = vadd.f32 %v364, %v373
        %v401 = vadd.f32 %v365, %v373
        %v402 = vadd.f32 %v366, %v373
        %v403 = vadd.f32 %v367, %v373
        %v404 = vadd.f32 %v368, %v373
        %v405 = vadd.f32 %v369, %v373
        %v406 = vadd.f32 %v370, %v373
        %v407 = vmax.f32 %v375, 0.0
        %v408 = vmax.f32 %v376, 0.0
        %v409 = vmax.f32 %v377, 0.0
        %v410 = vmax.f32 %v378, 0.0
        %v411 = vmax.f32 %v379, 0.0
        %v412 = vmax.f32 %v380, 0.0
        %v413 = vmax.f32 %v381, 0.0
        %v414 = vmax.f32 %v382, 0.0
        %v415 = vmax.f32 %v383, 0.0
        %v416 = vmax.f32 %v384, 0.0
        %v417 = vmax.f32 %v385, 0.0
        %v418 = vmax.f32 %v386, 0.0
        %v419 = vmax.f32 %v387, 0.0
        %v420 = vmax.f32 %v388, 0.0
        %v421 = vmax.f32 %v389, 0.0
        %v422 = vmax.f32 %v390, 0.0
        %v423 = vmax.f32 %v391, 0.0
        %v424 = vmax.f32 %v392, 0.0
        %v425 = vmax.f32 %v393, 0.0
        %v426 = vmax.f32 %v394, 0.0
        %v427 = vmax.f32 %v395, 0.0
        %v428 = vmax.f32 %v396, 0.0
        %v429 = vmax.f32 %v397, 0.0
        %v430 = vmax.f32 %v398, 0.0
        %v431 = vmax.f32 %v399, 0.0
        %v432 = vmax.f32 %v400, 0.0
        %v433 = vmax.f32 %v401, 0.0
        %v434 = vmax.f32 %v402, 0.0
        %v435 = vmax.f32 %v403, 0.0
        %v436 = vmax.f32 %v404, 0.0
        %v437 = vmax.f32 %v405, 0.0
        %v438 = vmax.f32 %v406, 0.0
        %vm439 = vcmask 31744
        %440 = vst.msk [vmem:[#allocation2] sm:$0xff] %vm439, 0.0
        %441 = vst.msk [vmem:[#allocation2 + $0x8] sm:$0xff] %vm439, 0.0
        %vm442 = vcmask 25600
        %443 = vst.msk [vmem:[#allocation2 + $0x10] sm:$0x3] %vm442, 0.0
        %444 = vst.msk [vmem:[#allocation2 + $0x18] sm:$0xff] %vm439, 0.0
        %445 = vst.msk [vmem:[#allocation2 + $0x20] sm:$0xff] %vm439, 0.0
        %446 = vst.msk [vmem:[#allocation2 + $0x28] sm:$0x3] %vm442, 0.0
        %447 = vst.msk [vmem:[#allocation2 + $0x30] sm:$0xff] %vm439, 0.0
        %448 = vst.msk [vmem:[#allocation2 + $0x38] sm:$0xff] %vm439, 0.0
        %449 = vst.msk [vmem:[#allocation2 + $0x40] sm:$0x3] %vm442, 0.0
        %450 = vst.msk [vmem:[#allocation2 + $0x48] sm:$0xff] %vm439, 0.0
        %451 = vst.msk [vmem:[#allocation2 + $0x50] sm:$0xff] %vm439, 0.0
        %452 = vst.msk [vmem:[#allocation2 + $0x58] sm:$0x3] %vm442, 0.0
        %453 = vst.msk [vmem:[#allocation2 + $0x60] sm:$0xff] %vm439, 0.0
        %454 = vst.msk [vmem:[#allocation2 + $0x68] sm:$0xff] %vm439, 0.0
        %455 = vst.msk [vmem:[#allocation2 + $0x70] sm:$0x3] %vm442, 0.0
        %456 = vst.msk [vmem:[#allocation2 + $0x78] sm:$0xff] %vm439, 0.0
        %457 = vst.msk [vmem:[#allocation2 + $0x80] sm:$0xff] %vm439, 0.0
        %458 = vst.msk [vmem:[#allocation2 + $0x88] sm:$0x3] %vm442, 0.0
        %459 = vst.msk [vmem:[#allocation2 + $0x90] sm:$0xff] %vm439, 0.0
        %460 = vst.msk [vmem:[#allocation2 + $0x98] sm:$0xff] %vm439, 0.0
        %461 = vst.msk [vmem:[#allocation2 + $0xa0] sm:$0x3] %vm442, 0.0
        %462 = vst.msk [vmem:[#allocation2 + $0xa8] sm:$0xff] %vm439, 0.0
        %463 = vst.msk [vmem:[#allocation2 + $0xb0] sm:$0xff] %vm439, 0.0
        %464 = vst.msk [vmem:[#allocation2 + $0xb8] sm:$0x3] %vm442, 0.0
        %465 = vst.msk [vmem:[#allocation2 + $0xc0] sm:$0xff] %vm439, 0.0
        %466 = vst.msk [vmem:[#allocation2 + $0xc8] sm:$0xff] %vm439, 0.0
        %467 = vst.msk [vmem:[#allocation2 + $0xd0] sm:$0x3] %vm442, 0.0
        %468 = vst.msk [vmem:[#allocation2 + $0xd8] sm:$0xff] %vm439, 0.0
        %469 = vst.msk [vmem:[#allocation2 + $0xe0] sm:$0xff] %vm439, 0.0
        %470 = vst.msk [vmem:[#allocation2 + $0xe8] sm:$0x3] %vm442, 0.0
        %471 = vst.msk [vmem:[#allocation2 + $0xf0] sm:$0xff] %vm439, 0.0
        %472 = vst.msk [vmem:[#allocation2 + $0xf8] sm:$0xff] %vm439, 0.0
        %473 = vst.msk [vmem:[#allocation2 + $0x100] sm:$0x3] %vm442, 0.0
        %474 = vst.msk [vmem:[#allocation2 + $0x108] sm:$0xff] %vm439, 0.0
        %475 = vst.msk [vmem:[#allocation2 + $0x110] sm:$0xff] %vm439, 0.0
        %476 = vst.msk [vmem:[#allocation2 + $0x118] sm:$0x3] %vm442, 0.0
        %477 = vst.msk [vmem:[#allocation2 + $0x120] sm:$0xff] %vm439, 0.0
        %478 = vst.msk [vmem:[#allocation2 + $0x128] sm:$0xff] %vm439, 0.0
        %479 = vst.msk [vmem:[#allocation2 + $0x130] sm:$0x3] %vm442, 0.0
        %480 = vst.msk [vmem:[#allocation2 + $0x138] sm:$0xff] %vm439, 0.0
        %481 = vst.msk [vmem:[#allocation2 + $0x140] sm:$0xff] %vm439, 0.0
        %482 = vst.msk [vmem:[#allocation2 + $0x148] sm:$0x3] %vm442, 0.0
        %483 = vst.msk [vmem:[#allocation2 + $0x150] sm:$0xff] %vm439, 0.0
        %484 = vst.msk [vmem:[#allocation2 + $0x158] sm:$0xff] %vm439, 0.0
        %485 = vst.msk [vmem:[#allocation2 + $0x160] sm:$0x3] %vm442, 0.0
        %486 = vst.msk [vmem:[#allocation2 + $0x168] sm:$0xff] %vm439, 0.0
        %487 = vst.msk [vmem:[#allocation2 + $0x170] sm:$0xff] %vm439, 0.0
        %488 = vst.msk [vmem:[#allocation2 + $0x178] sm:$0x3] %vm442, 0.0
        %489 = vst.msk [vmem:[#allocation2 + $0x180] sm:$0xff] %vm439, 0.0
        %490 = vst.msk [vmem:[#allocation2 + $0x188] sm:$0xff] %vm439, 0.0
        %491 = vst.msk [vmem:[#allocation2 + $0x190] sm:$0x3] %vm442, 0.0
        %492 = vst.msk [vmem:[#allocation2 + $0x198] sm:$0xff] %vm439, 0.0
        %493 = vst.msk [vmem:[#allocation2 + $0x1a0] sm:$0xff] %vm439, 0.0
        %494 = vst.msk [vmem:[#allocation2 + $0x1a8] sm:$0x3] %vm442, 0.0
        %s495 = scalar_lea.vmem [#allocation2], 24
        %496 = vst.msk [vmem:[%s495 + $0x1] sm:$0xff] %vm439, %v407
        %497 = vst.msk [vmem:[%s495 + $0x9] sm:$0xff] %vm439, %v408
        %498 = vst.msk [vmem:[%s495 + $0x19] sm:$0xff] %vm439, %v409
        %499 = vst.msk [vmem:[%s495 + $0x21] sm:$0xff] %vm439, %v410
        %500 = vst.msk [vmem:[%s495 + $0x31] sm:$0xff] %vm439, %v411
        %501 = vst.msk [vmem:[%s495 + $0x39] sm:$0xff] %vm439, %v412
        %502 = vst.msk [vmem:[%s495 + $0x49] sm:$0xff] %vm439, %v413
        %503 = vst.msk [vmem:[%s495 + $0x51] sm:$0xff] %vm439, %v414
        %504 = vst.msk [vmem:[%s495 + $0x61] sm:$0xff] %vm439, %v415
        %505 = vst.msk [vmem:[%s495 + $0x69] sm:$0xff] %vm439, %v416
        %506 = vst.msk [vmem:[%s495 + $0x79] sm:$0xff] %vm439, %v417
        %507 = vst.msk [vmem:[%s495 + $0x81] sm:$0xff] %vm439, %v418
        %508 = vst.msk [vmem:[%s495 + $0x91] sm:$0xff] %vm439, %v419
        %509 = vst.msk [vmem:[%s495 + $0x99] sm:$0xff] %vm439, %v420
        %510 = vst.msk [vmem:[%s495 + $0xa9] sm:$0xff] %vm439, %v421
        %511 = vst.msk [vmem:[%s495 + $0xb1] sm:$0xff] %vm439, %v422
        %512 = vst.msk [vmem:[%s495 + $0xc1] sm:$0xff] %vm439, %v423
        %513 = vst.msk [vmem:[%s495 + $0xc9] sm:$0xff] %vm439, %v424
        %514 = vst.msk [vmem:[%s495 + $0xd9] sm:$0xff] %vm439, %v425
        %515 = vst.msk [vmem:[%s495 + $0xe1] sm:$0xff] %vm439, %v426
        %516 = vst.msk [vmem:[%s495 + $0xf1] sm:$0xff] %vm439, %v427
        %517 = vst.msk [vmem:[%s495 + $0xf9] sm:$0xff] %vm439, %v428
        %518 = vst.msk [vmem:[%s495 + $0x109] sm:$0xff] %vm439, %v429
        %519 = vst.msk [vmem:[%s495 + $0x111] sm:$0xff] %vm439, %v430
        %520 = vst.msk [vmem:[%s495 + $0x121] sm:$0xff] %vm439, %v431
        %521 = vst.msk [vmem:[%s495 + $0x129] sm:$0xff] %vm439, %v432
        %522 = vst.msk [vmem:[%s495 + $0x139] sm:$0xff] %vm439, %v433
        %523 = vst.msk [vmem:[%s495 + $0x141] sm:$0xff] %vm439, %v434
        %524 = vst.msk [vmem:[%s495 + $0x151] sm:$0xff] %vm439, %v435
        %525 = vst.msk [vmem:[%s495 + $0x159] sm:$0xff] %vm439, %v436
        %526 = vst.msk [vmem:[%s495 + $0x169] sm:$0xff] %vm439, %v437
        %527 = vst.msk [vmem:[%s495 + $0x171] sm:$0xff] %vm439, %v438
      $region44: #{upsample_forward.6} parent=39 // pred_fallthru
        _
      %s528 = smul.u32 %s23, 8
      %s529 = smul.u32 %s528, 24
      %s530 = scalar_lea.vmem [#allocation2], %s529
      %v531 = vld [vmem:[%s530] sm:$0xff]
      %v532 = vld [vmem:[%s530 + $0x8] sm:$0xff]
      %v533 = vld [vmem:[%s530 + $0x10] sm:$0x3]
      %v534 = vld [vmem:[%s530 + $0x18] sm:$0xff]
      %v535 = vld [vmem:[%s530 + $0x20] sm:$0xff]
      %v536 = vld [vmem:[%s530 + $0x28] sm:$0x3]
      %v537 = vld [vmem:[%s530 + $0x30] sm:$0xff]
      %v538 = vld [vmem:[%s530 + $0x38] sm:$0xff]
      %v539 = vld [vmem:[%s530 + $0x40] sm:$0x3]
      %v540 = vld [vmem:[%s530 + $0x48] sm:$0xff]
      %v541 = vld [vmem:[%s530 + $0x50] sm:$0xff]
      %v542 = vld [vmem:[%s530 + $0x58] sm:$0x3]
      %v543 = vld [vmem:[%s530 + $0x60] sm:$0xff]
      %v544 = vld [vmem:[%s530 + $0x68] sm:$0xff]
      %v545 = vld [vmem:[%s530 + $0x70] sm:$0x3]
      %v546 = vld [vmem:[%s530 + $0x78] sm:$0xff]
      %v547 = vld [vmem:[%s530 + $0x80] sm:$0xff]
      %v548 = vld [vmem:[%s530 + $0x88] sm:$0x3]
      %v549 = vld [vmem:[%s530 + $0x90] sm:$0xff]
      %v550 = vld [vmem:[%s530 + $0x98] sm:$0xff]
      %v551 = vld [vmem:[%s530 + $0xa0] sm:$0x3]
      %v552 = vld [vmem:[%s530 + $0xa8] sm:$0xff]
      %v553 = vld [vmem:[%s530 + $0xb0] sm:$0xff]
      %v554 = vld [vmem:[%s530 + $0xb8] sm:$0x3]
      %v555 = vld [vmem:[%s530 + $0xc0] sm:$0xff]
      %v556 = vld [vmem:[%s530 + $0xc8] sm:$0xff]
      %v557 = vld [vmem:[%s530 + $0xd0] sm:$0x3]
      %v558 = vld [vmem:[%s530 + $0xd8] sm:$0xff]
      %v559 = vld [vmem:[%s530 + $0xe0] sm:$0xff]
      %v560 = vld [vmem:[%s530 + $0xe8] sm:$0x3]
      %vm585 = vcmask 1046528
      %v586 = vrot.slane %v531, 1
      %v587 = vrot.slane %v532, 1
      %v588 = vsel %vm585, %v586, %v587
      %v589 = vrot.slane %v533, 1
      %v590 = vsel %vm585, %v587, %v589
      %v591 = vrot.slane %v534, 1
      %v592 = vrot.slane %v535, 1
      %v593 = vsel %vm585, %v591, %v592
      %v594 = vrot.slane %v536, 1
      %v595 = vsel %vm585, %v592, %v594
      %v596 = vrot.slane %v537, 1
      %v597 = vrot.slane %v538, 1
      %v598 = vsel %vm585, %v596, %v597
      %v599 = vrot.slane %v539, 1
      %v600 = vsel %vm585, %v597, %v599
      %v601 = vrot.slane %v540, 1
      %v602 = vrot.slane %v541, 1
      %v603 = vsel %vm585, %v601, %v602
      %v604 = vrot.slane %v542, 1
      %v605 = vsel %vm585, %v602, %v604
      %v606 = vrot.slane %v543, 1
      %v607 = vrot.slane %v544, 1
      %v608 = vsel %vm585, %v606, %v607
      %v609 = vrot.slane %v545, 1
      %v610 = vsel %vm585, %v607, %v609
      %v611 = vrot.slane %v546, 1
      %v612 = vrot.slane %v547, 1
      %v613 = vsel %vm585, %v611, %v612
      %v614 = vrot.slane %v548, 1
      %v615 = vsel %vm585, %v612, %v614
      %v616 = vrot.slane %v549, 1
      %v617 = vrot.slane %v550, 1
      %v618 = vsel %vm585, %v616, %v617
      %v619 = vrot.slane %v551, 1
      %v620 = vsel %vm585, %v617, %v619
      %v621 = vrot.slane %v552, 1
      %v622 = vrot.slane %v553, 1
      %v623 = vsel %vm585, %v621, %v622
      %v624 = vrot.slane %v554, 1
      %v625 = vsel %vm585, %v622, %v624
      %vm626 = vcmask 1045504
      %v627 = vrot.slane %v531, 2
      %v628 = vrot.slane %v532, 2
      %v629 = vsel %vm626, %v627, %v628
      %v630 = vrot.slane %v533, 2
      %v631 = vsel %vm626, %v628, %v630
      %v632 = vrot.slane %v534, 2
      %v633 = vrot.slane %v535, 2
      %v634 = vsel %vm626, %v632, %v633
      %v635 = vrot.slane %v536, 2
      %v636 = vsel %vm626, %v633, %v635
      %v637 = vrot.slane %v537, 2
      %v638 = vrot.slane %v538, 2
      %v639 = vsel %vm626, %v637, %v638
      %v640 = vrot.slane %v539, 2
      %v641 = vsel %vm626, %v638, %v640
      %v642 = vrot.slane %v540, 2
      %v643 = vrot.slane %v541, 2
      %v644 = vsel %vm626, %v642, %v643
      %v645 = vrot.slane %v542, 2
      %v646 = vsel %vm626, %v643, %v645
      %v647 = vrot.slane %v543, 2
      %v648 = vrot.slane %v544, 2
      %v649 = vsel %vm626, %v647, %v648
      %v650 = vrot.slane %v545, 2
      %v651 = vsel %vm626, %v648, %v650
      %v652 = vrot.slane %v546, 2
      %v653 = vrot.slane %v547, 2
      %v654 = vsel %vm626, %v652, %v653
      %v655 = vrot.slane %v548, 2
      %v656 = vsel %vm626, %v653, %v655
      %v657 = vrot.slane %v549, 2
      %v658 = vrot.slane %v550, 2
      %v659 = vsel %vm626, %v657, %v658
      %v660 = vrot.slane %v551, 2
      %v661 = vsel %vm626, %v658, %v660
      %v662 = vrot.slane %v552, 2
      %v663 = vrot.slane %v553, 2
      %v664 = vsel %vm626, %v662, %v663
      %v665 = vrot.slane %v554, 2
      %v666 = vsel %vm626, %v663, %v665
      %v670 = vrot.slane %v555, 1
      %v671 = vrot.slane %v556, 1
      %v672 = vsel %vm585, %v670, %v671
      %v673 = vrot.slane %v557, 1
      %v674 = vsel %vm585, %v671, %v673
      %v675 = vrot.slane %v555, 2
      %v676 = vrot.slane %v556, 2
      %v677 = vsel %vm626, %v675, %v676
      %v678 = vrot.slane %v557, 2
      %v679 = vsel %vm626, %v676, %v678
      %v683 = vrot.slane %v558, 1
      %v684 = vrot.slane %v559, 1
      %v685 = vsel %vm585, %v683, %v684
      %v686 = vrot.slane %v560, 1
      %v687 = vsel %vm585, %v684, %v686
      %v688 = vrot.slane %v558, 2
      %v689 = vrot.slane %v559, 2
      %v690 = vsel %vm626, %v688, %v689
      %v691 = vrot.slane %v560, 2
      %v692 = vsel %vm626, %v689, %v691
      %693 = vrot.lane.b32.xlu0 %v588, 4
      %v694 = vpop.permute.xlu0 %693
      %695 = vrot.lane.b32.xlu0 %v590, 4
      %v696 = vpop.permute.xlu0 %695
      %697 = vrot.lane.b32.xlu0 %v593, 4
      %v698 = vpop.permute.xlu0 %697
      %699 = vrot.lane.b32.xlu0 %v595, 4
      %v700 = vpop.permute.xlu0 %699
      %701 = vrot.lane.b32.xlu0 %v598, 4
      %v702 = vpop.permute.xlu0 %701
      %703 = vrot.lane.b32.xlu0 %v600, 4
      %v704 = vpop.permute.xlu0 %703
      %705 = vrot.lane.b32.xlu0 %v603, 4
      %v706 = vpop.permute.xlu0 %705
      %707 = vrot.lane.b32.xlu0 %v605, 4
      %v708 = vpop.permute.xlu0 %707
      %709 = vrot.lane.b32.xlu0 %v608, 4
      %v710 = vpop.permute.xlu0 %709
      %711 = vrot.lane.b32.xlu0 %v610, 4
      %v712 = vpop.permute.xlu0 %711
      %713 = vrot.lane.b32.xlu0 %v613, 4
      %v714 = vpop.permute.xlu0 %713
      %715 = vrot.lane.b32.xlu0 %v615, 4
      %v716 = vpop.permute.xlu0 %715
      %717 = vrot.lane.b32.xlu0 %v618, 4
      %v718 = vpop.permute.xlu0 %717
      %719 = vrot.lane.b32.xlu0 %v620, 4
      %v720 = vpop.permute.xlu0 %719
      %721 = vrot.lane.b32.xlu0 %v623, 4
      %v722 = vpop.permute.xlu0 %721
      %723 = vrot.lane.b32.xlu0 %v625, 4
      %v724 = vpop.permute.xlu0 %723
      %741 = vrot.lane.b32.xlu0 %v629, 8
      %v742 = vpop.permute.xlu0 %741
      %743 = vrot.lane.b32.xlu0 %v631, 8
      %v744 = vpop.permute.xlu0 %743
      %745 = vrot.lane.b32.xlu0 %v634, 8
      %v746 = vpop.permute.xlu0 %745
      %747 = vrot.lane.b32.xlu0 %v636, 8
      %v748 = vpop.permute.xlu0 %747
      %749 = vrot.lane.b32.xlu0 %v639, 8
      %v750 = vpop.permute.xlu0 %749
      %751 = vrot.lane.b32.xlu0 %v641, 8
      %v752 = vpop.permute.xlu0 %751
      %753 = vrot.lane.b32.xlu0 %v644, 8
      %v754 = vpop.permute.xlu0 %753
      %755 = vrot.lane.b32.xlu0 %v646, 8
      %v756 = vpop.permute.xlu0 %755
      %757 = vrot.lane.b32.xlu0 %v649, 8
      %v758 = vpop.permute.xlu0 %757
      %759 = vrot.lane.b32.xlu0 %v651, 8
      %v760 = vpop.permute.xlu0 %759
      %761 = vrot.lane.b32.xlu0 %v654, 8
      %v762 = vpop.permute.xlu0 %761
      %763 = vrot.lane.b32.xlu0 %v656, 8
      %v764 = vpop.permute.xlu0 %763
      %765 = vrot.lane.b32.xlu0 %v659, 8
      %v766 = vpop.permute.xlu0 %765
      %767 = vrot.lane.b32.xlu0 %v661, 8
      %v768 = vpop.permute.xlu0 %767
      %769 = vrot.lane.b32.xlu0 %v664, 8
      %v770 = vpop.permute.xlu0 %769
      %771 = vrot.lane.b32.xlu0 %v666, 8
      %v772 = vpop.permute.xlu0 %771
      %789 = vrot.lane.b32.xlu0 %v534, 12
      %v790 = vpop.permute.xlu0 %789
      %791 = vrot.lane.b32.xlu0 %v535, 12
      %v792 = vpop.permute.xlu0 %791
      %793 = vrot.lane.b32.xlu0 %v537, 12
      %v794 = vpop.permute.xlu0 %793
      %795 = vrot.lane.b32.xlu0 %v538, 12
      %v796 = vpop.permute.xlu0 %795
      %797 = vrot.lane.b32.xlu0 %v540, 12
      %v798 = vpop.permute.xlu0 %797
      %799 = vrot.lane.b32.xlu0 %v541, 12
      %v800 = vpop.permute.xlu0 %799
      %801 = vrot.lane.b32.xlu0 %v543, 12
      %v802 = vpop.permute.xlu0 %801
      %803 = vrot.lane.b32.xlu0 %v544, 12
      %v804 = vpop.permute.xlu0 %803
      %805 = vrot.lane.b32.xlu0 %v546, 12
      %v806 = vpop.permute.xlu0 %805
      %807 = vrot.lane.b32.xlu0 %v547, 12
      %v808 = vpop.permute.xlu0 %807
      %809 = vrot.lane.b32.xlu0 %v549, 12
      %v810 = vpop.permute.xlu0 %809
      %811 = vrot.lane.b32.xlu0 %v550, 12
      %v812 = vpop.permute.xlu0 %811
      %813 = vrot.lane.b32.xlu0 %v552, 12
      %v814 = vpop.permute.xlu0 %813
      %815 = vrot.lane.b32.xlu0 %v553, 12
      %v816 = vpop.permute.xlu0 %815
      %817 = vrot.lane.b32.xlu0 %v555, 12
      %v818 = vpop.permute.xlu0 %817
      %819 = vrot.lane.b32.xlu0 %v556, 12
      %v820 = vpop.permute.xlu0 %819
      %837 = vrot.lane.b32.xlu0 %v593, 16
      %v838 = vpop.permute.xlu0 %837
      %839 = vrot.lane.b32.xlu0 %v595, 16
      %v840 = vpop.permute.xlu0 %839
      %841 = vrot.lane.b32.xlu0 %v598, 16
      %v842 = vpop.permute.xlu0 %841
      %843 = vrot.lane.b32.xlu0 %v600, 16
      %v844 = vpop.permute.xlu0 %843
      %845 = vrot.lane.b32.xlu0 %v603, 16
      %v846 = vpop.permute.xlu0 %845
      %847 = vrot.lane.b32.xlu0 %v605, 16
      %v848 = vpop.permute.xlu0 %847
      %849 = vrot.lane.b32.xlu0 %v608, 16
      %v850 = vpop.permute.xlu0 %849
      %851 = vrot.lane.b32.xlu0 %v610, 16
      %v852 = vpop.permute.xlu0 %851
      %853 = vrot.lane.b32.xlu0 %v613, 16
      %v854 = vpop.permute.xlu0 %853
      %855 = vrot.lane.b32.xlu0 %v615, 16
      %v856 = vpop.permute.xlu0 %855
      %857 = vrot.lane.b32.xlu0 %v618, 16
      %v858 = vpop.permute.xlu0 %857
      %859 = vrot.lane.b32.xlu0 %v620, 16
      %v860 = vpop.permute.xlu0 %859
      %861 = vrot.lane.b32.xlu0 %v623, 16
      %v862 = vpop.permute.xlu0 %861
      %863 = vrot.lane.b32.xlu0 %v625, 16
      %v864 = vpop.permute.xlu0 %863
      %865 = vrot.lane.b32.xlu0 %v672, 16
      %v866 = vpop.permute.xlu0 %865
      %867 = vrot.lane.b32.xlu0 %v674, 16
      %v868 = vpop.permute.xlu0 %867
      %885 = vrot.lane.b32.xlu0 %v634, 20
      %v886 = vpop.permute.xlu0 %885
      %887 = vrot.lane.b32.xlu0 %v636, 20
      %v888 = vpop.permute.xlu0 %887
      %889 = vrot.lane.b32.xlu0 %v639, 20
      %v890 = vpop.permute.xlu0 %889
      %891 = vrot.lane.b32.xlu0 %v641, 20
      %v892 = vpop.permute.xlu0 %891
      %893 = vrot.lane.b32.xlu0 %v644, 20
      %v894 = vpop.permute.xlu0 %893
      %895 = vrot.lane.b32.xlu0 %v646, 20
      %v896 = vpop.permute.xlu0 %895
      %897 = vrot.lane.b32.xlu0 %v649, 20
      %v898 = vpop.permute.xlu0 %897
      %899 = vrot.lane.b32.xlu0 %v651, 20
      %v900 = vpop.permute.xlu0 %899
      %901 = vrot.lane.b32.xlu0 %v654, 20
      %v902 = vpop.permute.xlu0 %901
      %903 = vrot.lane.b32.xlu0 %v656, 20
      %v904 = vpop.permute.xlu0 %903
      %905 = vrot.lane.b32.xlu0 %v659, 20
      %v906 = vpop.permute.xlu0 %905
      %907 = vrot.lane.b32.xlu0 %v661, 20
      %v908 = vpop.permute.xlu0 %907
      %909 = vrot.lane.b32.xlu0 %v664, 20
      %v910 = vpop.permute.xlu0 %909
      %911 = vrot.lane.b32.xlu0 %v666, 20
      %v912 = vpop.permute.xlu0 %911
      %913 = vrot.lane.b32.xlu0 %v677, 20
      %v914 = vpop.permute.xlu0 %913
      %915 = vrot.lane.b32.xlu0 %v679, 20
      %v916 = vpop.permute.xlu0 %915
      %933 = vrot.lane.b32.xlu0 %v537, 24
      %v934 = vpop.permute.xlu0 %933
      %935 = vrot.lane.b32.xlu0 %v538, 24
      %v936 = vpop.permute.xlu0 %935
      %937 = vrot.lane.b32.xlu0 %v540, 24
      %v938 = vpop.permute.xlu0 %937
      %939 = vrot.lane.b32.xlu0 %v541, 24
      %v940 = vpop.permute.xlu0 %939
      %941 = vrot.lane.b32.xlu0 %v543, 24
      %v942 = vpop.permute.xlu0 %941
      %943 = vrot.lane.b32.xlu0 %v544, 24
      %v944 = vpop.permute.xlu0 %943
      %945 = vrot.lane.b32.xlu0 %v546, 24
      %v946 = vpop.permute.xlu0 %945
      %947 = vrot.lane.b32.xlu0 %v547, 24
      %v948 = vpop.permute.xlu0 %947
      %949 = vrot.lane.b32.xlu0 %v549, 24
      %v950 = vpop.permute.xlu0 %949
      %951 = vrot.lane.b32.xlu0 %v550, 24
      %v952 = vpop.permute.xlu0 %951
      %953 = vrot.lane.b32.xlu0 %v552, 24
      %v954 = vpop.permute.xlu0 %953
      %955 = vrot.lane.b32.xlu0 %v553, 24
      %v956 = vpop.permute.xlu0 %955
      %957 = vrot.lane.b32.xlu0 %v555, 24
      %v958 = vpop.permute.xlu0 %957
      %959 = vrot.lane.b32.xlu0 %v556, 24
      %v960 = vpop.permute.xlu0 %959
      %961 = vrot.lane.b32.xlu0 %v558, 24
      %v962 = vpop.permute.xlu0 %961
      %963 = vrot.lane.b32.xlu0 %v559, 24
      %v964 = vpop.permute.xlu0 %963
      %981 = vrot.lane.b32.xlu0 %v598, 28
      %v982 = vpop.permute.xlu0 %981
      %983 = vrot.lane.b32.xlu0 %v600, 28
      %v984 = vpop.permute.xlu0 %983
      %985 = vrot.lane.b32.xlu0 %v603, 28
      %v986 = vpop.permute.xlu0 %985
      %987 = vrot.lane.b32.xlu0 %v605, 28
      %v988 = vpop.permute.xlu0 %987
      %989 = vrot.lane.b32.xlu0 %v608, 28
      %v990 = vpop.permute.xlu0 %989
      %991 = vrot.lane.b32.xlu0 %v610, 28
      %v992 = vpop.permute.xlu0 %991
      %993 = vrot.lane.b32.xlu0 %v613, 28
      %v994 = vpop.permute.xlu0 %993
      %995 = vrot.lane.b32.xlu0 %v615, 28
      %v996 = vpop.permute.xlu0 %995
      %997 = vrot.lane.b32.xlu0 %v618, 28
      %v998 = vpop.permute.xlu0 %997
      %999 = vrot.lane.b32.xlu0 %v620, 28
      %v1000 = vpop.permute.xlu0 %999
      %1001 = vrot.lane.b32.xlu0 %v623, 28
      %v1002 = vpop.permute.xlu0 %1001
      %1003 = vrot.lane.b32.xlu0 %v625, 28
      %v1004 = vpop.permute.xlu0 %1003
      %1005 = vrot.lane.b32.xlu0 %v672, 28
      %v1006 = vpop.permute.xlu0 %1005
      %1007 = vrot.lane.b32.xlu0 %v674, 28
      %v1008 = vpop.permute.xlu0 %1007
      %1009 = vrot.lane.b32.xlu0 %v685, 28
      %v1010 = vpop.permute.xlu0 %1009
      %1011 = vrot.lane.b32.xlu0 %v687, 28
      %v1012 = vpop.permute.xlu0 %1011
      %1029 = vrot.lane.b32.xlu0 %v639, 32
      %v1030 = vpop.permute.xlu0 %1029
      %1031 = vrot.lane.b32.xlu0 %v641, 32
      %v1032 = vpop.permute.xlu0 %1031
      %1033 = vrot.lane.b32.xlu0 %v644, 32
      %v1034 = vpop.permute.xlu0 %1033
      %1035 = vrot.lane.b32.xlu0 %v646, 32
      %v1036 = vpop.permute.xlu0 %1035
      %1037 = vrot.lane.b32.xlu0 %v649, 32
      %v1038 = vpop.permute.xlu0 %1037
      %1039 = vrot.lane.b32.xlu0 %v651, 32
      %v1040 = vpop.permute.xlu0 %1039
      %1041 = vrot.lane.b32.xlu0 %v654, 32
      %v1042 = vpop.permute.xlu0 %1041
      %1043 = vrot.lane.b32.xlu0 %v656, 32
      %v1044 = vpop.permute.xlu0 %1043
      %1045 = vrot.lane.b32.xlu0 %v659, 32
      %v1046 = vpop.permute.xlu0 %1045
      %1047 = vrot.lane.b32.xlu0 %v661, 32
      %v1048 = vpop.permute.xlu0 %1047
      %1049 = vrot.lane.b32.xlu0 %v664, 32
      %v1050 = vpop.permute.xlu0 %1049
      %1051 = vrot.lane.b32.xlu0 %v666, 32
      %v1052 = vpop.permute.xlu0 %1051
      %1053 = vrot.lane.b32.xlu0 %v677, 32
      %v1054 = vpop.permute.xlu0 %1053
      %1055 = vrot.lane.b32.xlu0 %v679, 32
      %v1056 = vpop.permute.xlu0 %1055
      %1057 = vrot.lane.b32.xlu0 %v690, 32
      %v1058 = vpop.permute.xlu0 %1057
      %1059 = vrot.lane.b32.xlu0 %v692, 32
      %v1060 = vpop.permute.xlu0 %1059
      %vm1077 = vcmask 31744
      %v1078 = vsel %vm1077, %v531, %v694
      %v1079 = vsel %vm1077, %v532, %v696
      %v1080 = vsel %vm1077, %v534, %v698
      %v1081 = vsel %vm1077, %v535, %v700
      %v1082 = vsel %vm1077, %v537, %v702
      %v1083 = vsel %vm1077, %v538, %v704
      %v1084 = vsel %vm1077, %v540, %v706
      %v1085 = vsel %vm1077, %v541, %v708
      %v1086 = vsel %vm1077, %v543, %v710
      %v1087 = vsel %vm1077, %v544, %v712
      %v1088 = vsel %vm1077, %v546, %v714
      %v1089 = vsel %vm1077, %v547, %v716
      %v1090 = vsel %vm1077, %v549, %v718
      %v1091 = vsel %vm1077, %v550, %v720
      %v1092 = vsel %vm1077, %v552, %v722
      %v1093 = vsel %vm1077, %v553, %v724
      %vm1094 = vcmask 64512
      %v1095 = vsel %vm1094, %v1078, %v742
      %v1096 = vsel %vm1094, %v1079, %v744
      %v1097 = vsel %vm1094, %v1080, %v746
      %v1098 = vsel %vm1094, %v1081, %v748
      %v1099 = vsel %vm1094, %v1082, %v750
      %v1100 = vsel %vm1094, %v1083, %v752
      %v1101 = vsel %vm1094, %v1084, %v754
      %v1102 = vsel %vm1094, %v1085, %v756
      %v1103 = vsel %vm1094, %v1086, %v758
      %v1104 = vsel %vm1094, %v1087, %v760
      %v1105 = vsel %vm1094, %v1088, %v762
      %v1106 = vsel %vm1094, %v1089, %v764
      %v1107 = vsel %vm1094, %v1090, %v766
      %v1108 = vsel %vm1094, %v1091, %v768
      %v1109 = vsel %vm1094, %v1092, %v770
      %v1110 = vsel %vm1094, %v1093, %v772
      %vm1111 = vcmask 97280
      %v1112 = vsel %vm1111, %v1095, %v790
      %v1113 = vsel %vm1111, %v1096, %v792
      %v1114 = vsel %vm1111, %v1097, %v794
      %v1115 = vsel %vm1111, %v1098, %v796
      %v1116 = vsel %vm1111, %v1099, %v798
      %v1117 = vsel %vm1111, %v1100, %v800
      %v1118 = vsel %vm1111, %v1101, %v802
      %v1119 = vsel %vm1111, %v1102, %v804
      %v1120 = vsel %vm1111, %v1103, %v806
      %v1121 = vsel %vm1111, %v1104, %v808
      %v1122 = vsel %vm1111, %v1105, %v810
      %v1123 = vsel %vm1111, %v1106, %v812
      %v1124 = vsel %vm1111, %v1107, %v814
      %v1125 = vsel %vm1111, %v1108, %v816
      %v1126 = vsel %vm1111, %v1109, %v818
      %v1127 = vsel %vm1111, %v1110, %v820
      %vm1128 = vcmask 130048
      %v1129 = vsel %vm1128, %v1112, %v838
      %v1130 = vsel %vm1128, %v1113, %v840
      %v1131 = vsel %vm1128, %v1114, %v842
      %v1132 = vsel %vm1128, %v1115, %v844
      %v1133 = vsel %vm1128, %v1116, %v846
      %v1134 = vsel %vm1128, %v1117, %v848
      %v1135 = vsel %vm1128, %v1118, %v850
      %v1136 = vsel %vm1128, %v1119, %v852
      %v1137 = vsel %vm1128, %v1120, %v854
      %v1138 = vsel %vm1128, %v1121, %v856
      %v1139 = vsel %vm1128, %v1122, %v858
      %v1140 = vsel %vm1128, %v1123, %v860
      %v1141 = vsel %vm1128, %v1124, %v862
      %v1142 = vsel %vm1128, %v1125, %v864
      %v1143 = vsel %vm1128, %v1126, %v866
      %v1144 = vsel %vm1128, %v1127, %v868
      %vm1145 = vcmask 162816
      %v1146 = vsel %vm1145, %v1129, %v886
      %v1147 = vsel %vm1145, %v1130, %v888
      %v1148 = vsel %vm1145, %v1131, %v890
      %v1149 = vsel %vm1145, %v1132, %v892
      %v1150 = vsel %vm1145, %v1133, %v894
      %v1151 = vsel %vm1145, %v1134, %v896
      %v1152 = vsel %vm1145, %v1135, %v898
      %v1153 = vsel %vm1145, %v1136, %v900
      %v1154 = vsel %vm1145, %v1137, %v902
      %v1155 = vsel %vm1145, %v1138, %v904
      %v1156 = vsel %vm1145, %v1139, %v906
      %v1157 = vsel %vm1145, %v1140, %v908
      %v1158 = vsel %vm1145, %v1141, %v910
      %v1159 = vsel %vm1145, %v1142, %v912
      %v1160 = vsel %vm1145, %v1143, %v914
      %v1161 = vsel %vm1145, %v1144, %v916
      %vm1162 = vcmask 195584
      %v1163 = vsel %vm1162, %v1146, %v934
      %v1164 = vsel %vm1162, %v1147, %v936
      %v1165 = vsel %vm1162, %v1148, %v938
      %v1166 = vsel %vm1162, %v1149, %v940
      %v1167 = vsel %vm1162, %v1150, %v942
      %v1168 = vsel %vm1162, %v1151, %v944
      %v1169 = vsel %vm1162, %v1152, %v946
      %v1170 = vsel %vm1162, %v1153, %v948
      %v1171 = vsel %vm1162, %v1154, %v950
      %v1172 = vsel %vm1162, %v1155, %v952
      %v1173 = vsel %vm1162, %v1156, %v954
      %v1174 = vsel %vm1162, %v1157, %v956
      %v1175 = vsel %vm1162, %v1158, %v958
      %v1176 = vsel %vm1162, %v1159, %v960
      %v1177 = vsel %vm1162, %v1160, %v962
      %v1178 = vsel %vm1162, %v1161, %v964
      %vm1179 = vcmask 228352
      %v1180 = vsel %vm1179, %v1163, %v982
      %v1181 = vsel %vm1179, %v1164, %v984
      %v1182 = vsel %vm1179, %v1165, %v986
      %v1183 = vsel %vm1179, %v1166, %v988
      %v1184 = vsel %vm1179, %v1167, %v990
      %v1185 = vsel %vm1179, %v1168, %v992
      %v1186 = vsel %vm1179, %v1169, %v994
      %v1187 = vsel %vm1179, %v1170, %v996
      %v1188 = vsel %vm1179, %v1171, %v998
      %v1189 = vsel %vm1179, %v1172, %v1000
      %v1190 = vsel %vm1179, %v1173, %v1002
      %v1191 = vsel %vm1179, %v1174, %v1004
      %v1192 = vsel %vm1179, %v1175, %v1006
      %v1193 = vsel %vm1179, %v1176, %v1008
      %v1194 = vsel %vm1179, %v1177, %v1010
      %v1195 = vsel %vm1179, %v1178, %v1012
      %vm1196 = vcmask 261120
      %v1197 = vsel %vm1196, %v1180, %v1030
      %v1198 = vsel %vm1196, %v1181, %v1032
      %v1199 = vsel %vm1196, %v1182, %v1034
      %v1200 = vsel %vm1196, %v1183, %v1036
      %v1201 = vsel %vm1196, %v1184, %v1038
      %v1202 = vsel %vm1196, %v1185, %v1040
      %v1203 = vsel %vm1196, %v1186, %v1042
      %v1204 = vsel %vm1196, %v1187, %v1044
      %v1205 = vsel %vm1196, %v1188, %v1046
      %v1206 = vsel %vm1196, %v1189, %v1048
      %v1207 = vsel %vm1196, %v1190, %v1050
      %v1208 = vsel %vm1196, %v1191, %v1052
      %v1209 = vsel %vm1196, %v1192, %v1054
      %v1210 = vsel %vm1196, %v1193, %v1056
      %v1211 = vsel %vm1196, %v1194, %v1058
      %v1212 = vsel %vm1196, %v1195, %v1060
      %v1213 = vpack.c.bf16 %v1198, %v1197
      %v1214 = vpack.c.bf16 %v1200, %v1199
      %v1215 = vpack.c.bf16 %v1202, %v1201
      %v1216 = vpack.c.bf16 %v1204, %v1203
      %v1217 = vpack.c.bf16 %v1206, %v1205
      %v1218 = vpack.c.bf16 %v1208, %v1207
      %v1219 = vpack.c.bf16 %v1210, %v1209
      %v1220 = vpack.c.bf16 %v1212, %v1211
      %v1221 = vld [vmem:[%s1] sm:$0xf]
      %v1222 = vld [vmem:[%s1 + $0x4] sm:$0xf]
      %v1223 = vld [vmem:[%s1 + $0x8] sm:$0xf]
      %v1224 = vld [vmem:[%s1 + $0xc] sm:$0xf]
      %v1225 = vld [vmem:[%s1 + $0x10] sm:$0x3]
      %v1226 = vld [vmem:[%s2] sm:$0x1]
      %v1228 = vperm.slane %v1226, 0
      %v1235 = vunpack.c.l.b16 %v1221
      %v1236 = vunpack.c.l.b16 %v1222
      %v1237 = vunpack.c.l.b16 %v1223
      %v1238 = vunpack.c.l.b16 %v1224
      %v1239 = vunpack.c.l.b16 %v1225
      %v1240 = vpack.c.b16 %v1236, %v1235
      %v1241 = vpack.c.b16 %v1238, %v1237
      %v1242 = vpack.c.b16 %v1239, %v1239
      %vm1245 = vcmask 293888
      %v1247 = vsel %vm1245, %v1213, 0
      %v1250 = vsel %vm1245, %v1214, 0
      %v1253 = vsel %vm1245, %v1215, 0
      %v1256 = vsel %vm1245, %v1216, 0
      %v1259 = vsel %vm1245, %v1217, 0
      %v1262 = vsel %vm1245, %v1218, 0
      %v1265 = vsel %vm1245, %v1219, 0
      %v1268 = vsel %vm1245, %v1220, 0
      %vm1270 = vcmask 1041408
      %v1272 = vsel %vm1270, %v1242, 0
      %1274 = vmatpush.bf16.msra.mxu0 0
      %1275 = vmatpush.bf16.msra.mxu0 0
      %1276 = vmatpush.bf16.msra.mxu0 0
      %1277 = vmatpush.bf16.msra.mxu0 0
      %1278 = vmatpush.bf16.msra.mxu0 0
      %1279 = vmatpush.bf16.msra.mxu0 %v1272
      %1280 = vmatpush.bf16.msra.mxu0 %v1241
      %1281 = vmatpush.bf16.msra.mxu0 %v1240
      %1282 = vmatmul.bf16.gmra.mxu0 %v1247
      %v1283 = vpop.f32.mrf.mxu0
      %v1284 = vadd.f32 %v1228, %v1283
      %v1285 = vpop.f32.mrf.mxu0
      %v1286 = vadd.f32 %v1228, %v1285
      %1287 = vmatmul.bf16.gmra.mxu0 %v1250
      %v1288 = vpop.f32.mrf.mxu0
      %v1289 = vadd.f32 %v1228, %v1288
      %v1290 = vpop.f32.mrf.mxu0
      %v1291 = vadd.f32 %v1228, %v1290
      %1292 = vmatmul.bf16.gmra.mxu0 %v1253
      %v1293 = vpop.f32.mrf.mxu0
      %v1294 = vadd.f32 %v1228, %v1293
      %v1295 = vpop.f32.mrf.mxu0
      %v1296 = vadd.f32 %v1228, %v1295
      %1297 = vmatmul.bf16.gmra.mxu0 %v1256
      %v1298 = vpop.f32.mrf.mxu0
      %v1299 = vadd.f32 %v1228, %v1298
      %v1300 = vpop.f32.mrf.mxu0
      %v1301 = vadd.f32 %v1228, %v1300
      %1302 = vmatmul.bf16.gmra.mxu0 %v1259
      %v1303 = vpop.f32.mrf.mxu0
      %v1304 = vadd.f32 %v1228, %v1303
      %v1305 = vpop.f32.mrf.mxu0
      %v1306 = vadd.f32 %v1228, %v1305
      %1307 = vmatmul.bf16.gmra.mxu0 %v1262
      %v1308 = vpop.f32.mrf.mxu0
      %v1309 = vadd.f32 %v1228, %v1308
      %v1310 = vpop.f32.mrf.mxu0
      %v1311 = vadd.f32 %v1228, %v1310
      %1312 = vmatmul.bf16.gmra.mxu0 %v1265
      %v1313 = vpop.f32.mrf.mxu0
      %v1314 = vadd.f32 %v1228, %v1313
      %v1315 = vpop.f32.mrf.mxu0
      %v1316 = vadd.f32 %v1228, %v1315
      %1317 = vmatmul.bf16.gmra.mxu0 %v1268
      %v1318 = vpop.f32.mrf.mxu0
      %v1319 = vadd.f32 %v1228, %v1318
      %v1320 = vpop.f32.mrf.mxu0
      %v1321 = vadd.f32 %v1228, %v1320
      %1322 = vdwg.mxu0
      %1323 = vst.msk [vmem:[%s288] sm:$0xff] %vm1077, %v1284
      %1324 = vst.msk [vmem:[%s288 + $0x8] sm:$0xff] %vm1077, %v1286
      %1325 = vst.msk [vmem:[%s288 + $0x10] sm:$0xff] %vm1077, %v1289
      %1326 = vst.msk [vmem:[%s288 + $0x18] sm:$0xff] %vm1077, %v1291
      %1327 = vst.msk [vmem:[%s288 + $0x20] sm:$0xff] %vm1077, %v1294
      %1328 = vst.msk [vmem:[%s288 + $0x28] sm:$0xff] %vm1077, %v1296
      %1329 = vst.msk [vmem:[%s288 + $0x30] sm:$0xff] %vm1077, %v1299
      %1330 = vst.msk [vmem:[%s288 + $0x38] sm:$0xff] %vm1077, %v1301
      %1331 = vst.msk [vmem:[%s288 + $0x40] sm:$0xff] %vm1077, %v1304
      %1332 = vst.msk [vmem:[%s288 + $0x48] sm:$0xff] %vm1077, %v1306
      %1333 = vst.msk [vmem:[%s288 + $0x50] sm:$0xff] %vm1077, %v1309
      %1334 = vst.msk [vmem:[%s288 + $0x58] sm:$0xff] %vm1077, %v1311
      %1335 = vst.msk [vmem:[%s288 + $0x60] sm:$0xff] %vm1077, %v1314
      %1336 = vst.msk [vmem:[%s288 + $0x68] sm:$0xff] %vm1077, %v1316
      %1337 = vst.msk [vmem:[%s288 + $0x70] sm:$0xff] %vm1077, %v1319
      %1338 = vst.msk [vmem:[%s288 + $0x78] sm:$0xff] %vm1077, %v1321
      %v1339 = vsel %vm1077, %v1284, 0.0
      %v1340 = vsel %vm1077, %v1286, 0.0
      %v1341 = vadd.f32 %v1339, %v1340
      %v1342 = vsel %vm1077, %v1289, 0.0
      %v1343 = vadd.f32 %v1341, %v1342
      %v1344 = vsel %vm1077, %v1291, 0.0
      %v1345 = vadd.f32 %v1343, %v1344
      %v1346 = vsel %vm1077, %v1294, 0.0
      %v1347 = vadd.f32 %v1345, %v1346
      %v1348 = vsel %vm1077, %v1296, 0.0
      %v1349 = vadd.f32 %v1347, %v1348
      %v1350 = vsel %vm1077, %v1299, 0.0
      %v1351 = vadd.f32 %v1349, %v1350
      %v1352 = vsel %vm1077, %v1301, 0.0
      %v1353 = vadd.f32 %v1351, %v1352
      %v1354 = vsel %vm1077, %v1304, 0.0
      %v1355 = vadd.f32 %v1353, %v1354
      %v1356 = vsel %vm1077, %v1306, 0.0
      %v1357 = vadd.f32 %v1355, %v1356
      %v1358 = vsel %vm1077, %v1309, 0.0
      %v1359 = vadd.f32 %v1357, %v1358
      %v1360 = vsel %vm1077, %v1311, 0.0
      %v1361 = vadd.f32 %v1359, %v1360
      %v1362 = vsel %vm1077, %v1314, 0.0
      %v1363 = vadd.f32 %v1361, %v1362
      %v1364 = vsel %vm1077, %v1316, 0.0
      %v1365 = vadd.f32 %v1363, %v1364
      %v1366 = vsel %vm1077, %v1319, 0.0
      %v1367 = vadd.f32 %v1365, %v1366
      %v1368 = vsel %vm1077, %v1321, 0.0
      %v1369 = vadd.f32 %v1367, %v1368
      %v1370 = vrot.slane %v1369, 4
      %v1371 = vadd.f32 %v1369, %v1370
      %v1372 = vrot.slane %v1371, 2
      %v1373 = vadd.f32 %v1371, %v1372
      %v1374 = vrot.slane %v1373, 1
      %v1375 = vadd.f32 %v1373, %v1374
      %v1376 = vmul.f32 %v1284, %v1284
      %v1377 = vmul.f32 %v1286, %v1286
      %v1378 = vmul.f32 %v1289, %v1289
      %v1379 = vmul.f32 %v1291, %v1291
      %v1380 = vmul.f32 %v1294, %v1294
      %v1381 = vmul.f32 %v1296, %v1296
      %v1382 = vmul.f32 %v1299, %v1299
      %v1383 = vmul.f32 %v1301, %v1301
      %v1384 = vmul.f32 %v1304, %v1304
      %v1385 = vmul.f32 %v1306, %v1306
      %v1386 = vmul.f32 %v1309, %v1309
      %v1387 = vmul.f32 %v1311, %v1311
      %v1388 = vmul.f32 %v1314, %v1314
      %v1389 = vmul.f32 %v1316, %v1316
      %v1390 = vmul.f32 %v1319, %v1319
      %v1391 = vmul.f32 %v1321, %v1321
      %v1392 = vsel %vm1077, %v1376, 0.0
      %v1393 = vsel %vm1077, %v1377, 0.0
      %v1394 = vadd.f32 %v1392, %v1393
      %v1395 = vsel %vm1077, %v1378, 0.0
      %v1396 = vadd.f32 %v1394, %v1395
      %v1397 = vsel %vm1077, %v1379, 0.0
      %v1398 = vadd.f32 %v1396, %v1397
      %v1399 = vsel %vm1077, %v1380, 0.0
      %v1400 = vadd.f32 %v1398, %v1399
      %v1401 = vsel %vm1077, %v1381, 0.0
      %v1402 = vadd.f32 %v1400, %v1401
      %v1403 = vsel %vm1077, %v1382, 0.0
      %v1404 = vadd.f32 %v1402, %v1403
      %v1405 = vsel %vm1077, %v1383, 0.0
      %v1406 = vadd.f32 %v1404, %v1405
      %v1407 = vsel %vm1077, %v1384, 0.0
      %v1408 = vadd.f32 %v1406, %v1407
      %v1409 = vsel %vm1077, %v1385, 0.0
      %v1410 = vadd.f32 %v1408, %v1409
      %v1411 = vsel %vm1077, %v1386, 0.0
      %v1412 = vadd.f32 %v1410, %v1411
      %v1413 = vsel %vm1077, %v1387, 0.0
      %v1414 = vadd.f32 %v1412, %v1413
      %v1415 = vsel %vm1077, %v1388, 0.0
      %v1416 = vadd.f32 %v1414, %v1415
      %v1417 = vsel %vm1077, %v1389, 0.0
      %v1418 = vadd.f32 %v1416, %v1417
      %v1419 = vsel %vm1077, %v1390, 0.0
      %v1420 = vadd.f32 %v1418, %v1419
      %v1421 = vsel %vm1077, %v1391, 0.0
      %v1422 = vadd.f32 %v1420, %v1421
      %v1423 = vrot.slane %v1422, 4
      %v1424 = vadd.f32 %v1422, %v1423
      %v1425 = vrot.slane %v1424, 2
      %v1426 = vadd.f32 %v1424, %v1425
      %v1427 = vrot.slane %v1426, 1
      %v1428 = vadd.f32 %v1426, %v1427
      %vm1429 = vcmask 1040384
      %v1430 = vsel %vm1429, %v1375, %v1428
      %vm1431 = vcmask 25600
      %1432 = vst.msk [vmem:[%s297] sm:$0x3] %vm1431, %v1430
      %s1433 = smul.u32 8, %s23
      %p1434 = scmp.lt.s32.totalorder %s22, 1
      %s1435 = scalar_select %p1434, %s22, 1
      %p1436 = scmp.lt.s32.totalorder %s1433, 15
      %s1437 = scalar_select %p1436, %s1433, 15
      %s1438 = smul.addr %s1437, 2
      %s1439 = smul.addr %s1435, 32
      %s1440 = sadd.s32 %s1438, %s1439
      %s1441 = smul.addr %s1440, 8
      %s1442 = scalar_lea.vmem %s5, %s1441
      %p1443 = scmp.lt.s32.totalorder %s22, 1
      %s1444 = scalar_select %p1443, %s22, 1
      %p1445 = scmp.lt.s32.totalorder %s23, 1
      %s1446 = scalar_select %p1445, %s23, 1
      %s1447 = smul.addr %s1444, 2
      %s1448 = sadd.s32 %s1446, %s1447
      %s1449 = smul.addr %s1448, 2
      %s1450 = scalar_lea.vmem %s6, %s1449
      // Predicated region
      $region45: #{upsample_forward.6} parent=39 // pred_check
        %p1451 = pneg %p160
      $region46: #{upsample_forward.6} parent=39 // pred_check_branch
        %1453 = sbr.rel (%p1451) target = $region48
      $region47: #{upsample_forward.6} parent=39 // pred_region
        %s1454 = smul.u32 8, %s23
      $region48: #{upsample_forward.6} parent=39 // pred_fallthru
        _
      // Predicated region
      $region49: #{upsample_forward.6} parent=39 // pred_check
        %p1455 = pneg %p188
      $region50: #{upsample_forward.6} parent=39 // pred_check_branch
        %1457 = sbr.rel (%p1455) target = $region52
      $region51: #{upsample_forward.6} parent=39 // pred_region
        _
      $region52: #{upsample_forward.6} parent=39 // pred_fallthru
        _
    $region40: #{upsample_forward.6} parent=5 // pred_fallthru
      _
    %p1458 = scmp.le.s32.totalorder 2, %s13
    // Predicated region
    $region53: #{upsample_forward.6} parent=5 // pred_check
      %p1459 = pneg %p1458
    $region54: #{upsample_forward.6} parent=5 // pred_check_branch
      %1461 = sbr.rel (%p1459) target = $region56
    $region55: #{upsample_forward.6} parent=5 // pred_region
      %s1462 = ssub.s32 %s13, 2
      // Predicated region
      $region57: #{upsample_forward.6} parent=55 // pred_check
        %p1463 = pneg %p166
      $region58: #{upsample_forward.6} parent=55 // pred_check_branch
        %1465 = sbr.rel (%p1463) target = $region60
      $region59: #{upsample_forward.6} parent=55 // pred_region
        %s1466 = smul.u32 8, %s25
        %p1467 = scmp.lt.s32.totalorder %s24, 1
        %s1468 = scalar_select %p1467, %s24, 1
        %p1469 = scmp.lt.s32.totalorder %s1466, 15
        %s1470 = scalar_select %p1469, %s1466, 15
        %s1471 = smul.addr %s1470, 2
        %s1472 = smul.addr %s1468, 32
        %s1473 = sadd.s32 %s1471, %s1472
        %s1474 = smul.addr %s1473, 8
        %s1475 = scalar_lea.vmem %s5, %s1474
      $region60: #{upsample_forward.6} parent=55 // pred_fallthru
        _
      // Predicated region
      $region61: #{upsample_forward.6} parent=55 // pred_check
        %p1476 = pneg %p194
      $region62: #{upsample_forward.6} parent=55 // pred_check_branch
        %1478 = sbr.rel (%p1476) target = $region64
      $region63: #{upsample_forward.6} parent=55 // pred_region
        %p1479 = scmp.lt.s32.totalorder %s24, 1
        %s1480 = scalar_select %p1479, %s24, 1
        %p1481 = scmp.lt.s32.totalorder %s25, 1
        %s1482 = scalar_select %p1481, %s25, 1
        %s1483 = smul.addr %s1480, 2
        %s1484 = sadd.s32 %s1482, %s1483
        %s1485 = smul.addr %s1484, 2
        %s1486 = scalar_lea.vmem %s6, %s1485
      $region64: #{upsample_forward.6} parent=55 // pred_fallthru
        _
    $region56: #{upsample_forward.6} parent=5 // pred_fallthru
      _
  $region6: #{upsample_forward.6} parent=0 // loop_footer
    %s17 = sadd.s32 1, %s13
  $region7: #{upsample_forward.6} parent=0 // loop_footer_branch
    %12 = sbr.rel target = $region3
  $region8: #{upsample_forward.6} parent=0 // loop_exit
    _

</llo_original>
